<compile_context>
chip_gen: v5e
topology: v5e:2x2
jax: 0.10.0
libtpu: 0.0.40
codegen_flags: <defaults>
</compile_context>

<pallas_src>
import math

import jax
import jax.numpy as jnp
from jax.experimental import pallas as pl
from jax.experimental.pallas import tpu as pltpu

_LANE = 128


def _rup(v, m):
    return ((v + m - 1) // m) * m


# ----------------------------- parameter init --------------------------------

def init_tcl_params(key, Kt, c_in, c_out, act):
    k1, k2, k3 = jax.random.split(key, 3)
    s = 1.0 / math.sqrt(Kt * c_in)
    p = {"conv_w": jax.random.normal(k3, (c_in, c_out), jnp.float32) / math.sqrt(c_in),
         "conv_b": jnp.zeros((c_out,), jnp.float32)}
    if act == "GLU":
        p["wa"] = jax.random.normal(k1, (Kt, c_in, c_out), jnp.float32) * s
        p["wg"] = jax.random.normal(k2, (Kt, c_in, c_out), jnp.float32) * s
        p["ba"] = jnp.zeros((c_out,), jnp.float32)
        p["bg"] = jnp.zeros((c_out,), jnp.float32)
    else:
        p["w"] = jax.random.normal(k1, (Kt, c_in, c_out), jnp.float32) * s
        p["b"] = jnp.zeros((c_out,), jnp.float32)
    return p


def init_scl_params(key, Ks, c_in, c_out):
    k1, k2 = jax.random.split(key)
    return {
        "ws": jax.random.normal(k1, (Ks * c_in, c_out), jnp.float32) / math.sqrt(Ks * c_in),
        "bs": jnp.zeros((c_out,), jnp.float32),
        "conv_w": jax.random.normal(k2, (c_in, c_out), jnp.float32) / math.sqrt(c_in),
        "conv_b": jnp.zeros((c_out,), jnp.float32),
    }


def init_block_params(key, Ks, Kt, channels, n_route):
    c_si, c_t, c_oo = channels
    k1, k2, k3 = jax.random.split(key, 3)
    return {
        "tcl1": init_tcl_params(k1, Kt, c_si, c_t, "GLU"),
        "scl": init_scl_params(k2, Ks, c_t, c_t),
        "tcl2": init_tcl_params(k3, Kt, c_t, c_oo, "relu"),
        "ln_g": jnp.ones((n_route, c_oo), jnp.float32),
        "ln_b": jnp.zeros((n_route, c_oo), jnp.float32),
    }


def init_output_params(key, Ko, channel, n_route, d_out):
    k1, k2, k3 = jax.random.split(key, 3)
    return {
        "tcl1": init_tcl_params(k1, Ko, channel, channel, "GLU"),
        "ln_g": jnp.ones((n_route, channel), jnp.float32),
        "ln_b": jnp.zeros((n_route, channel), jnp.float32),
        "tcl2": init_tcl_params(k2, 1, channel, channel, "sigmoid"),
        "fcon_w": jax.random.normal(k3, (channel, d_out), jnp.float32) / math.sqrt(channel),
        "fcon_b": jnp.zeros((d_out,), jnp.float32),
    }


def init_stgcn_params(key, n_his, d_out, n_route, Ks, Kt, blocks):
    Ko = n_his - 2 * (Ks - 1) - 2 * (Ks - 1)
    assert Ko > 1, "kernel size Ko must be greater than 1"
    k1, k2, k3 = jax.random.split(key, 3)
    return {
        "block1": init_block_params(k1, Ks, Kt, blocks[0], n_route),
        "block2": init_block_params(k2, Ks, Kt, blocks[1], n_route),
        "output": init_output_params(k3, Ko, blocks[1][-1], n_route, d_out),
    }, Ko


# ------------------- fold / fuse / pack weights for the kernel ----------------

def prepare_stgcn(params, adj, n_his, n_route, Ks, Kt, blocks, Ko, d_out, TB=8):
    """Builds a static layer 'program' + bf16 weight slabs + f32 vector slab.

    Activation layout inside the kernel: (time*TB, n_route*channels) f32,
    rows = t*TB + b (time-outer, batch-inner), lanes = node*C + channel.
    Every layer is  y = act(rowslice(x) @ W + bias)  with residual branches,
    GLU value/gate and the graph operator already folded into W.
    """
    assert n_his - 4 * (Kt - 1) == Ko, "time shrinkage must match Ko (requires Ks == Kt)"
    assert TB % 8 == 0, "TB must be a multiple of 8 (sublane alignment)"
    N = n_route
    c0 = blocks[0][0]
    nc0 = N * c0
    nc0_pad = _rup(max(nc0, _LANE), _LANE)           # lane-dense input tile

    weights, vecs, program = [], [], []

    def add_weight(w):
        weights.append(w.astype(jnp.float32))
        return len(weights) - 1

    def add_vec(v):
        vecs.append(v.astype(jnp.float32).reshape(-1))
        return len(vecs) - 1

    def residual_mat(c_in, c_out, conv_w, conv_b):
        # The TCL/SCL 'x_input' branch as a lane-dense matrix (+ bias).
        if c_in == c_out:
            return jnp.eye(N * c_in, dtype=jnp.float32), jnp.zeros((N * c_out,), jnp.float32)
        if c_in < c_out:
            pad = jnp.concatenate(
                [jnp.eye(c_in, dtype=jnp.float32),
                 jnp.zeros((c_in, c_out - c_in), jnp.float32)], axis=1)
            return (jnp.kron(jnp.eye(N, dtype=jnp.float32), pad),
                    jnp.zeros((N * c_out,), jnp.float32))
        return (jnp.kron(jnp.eye(N, dtype=jnp.float32), conv_w), jnp.tile(conv_b, N))

    def add_tcl(p, kt, c_in, c_out, act, nc_in_pad=None, unfold=False):
        nc_in, nc_out = N * c_in, N * c_out
        nc_in_eff = nc_in_pad if nc_in_pad is not None else nc_in
        if act == "GLU":
            Wa = [jnp.kron(jnp.eye(N, dtype=jnp.float32), p["wa"][k]) for k in range(kt)]
            Wg = [jnp.kron(jnp.eye(N, dtype=jnp.float32), p["wg"][k]) for k in range(kt)]
            R, rb = residual_mat(c_in, c_out, p["conv_w"], p["conv_b"])
            Wa[kt - 1] = Wa[kt - 1] + R              # fold residual into the LAST value tap
            taps = [jnp.concatenate([Wa[k], Wg[k]], axis=1) for k in range(kt)]   # fused GLU
            bias = jnp.concatenate([jnp.tile(p["ba"], N) + rb, jnp.tile(p["bg"], N)])
            cols = 2 * nc_out
        elif act == "relu":
            W = [jnp.kron(jnp.eye(N, dtype=jnp.float32), p["w"][k]) for k in range(kt)]
            R, rb = residual_mat(c_in, c_out, p["conv_w"], p["conv_b"])
            W[kt - 1] = W[kt - 1] + R                # fold residual into the LAST tap
            taps = W
            bias = jnp.tile(p["b"], N) + rb
            cols = nc_out
        else:                                        # sigmoid / linear: no residual branch
            taps = [jnp.kron(jnp.eye(N, dtype=jnp.float32), p["w"][k]) for k in range(kt)]
            bias = jnp.tile(p["b"], N)
            cols = nc_out
        if nc_in_eff != nc_in:                       # lane-pad the very first layer's rows
            zpad = jnp.zeros((nc_in_eff - nc_in, cols), jnp.float32)
            taps = [jnp.concatenate([t, zpad], axis=0) for t in taps]
        program.append({"op": "conv", "act": act.lower(), "kt": kt, "unfold": unfold,
                        "nc_in": nc_in_eff, "nc_out": nc_out, "cols": cols,
                        "w": add_weight(jnp.concatenate(taps, axis=0)),
                        "b": add_vec(bias)})

    def add_scl(p, c_in, c_out):
        nc_in, nc_out = N * c_in, N * c_out
        # Pre-combine (x @ adj) -> permute -> (@ ws) into one lane-dense operator.
        adj3 = adj.astype(jnp.float32).reshape(N, Ks, N)     # adj columns are [k*N + m]
        ws3 = p["ws"].reshape(c_in, Ks, c_out)               # ws rows are [c*Ks + k]
        A = jnp.einsum("nkm,cko->ncmo", adj3, ws3).reshape(nc_in, nc_out)
        R, rb = residual_mat(c_in, c_out, p["conv_w"], p["conv_b"])
        program.append({"op": "conv", "act": "relu", "kt": 1, "unfold": False,
                        "nc_in": nc_in, "nc_out": nc_out, "cols": nc_out,
                        "w": add_weight(A + R),
                        "b": add_vec(jnp.tile(p["bs"], N) + rb)})

    def add_ln(g, b):
        program.append({"op": "ln", "nc": int(g.size), "g": add_vec(g), "b": add_vec(b)})

    # -- two ST-Conv blocks ------------------------------------------------------
    for bname, chans, pad in (("block1", blocks[0], nc0_pad), ("block2", blocks[1], None)):
        c_si, c_t, c_oo = chans
        p = params[bname]
        add_tcl(p["tcl1"], Kt, c_si, c_t, "GLU", nc_in_pad=pad)
        add_scl(p["scl"], c_t, c_t)
        add_tcl(p["tcl2"], Kt, c_t, c_oo, "relu")
        add_ln(p["ln_g"], p["ln_b"])                 # Dropout(p=0.0) == identity

    # -- output head -------------------------------------------------------------
    C = blocks[1][-1]
    po = params["output"]
    add_tcl(po["tcl1"], Ko, C, C, "GLU", unfold=True)          # t_out == 1: one wide dot
    add_ln(po["ln_g"], po["ln_b"])
    add_tcl(po["tcl2"], 1, C, C, "sigmoid")
    nd = N * d_out
    out_pad = _rup(max(nd, _LANE), _LANE)                      # lane-dense output block
    Wf = jnp.kron(jnp.eye(N, dtype=jnp.float32), po["fcon_w"])
    Wf = jnp.concatenate([Wf, jnp.zeros((N * C, out_pad - nd), jnp.float32)], axis=1)
    bf = jnp.concatenate([jnp.tile(po["fcon_b"], N), jnp.zeros((out_pad - nd,), jnp.float32)])
    program.append({"op": "conv", "act": "linear", "kt": 1, "unfold": False,
                    "nc_in": N * C, "nc_out": out_pad, "cols": out_pad,
                    "w": add_weight(Wf), "b": add_vec(bf)})

    # -- pack weights into bf16 slabs grouped by output width ---------------------
    groups = {}
    for wi, w in enumerate(weights):
        groups.setdefault(int(w.shape[1]), []).append(wi)
    slab_widths = sorted(groups)
    slabs, wloc = [], {}
    for si, width in enumerate(slab_widths):
        pieces, off = [], 0
        for wi in groups[width]:
            w = weights[wi]
            rows = int(w.shape[0])
            rows_pad = _rup(rows, 16)                # bf16 sublane-tile aligned offsets
            if rows_pad != rows:
                w = jnp.concatenate(
                    [w, jnp.zeros((rows_pad - rows, width), jnp.float32)], axis=0)
            wloc[wi] = (si, off)
            pieces.append(w)
            off += rows_pad
        slabs.append(jnp.concatenate(pieces, axis=0).astype(jnp.bfloat16))
    for op in program:
        if op["op"] == "conv":
            op["w_slab"], op["w_off"] = wloc[op["w"]]

    vec_w = _rup(max(int(v.size) for v in vecs), _LANE)
    vec_slab = jnp.stack([jnp.pad(v, (0, vec_w - int(v.size))) for v in vecs]).astype(jnp.float32)

    meta = {"N": N, "TB": TB, "T0": n_his, "c0": c0, "d_out": d_out, "nd": nd,
            "nc0": nc0, "nc0_pad": nc0_pad, "out_pad": out_pad, "n_slabs": len(slabs)}
    return program, slabs, vec_slab, meta


# ------------------------------ fused kernel ---------------------------------

def _build_kernel(program, meta):
    TB, T0, n_slabs = meta["TB"], meta["T0"], meta["n_slabs"]

    def kernel(x_ref, *refs):
        slab_refs = refs[:n_slabs]
        vec_ref = refs[n_slabs]
        o_ref = refs[n_slabs + 1]

        # (T0, TB, NC0) -> (T0*TB, NC0): row = t*TB + b  (time-outer, batch-inner)
        h = jnp.concatenate([x_ref[t] for t in range(T0)], axis=0).astype(jnp.float32)
        T = T0
        for op in program:
            if op["op"] == "ln":
                nc = op["nc"]
                g = vec_ref[op["g"]:op["g"] + 1, 0:nc]
                b = vec_ref[op["b"]:op["b"] + 1, 0:nc]
                mu = jnp.mean(h, axis=-1, keepdims=True)
                var = jnp.mean((h - mu) ** 2, axis=-1, keepdims=True)
                h = (h - mu) * jax.lax.rsqrt(var + 1e-5) * g + b
                continue
            kt, nc_in, cols = op["kt"], op["nc_in"], op["cols"]
            wref = slab_refs[op["w_slab"]]
            off = op["w_off"]
            t_out = T - kt + 1
            bias = vec_ref[op["b"]:op["b"] + 1, 0:cols]
            if op["unfold"]:
                assert t_out == 1
                # Unfold the kt temporal taps into lanes -> one wide dot.
                lhs = jnp.concatenate(
                    [h[k * TB:(k + 1) * TB, :] for k in range(kt)], axis=1
                ).astype(jnp.bfloat16)
                y = jnp.dot(lhs, wref[off:off + kt * nc_in, :],
                            preferred_element_type=jnp.float32)
            else:
                rows = t_out * TB
                y = jnp.dot(h[0:rows, :].astype(jnp.bfloat16),
                            wref[off:off + nc_in, :],
                            preferred_element_type=jnp.float32)
                for k in range(1, kt):
                    y = y + jnp.dot(h[k * TB:k * TB + rows, :].astype(jnp.bfloat16),
                                    wref[off + k * nc_in:off + (k + 1) * nc_in, :],
                                    preferred_element_type=jnp.float32)
            y = y + bias
            act, nc_out = op["act"], op["nc_out"]
            if act == "glu":
                h = y[:, 0:nc_out] * jax.nn.sigmoid(y[:, nc_out:cols])
            elif act == "relu":
                h = jnp.maximum(y, 0.0)
            elif act == "sigmoid":
                h = jax.nn.sigmoid(y)
            else:
                h = y
            T = t_out
        o_ref[...] = h.astype(o_ref.dtype)           # (TB, out_pad): lane-dense store
    return kernel


def stgcn_forward(x, slabs, vec_slab, *, program, meta):
    """x: (B, n_his, n_route, c_in) -> (B, d_out, n_route, 1). One pallas_call."""
    B, T0, N, c0 = x.shape
    assert T0 == meta["T0"] and N == meta["N"] and c0 == meta["c0"]
    TB, nc0, nc0_pad = meta["TB"], meta["nc0"], meta["nc0_pad"]
    out_pad, nd, d_out = meta["out_pad"], meta["nd"], meta["d_out"]

    B_pad = _rup(B, TB)
    G = B_pad // TB

    xf = x.astype(jnp.float32).reshape(B, T0, nc0)
    xf = jnp.pad(xf, ((0, B_pad - B), (0, 0), (0, nc0_pad - nc0)))
    xf = jnp.transpose(xf, (1, 0, 2))                # (T0, B_pad, NC0): time-outer rows

    in_specs = [pl.BlockSpec((T0, TB, nc0_pad), lambda g: (0, g, 0))]
    args = [xf]
    for s in slabs:                                  # constant block index -> DMA'd once
        args.append(s)
        in_specs.append(pl.BlockSpec(s.shape, lambda g: (0, 0)))
    args.append(vec_slab)
    in_specs.append(pl.BlockSpec(vec_slab.shape, lambda g: (0, 0)))

    # Advisory cost estimate for the XLA scheduler.
    flops, trans, Tcur = 0, 0, T0
    for op in program:
        if op["op"] != "conv":
            continue
        t_out = Tcur - op["kt"] + 1
        rows = TB if op["unfold"] else t_out * TB
        flops += 2 * rows * op["kt"] * op["nc_in"] * op["cols"]
        if op["act"] in ("glu", "sigmoid"):
            trans += rows * op["nc_out"]
        Tcur = t_out
    bytes_accessed = (int(xf.size) * 4 + sum(int(s.size) * 2 for s in slabs)
                      + int(vec_slab.size) * 4 + B_pad * out_pad * 4)
    cost = pl.CostEstimate(flops=int(flops) * G, transcendentals=int(trans) * G,
                           bytes_accessed=int(bytes_accessed))

    out = pl.pallas_call(
        _build_kernel(program, meta),
        out_shape=jax.ShapeDtypeStruct((B_pad, out_pad), jnp.float32),
        grid=(G,),
        in_specs=in_specs,
        out_specs=pl.BlockSpec((TB, out_pad), lambda g: (g, 0)),
        compiler_params=pltpu.CompilerParams(
            dimension_semantics=("parallel",),
            vmem_limit_bytes=32 * 1024 * 1024,
        ),
        cost_estimate=cost,
    )(*args)

    # (B_pad, out_pad) -> (B, d_out, n_route, 1), exactly like the PyTorch module.
    y = out[:B, :nd].reshape(B, N, d_out)
    return jnp.transpose(y, (0, 2, 1))[..., None]


# ------------------- pure-JAX (unfused) reference for validation --------------

def _ref_residual(x, c_in, c_out, conv_w, conv_b):
    B, _, T, n = x.shape
    if c_in > c_out:
        return jnp.einsum("bctn,co->botn", x, conv_w) + conv_b[None, :, None, None]
    if c_in < c_out:
        return jnp.concatenate([x, jnp.zeros((B, c_out - c_in, T, n), x.dtype)], axis=1)
    return x


def _ref_tcl(x, p, Kt, c_in, c_out, act):
    B, _, T, n = x.shape
    t_out = T - Kt + 1

    def tconv(w, b):
        acc = jnp.zeros((B, c_out, t_out, n), jnp.float32)
        for k in range(Kt):
            acc = acc + jnp.einsum("bctn,co->botn", x[:, :, k:k + t_out, :], w[k])
        return acc + b[None, :, None, None]

    if act == "GLU":
        x_in = _ref_residual(x, c_in, c_out, p["conv_w"], p["conv_b"])[:, :, Kt - 1:, :]
        return (tconv(p["wa"], p["ba"]) + x_in) * jax.nn.sigmoid(tconv(p["wg"], p["bg"]))
    y = tconv(p["w"], p["b"])
    if act == "relu":
        x_in = _ref_residual(x, c_in, c_out, p["conv_w"], p["conv_b"])[:, :, Kt - 1:, :]
        return jnp.maximum(y + x_in, 0.0)
    if act == "sigmoid":
        return jax.nn.sigmoid(y)
    return y


def _ref_scl(x, p, adj, Ks, c_in, c_out):
    B, _, T, n = x.shape
    x_in = _ref_residual(x, c_in, c_out, p["conv_w"], p["conv_b"])
    xp = jnp.transpose(x, (0, 2, 3, 1)).reshape(-1, n, c_in)
    x_tmp = jnp.transpose(xp, (0, 2, 1)).reshape(-1, n)
    x_mul = (x_tmp @ adj).reshape(-1, c_in, Ks, n)
    x_ker = jnp.transpose(x_mul, (0, 3, 1, 2)).reshape(-1, c_in * Ks)
    y = (x_ker @ p["ws"]).reshape(-1, n, c_out) + p["bs"]
    y = jnp.transpose(y.reshape(B, T, n, c_out), (0, 3, 1, 2))
    return jnp.maximum(y + x_in, 0.0)


def _ref_ln(x, g, b):
    xp = jnp.transpose(x, (0, 2, 3, 1))              # (B, T, n, C): LN over [n, C]
    mu = jnp.mean(xp, axis=(-2, -1), keepdims=True)
    var = jnp.mean((xp - mu) ** 2, axis=(-2, -1), keepdims=True)
    xn = (xp - mu) * jax.lax.rsqrt(var + 1e-5) * g + b
    return jnp.transpose(xn, (0, 3, 1, 2))


def stgcn_reference(x, adj, params, Ks, Kt, blocks, Ko, d_out):
    h = jnp.transpose(x, (0, 3, 1, 2)).astype(jnp.float32)     # (B, c, T, n)
    for bname, chans in (("block1", blocks[0]), ("block2", blocks[1])):
        c_si, c_t, c_oo = chans
        p = params[bname]
        h = _ref_tcl(h, p["tcl1"], Kt, c_si, c_t, "GLU")
        h = _ref_scl(h, p["scl"], adj, Ks, c_t, c_t)
        h = _ref_tcl(h, p["tcl2"], Kt, c_t, c_oo, "relu")
        h = _ref_ln(h, p["ln_g"], p["ln_b"])
    C = blocks[1][-1]
    po = params["output"]
    h = _ref_tcl(h, po["tcl1"], Ko, C, C, "GLU")
    h = _ref_ln(h, po["ln_g"], po["ln_b"])
    h = _ref_tcl(h, po["tcl2"], 1, C, C, "sigmoid")
    h = jnp.einsum("bctn,co->botn", h, po["fcon_w"]) + po["fcon_b"][None, :, None, None]
    return jnp.transpose(h, (0, 1, 3, 2))                      # (B, d_out, n, 1)


# ----------------------------------- main -------------------------------------

if __name__ == "__main__":
    B = 2
    n_his = 8            # input time steps
    n_route = 16         # graph nodes
    d_out = 1
    Ks = Kt = 2          # spatial / temporal kernel sizes
    blocks = [[2, 8, 8], [8, 16, 16]]   # [c_in, c_hidden, c_out] per ST block

    key = jax.random.PRNGKey(0)
    kx, kadj, kp = jax.random.split(key, 3)
    x = jax.random.normal(kx, (B, n_his, n_route, blocks[0][0]), jnp.float32)
    adj = jax.random.normal(kadj, (n_route, Ks * n_route), jnp.float32) * 0.1

    params, Ko = init_stgcn_params(kp, n_his, d_out, n_route, Ks, Kt, blocks)
    program, slabs, vec_slab, meta = prepare_stgcn(
        params, adj, n_his, n_route, Ks, Kt, blocks, Ko, d_out, TB=8)

    fwd = jax.jit(lambda xx, ss, vv: stgcn_forward(xx, ss, vv, program=program, meta=meta))
    out = jax.block_until_ready(fwd(x, slabs, vec_slab))

    assert out.shape == (B, d_out, n_route, 1), out.shape
    assert bool(jnp.all(jnp.isfinite(out)))

    # Structural check of the folded/fused operators against the unfused
    # reference (kernel uses bf16 weights -> small numeric differences only).
    ref = stgcn_reference(x, adj, params, Ks, Kt, blocks, Ko, d_out)
    err = float(jnp.max(jnp.abs(out - ref)))
    assert err < 1e-1, f"kernel vs. reference mismatch: max|diff| = {err}"

    print("KERNEL_OK")
</pallas_src>

<mosaic_0001>
module attributes {stable_mosaic.version = 11 : i64} {
  func.func @kernel(%arg0: i32, %arg1: memref<8x8x128xf32, #tpu.memory_space<vmem>>, %arg2: memref<640x128xbf16, #tpu.memory_space<vmem>>, %arg3: memref<1280x256xbf16, #tpu.memory_space<vmem>>, %arg4: memref<1280x512xbf16, #tpu.memory_space<vmem>>, %arg5: memref<15x512xf32, #tpu.memory_space<vmem>>, %arg6: memref<8x128xf32, #tpu.memory_space<vmem>>) attributes {dimension_semantics = [#tpu.dimension_semantics<parallel>], iteration_bounds = array<i64: 1>, scalar_prefetch = 0 : i64, scratch_operands = 0 : i64, tpu.core_type = #tpu.core_type<tc>, window_params = [{transform_indices = @transform_0, window_bounds = array<i64: 8, 8, 128>}, {pipeline_mode = #tpu.pipeline_mode<synchronous>, transform_indices = @transform_1, window_bounds = array<i64: 640, 128>}, {pipeline_mode = #tpu.pipeline_mode<synchronous>, transform_indices = @transform_2, window_bounds = array<i64: 1280, 256>}, {pipeline_mode = #tpu.pipeline_mode<synchronous>, transform_indices = @transform_3, window_bounds = array<i64: 1280, 512>}, {pipeline_mode = #tpu.pipeline_mode<synchronous>, transform_indices = @transform_4, window_bounds = array<i64: 15, 512>}, {transform_indices = @transform_5, window_bounds = array<i64: 8, 128>}]} {
    %c0 = arith.constant 0 : index
    %c0_0 = arith.constant 0 : index
    %c0_1 = arith.constant 0 : index
    %0 = vector.load %arg1[%c0, %c0_0, %c0_1] : memref<8x8x128xf32, #tpu.memory_space<vmem>>, vector<1x8x128xf32>
    %1 = vector.shape_cast %0 : vector<1x8x128xf32> to vector<8x128xf32>
    %c1 = arith.constant 1 : index
    %c0_2 = arith.constant 0 : index
    %c0_3 = arith.constant 0 : index
    %2 = vector.load %arg1[%c1, %c0_2, %c0_3] : memref<8x8x128xf32, #tpu.memory_space<vmem>>, vector<1x8x128xf32>
    %3 = vector.shape_cast %2 : vector<1x8x128xf32> to vector<8x128xf32>
    %c2 = arith.constant 2 : index
    %c0_4 = arith.constant 0 : index
    %c0_5 = arith.constant 0 : index
    %4 = vector.load %arg1[%c2, %c0_4, %c0_5] : memref<8x8x128xf32, #tpu.memory_space<vmem>>, vector<1x8x128xf32>
    %5 = vector.shape_cast %4 : vector<1x8x128xf32> to vector<8x128xf32>
    %c3 = arith.constant 3 : index
    %c0_6 = arith.constant 0 : index
    %c0_7 = arith.constant 0 : index
    %6 = vector.load %arg1[%c3, %c0_6, %c0_7] : memref<8x8x128xf32, #tpu.memory_space<vmem>>, vector<1x8x128xf32>
    %7 = vector.shape_cast %6 : vector<1x8x128xf32> to vector<8x128xf32>
    %c4 = arith.constant 4 : index
    %c0_8 = arith.constant 0 : index
    %c0_9 = arith.constant 0 : index
    %8 = vector.load %arg1[%c4, %c0_8, %c0_9] : memref<8x8x128xf32, #tpu.memory_space<vmem>>, vector<1x8x128xf32>
    %9 = vector.shape_cast %8 : vector<1x8x128xf32> to vector<8x128xf32>
    %c5 = arith.constant 5 : index
    %c0_10 = arith.constant 0 : index
    %c0_11 = arith.constant 0 : index
    %10 = vector.load %arg1[%c5, %c0_10, %c0_11] : memref<8x8x128xf32, #tpu.memory_space<vmem>>, vector<1x8x128xf32>
    %11 = vector.shape_cast %10 : vector<1x8x128xf32> to vector<8x128xf32>
    %c6 = arith.constant 6 : index
    %c0_12 = arith.constant 0 : index
    %c0_13 = arith.constant 0 : index
    %12 = vector.load %arg1[%c6, %c0_12, %c0_13] : memref<8x8x128xf32, #tpu.memory_space<vmem>>, vector<1x8x128xf32>
    %13 = vector.shape_cast %12 : vector<1x8x128xf32> to vector<8x128xf32>
    %c7 = arith.constant 7 : index
    %c0_14 = arith.constant 0 : index
    %c0_15 = arith.constant 0 : index
    %14 = vector.load %arg1[%c7, %c0_14, %c0_15] : memref<8x8x128xf32, #tpu.memory_space<vmem>>, vector<1x8x128xf32>
    %15 = vector.shape_cast %14 : vector<1x8x128xf32> to vector<8x128xf32>
    %16 = tpu.concatenate %1, %3, %5, %7, %9, %11, %13, %15 in 0 : vector<8x128xf32>, vector<8x128xf32>, vector<8x128xf32>, vector<8x128xf32>, vector<8x128xf32>, vector<8x128xf32>, vector<8x128xf32>, vector<8x128xf32> -> vector<64x128xf32>
    %c0_16 = arith.constant 0 : index
    %c0_17 = arith.constant 0 : index
    %17 = vector.load %arg5[%c0_16, %c0_17] : memref<15x512xf32, #tpu.memory_space<vmem>>, vector<1x256xf32>
    %18 = vector.extract_strided_slice %16 {offsets = [0, 0], sizes = [56, 128], strides = [1, 1]} : vector<64x128xf32> to vector<56x128xf32>
    %19 = arith.truncf %18 : vector<56x128xf32> to vector<56x128xbf16>
    %c0_18 = arith.constant 0 : index
    %c0_19 = arith.constant 0 : index
    %20 = vector.load %arg3[%c0_18, %c0_19] : memref<1280x256xbf16, #tpu.memory_space<vmem>>, vector<128x256xbf16>
    %cst = arith.constant dense<0.000000e+00> : vector<56x256xf32>
    %21 = tpu.matmul %19, %20, %cst {dimension_numbers = #tpu.dot_dimension_numbers<[1], [0], [0], [1], [0, 0, 1, 1], [], []>} : vector<56x128xbf16>, vector<128x256xbf16>, vector<56x256xf32> -> vector<56x256xf32>
    %22 = vector.extract_strided_slice %16 {offsets = [8, 0], sizes = [56, 128], strides = [1, 1]} : vector<64x128xf32> to vector<56x128xf32>
    %23 = arith.truncf %22 : vector<56x128xf32> to vector<56x128xbf16>
    %c128 = arith.constant 128 : index
    %c0_20 = arith.constant 0 : index
    %24 = vector.load %arg3[%c128, %c0_20] : memref<1280x256xbf16, #tpu.memory_space<vmem>>, vector<128x256xbf16>
    %cst_21 = arith.constant dense<0.000000e+00> : vector<56x256xf32>
    %25 = tpu.matmul %23, %24, %cst_21 {dimension_numbers = #tpu.dot_dimension_numbers<[1], [0], [0], [1], [0, 0, 1, 1], [], []>} : vector<56x128xbf16>, vector<128x256xbf16>, vector<56x256xf32> -> vector<56x256xf32>
    %26 = arith.addf %21, %25 : vector<56x256xf32>
    %27 = vector.broadcast %17 : vector<1x256xf32> to vector<56x256xf32>
    %28 = arith.addf %26, %27 : vector<56x256xf32>
    %29 = vector.extract_strided_slice %28 {offsets = [0, 0], sizes = [56, 128], strides = [1, 1]} : vector<56x256xf32> to vector<56x128xf32>
    %30 = vector.extract_strided_slice %28 {offsets = [0, 128], sizes = [56, 128], strides = [1, 1]} : vector<56x256xf32> to vector<56x128xf32>
    %31 = arith.negf %30 : vector<56x128xf32>
    %32 = math.exp %31 : vector<56x128xf32>
    %cst_22 = arith.constant 1.000000e+00 : f32
    %33 = vector.broadcast %cst_22 : f32 to vector<56x128xf32>
    %34 = arith.addf %33, %32 : vector<56x128xf32>
    %35 = arith.divf %33, %34 : vector<56x128xf32>
    %36 = arith.mulf %29, %35 : vector<56x128xf32>
    %c1_23 = arith.constant 1 : index
    %c0_24 = arith.constant 0 : index
    %37 = vector.load %arg5[%c1_23, %c0_24] : memref<15x512xf32, #tpu.memory_space<vmem>>, vector<1x128xf32>
    %38 = arith.truncf %36 : vector<56x128xf32> to vector<56x128xbf16>
    %c0_25 = arith.constant 0 : index
    %c0_26 = arith.constant 0 : index
    %39 = vector.load %arg2[%c0_25, %c0_26] : memref<640x128xbf16, #tpu.memory_space<vmem>>, vector<128x128xbf16>
    %cst_27 = arith.constant dense<0.000000e+00> : vector<56x128xf32>
    %40 = tpu.matmul %38, %39, %cst_27 {dimension_numbers = #tpu.dot_dimension_numbers<[1], [0], [0], [1], [0, 0, 1, 1], [], []>} : vector<56x128xbf16>, vector<128x128xbf16>, vector<56x128xf32> -> vector<56x128xf32>
    %41 = vector.broadcast %37 : vector<1x128xf32> to vector<56x128xf32>
    %42 = arith.addf %40, %41 : vector<56x128xf32>
    %cst_28 = arith.constant 0.000000e+00 : f32
    %43 = vector.broadcast %cst_28 : f32 to vector<56x128xf32>
    %44 = arith.maximumf %42, %43 : vector<56x128xf32>
    %c2_29 = arith.constant 2 : index
    %c0_30 = arith.constant 0 : index
    %45 = vector.load %arg5[%c2_29, %c0_30] : memref<15x512xf32, #tpu.memory_space<vmem>>, vector<1x128xf32>
    %46 = vector.extract_strided_slice %44 {offsets = [0, 0], sizes = [48, 128], strides = [1, 1]} : vector<56x128xf32> to vector<48x128xf32>
    %47 = arith.truncf %46 : vector<48x128xf32> to vector<48x128xbf16>
    %c128_31 = arith.constant 128 : index
    %c0_32 = arith.constant 0 : index
    %48 = vector.load %arg2[%c128_31, %c0_32] : memref<640x128xbf16, #tpu.memory_space<vmem>>, vector<128x128xbf16>
    %cst_33 = arith.constant dense<0.000000e+00> : vector<48x128xf32>
    %49 = tpu.matmul %47, %48, %cst_33 {dimension_numbers = #tpu.dot_dimension_numbers<[1], [0], [0], [1], [0, 0, 1, 1], [], []>} : vector<48x128xbf16>, vector<128x128xbf16>, vector<48x128xf32> -> vector<48x128xf32>
    %50 = vector.extract_strided_slice %44 {offsets = [8, 0], sizes = [48, 128], strides = [1, 1]} : vector<56x128xf32> to vector<48x128xf32>
    %51 = arith.truncf %50 : vector<48x128xf32> to vector<48x128xbf16>
    %c256 = arith.constant 256 : index
    %c0_34 = arith.constant 0 : index
    %52 = vector.load %arg2[%c256, %c0_34] : memref<640x128xbf16, #tpu.memory_space<vmem>>, vector<128x128xbf16>
    %cst_35 = arith.constant dense<0.000000e+00> : vector<48x128xf32>
    %53 = tpu.matmul %51, %52, %cst_35 {dimension_numbers = #tpu.dot_dimension_numbers<[1], [0], [0], [1], [0, 0, 1, 1], [], []>} : vector<48x128xbf16>, vector<128x128xbf16>, vector<48x128xf32> -> vector<48x128xf32>
    %54 = arith.addf %49, %53 : vector<48x128xf32>
    %55 = vector.broadcast %45 : vector<1x128xf32> to vector<48x128xf32>
    %56 = arith.addf %54, %55 : vector<48x128xf32>
    %cst_36 = arith.constant 0.000000e+00 : f32
    %57 = vector.broadcast %cst_36 : f32 to vector<48x128xf32>
    %58 = arith.maximumf %56, %57 : vector<48x128xf32>
    %c3_37 = arith.constant 3 : index
    %c0_38 = arith.constant 0 : index
    %59 = vector.load %arg5[%c3_37, %c0_38] : memref<15x512xf32, #tpu.memory_space<vmem>>, vector<1x128xf32>
    %c4_39 = arith.constant 4 : index
    %c0_40 = arith.constant 0 : index
    %60 = vector.load %arg5[%c4_39, %c0_40] : memref<15x512xf32, #tpu.memory_space<vmem>>, vector<1x128xf32>
    %cst_41 = arith.constant dense<0.000000e+00> : vector<48xf32>
    %61 = vector.multi_reduction <add>, %58, %cst_41 [1] : vector<48x128xf32> to vector<48xf32>
    %62 = vector.shape_cast %61 : vector<48xf32> to vector<48x1xf32>
    %cst_42 = arith.constant 1.280000e+02 : f32
    %63 = vector.broadcast %cst_42 : f32 to vector<48x1xf32>
    %64 = arith.divf %62, %63 : vector<48x1xf32>
    %65 = vector.broadcast %64 : vector<48x1xf32> to vector<48x128xf32>
    %66 = arith.subf %58, %65 : vector<48x128xf32>
    %67 = arith.mulf %66, %66 : vector<48x128xf32>
    %cst_43 = arith.constant dense<0.000000e+00> : vector<48xf32>
    %68 = vector.multi_reduction <add>, %67, %cst_43 [1] : vector<48x128xf32> to vector<48xf32>
    %69 = vector.shape_cast %68 : vector<48xf32> to vector<48x1xf32>
    %cst_44 = arith.constant 1.280000e+02 : f32
    %70 = vector.broadcast %cst_44 : f32 to vector<48x1xf32>
    %71 = arith.divf %69, %70 : vector<48x1xf32>
    %72 = vector.broadcast %64 : vector<48x1xf32> to vector<48x128xf32>
    %73 = arith.subf %58, %72 : vector<48x128xf32>
    %cst_45 = arith.constant 9.99999974E-6 : f32
    %74 = vector.broadcast %cst_45 : f32 to vector<48x1xf32>
    %75 = arith.addf %71, %74 : vector<48x1xf32>
    %76 = math.rsqrt %75 : vector<48x1xf32>
    %77 = vector.broadcast %76 : vector<48x1xf32> to vector<48x128xf32>
    %78 = arith.mulf %73, %77 : vector<48x128xf32>
    %79 = vector.broadcast %59 : vector<1x128xf32> to vector<48x128xf32>
    %80 = arith.mulf %78, %79 : vector<48x128xf32>
    %81 = vector.broadcast %60 : vector<1x128xf32> to vector<48x128xf32>
    %82 = arith.addf %80, %81 : vector<48x128xf32>
    %c5_46 = arith.constant 5 : index
    %c0_47 = arith.constant 0 : index
    %83 = vector.load %arg5[%c5_46, %c0_47] : memref<15x512xf32, #tpu.memory_space<vmem>>, vector<1x512xf32>
    %84 = vector.extract_strided_slice %82 {offsets = [0, 0], sizes = [40, 128], strides = [1, 1]} : vector<48x128xf32> to vector<40x128xf32>
    %85 = arith.truncf %84 : vector<40x128xf32> to vector<40x128xbf16>
    %c0_48 = arith.constant 0 : index
    %c0_49 = arith.constant 0 : index
    %86 = vector.load %arg4[%c0_48, %c0_49] : memref<1280x512xbf16, #tpu.memory_space<vmem>>, vector<128x512xbf16>
    %cst_50 = arith.constant dense<0.000000e+00> : vector<40x512xf32>
    %87 = tpu.matmul %85, %86, %cst_50 {dimension_numbers = #tpu.dot_dimension_numbers<[1], [0], [0], [1], [0, 0, 1, 1], [], []>} : vector<40x128xbf16>, vector<128x512xbf16>, vector<40x512xf32> -> vector<40x512xf32>
    %88 = vector.extract_strided_slice %82 {offsets = [8, 0], sizes = [40, 128], strides = [1, 1]} : vector<48x128xf32> to vector<40x128xf32>
    %89 = arith.truncf %88 : vector<40x128xf32> to vector<40x128xbf16>
    %c128_51 = arith.constant 128 : index
    %c0_52 = arith.constant 0 : index
    %90 = vector.load %arg4[%c128_51, %c0_52] : memref<1280x512xbf16, #tpu.memory_space<vmem>>, vector<128x512xbf16>
    %cst_53 = arith.constant dense<0.000000e+00> : vector<40x512xf32>
    %91 = tpu.matmul %89, %90, %cst_53 {dimension_numbers = #tpu.dot_dimension_numbers<[1], [0], [0], [1], [0, 0, 1, 1], [], []>} : vector<40x128xbf16>, vector<128x512xbf16>, vector<40x512xf32> -> vector<40x512xf32>
    %92 = arith.addf %87, %91 : vector<40x512xf32>
    %93 = vector.broadcast %83 : vector<1x512xf32> to vector<40x512xf32>
    %94 = arith.addf %92, %93 : vector<40x512xf32>
    %95 = vector.extract_strided_slice %94 {offsets = [0, 0], sizes = [40, 256], strides = [1, 1]} : vector<40x512xf32> to vector<40x256xf32>
    %96 = vector.extract_strided_slice %94 {offsets = [0, 256], sizes = [40, 256], strides = [1, 1]} : vector<40x512xf32> to vector<40x256xf32>
    %97 = arith.negf %96 : vector<40x256xf32>
    %98 = math.exp %97 : vector<40x256xf32>
    %cst_54 = arith.constant 1.000000e+00 : f32
    %99 = vector.broadcast %cst_54 : f32 to vector<40x256xf32>
    %100 = arith.addf %99, %98 : vector<40x256xf32>
    %101 = arith.divf %99, %100 : vector<40x256xf32>
    %102 = arith.mulf %95, %101 : vector<40x256xf32>
    %c6_55 = arith.constant 6 : index
    %c0_56 = arith.constant 0 : index
    %103 = vector.load %arg5[%c6_55, %c0_56] : memref<15x512xf32, #tpu.memory_space<vmem>>, vector<1x256xf32>
    %104 = arith.truncf %102 : vector<40x256xf32> to vector<40x256xbf16>
    %c256_57 = arith.constant 256 : index
    %c0_58 = arith.constant 0 : index
    %105 = vector.load %arg3[%c256_57, %c0_58] : memref<1280x256xbf16, #tpu.memory_space<vmem>>, vector<256x256xbf16>
    %cst_59 = arith.constant dense<0.000000e+00> : vector<40x256xf32>
    %106 = tpu.matmul %104, %105, %cst_59 {dimension_numbers = #tpu.dot_dimension_numbers<[1], [0], [0], [1], [0, 0, 1, 1], [], []>} : vector<40x256xbf16>, vector<256x256xbf16>, vector<40x256xf32> -> vector<40x256xf32>
    %107 = vector.broadcast %103 : vector<1x256xf32> to vector<40x256xf32>
    %108 = arith.addf %106, %107 : vector<40x256xf32>
    %cst_60 = arith.constant 0.000000e+00 : f32
    %109 = vector.broadcast %cst_60 : f32 to vector<40x256xf32>
    %110 = arith.maximumf %108, %109 : vector<40x256xf32>
    %c7_61 = arith.constant 7 : index
    %c0_62 = arith.constant 0 : index
    %111 = vector.load %arg5[%c7_61, %c0_62] : memref<15x512xf32, #tpu.memory_space<vmem>>, vector<1x256xf32>
    %112 = vector.extract_strided_slice %110 {offsets = [0, 0], sizes = [32, 256], strides = [1, 1]} : vector<40x256xf32> to vector<32x256xf32>
    %113 = arith.truncf %112 : vector<32x256xf32> to vector<32x256xbf16>
    %c512 = arith.constant 512 : index
    %c0_63 = arith.constant 0 : index
    %114 = vector.load %arg3[%c512, %c0_63] : memref<1280x256xbf16, #tpu.memory_space<vmem>>, vector<256x256xbf16>
    %cst_64 = arith.constant dense<0.000000e+00> : vector<32x256xf32>
    %115 = tpu.matmul %113, %114, %cst_64 {dimension_numbers = #tpu.dot_dimension_numbers<[1], [0], [0], [1], [0, 0, 1, 1], [], []>} : vector<32x256xbf16>, vector<256x256xbf16>, vector<32x256xf32> -> vector<32x256xf32>
    %116 = vector.extract_strided_slice %110 {offsets = [8, 0], sizes = [32, 256], strides = [1, 1]} : vector<40x256xf32> to vector<32x256xf32>
    %117 = arith.truncf %116 : vector<32x256xf32> to vector<32x256xbf16>
    %c768 = arith.constant 768 : index
    %c0_65 = arith.constant 0 : index
    %118 = vector.load %arg3[%c768, %c0_65] : memref<1280x256xbf16, #tpu.memory_space<vmem>>, vector<256x256xbf16>
    %cst_66 = arith.constant dense<0.000000e+00> : vector<32x256xf32>
    %119 = tpu.matmul %117, %118, %cst_66 {dimension_numbers = #tpu.dot_dimension_numbers<[1], [0], [0], [1], [0, 0, 1, 1], [], []>} : vector<32x256xbf16>, vector<256x256xbf16>, vector<32x256xf32> -> vector<32x256xf32>
    %120 = arith.addf %115, %119 : vector<32x256xf32>
    %121 = vector.broadcast %111 : vector<1x256xf32> to vector<32x256xf32>
    %122 = arith.addf %120, %121 : vector<32x256xf32>
    %cst_67 = arith.constant 0.000000e+00 : f32
    %123 = vector.broadcast %cst_67 : f32 to vector<32x256xf32>
    %124 = arith.maximumf %122, %123 : vector<32x256xf32>
    %c8 = arith.constant 8 : index
    %c0_68 = arith.constant 0 : index
    %125 = vector.load %arg5[%c8, %c0_68] : memref<15x512xf32, #tpu.memory_space<vmem>>, vector<1x256xf32>
    %c9 = arith.constant 9 : index
    %c0_69 = arith.constant 0 : index
    %126 = vector.load %arg5[%c9, %c0_69] : memref<15x512xf32, #tpu.memory_space<vmem>>, vector<1x256xf32>
    %cst_70 = arith.constant dense<0.000000e+00> : vector<32xf32>
    %127 = vector.multi_reduction <add>, %124, %cst_70 [1] : vector<32x256xf32> to vector<32xf32>
    %128 = vector.shape_cast %127 : vector<32xf32> to vector<32x1xf32>
    %cst_71 = arith.constant 2.560000e+02 : f32
    %129 = vector.broadcast %cst_71 : f32 to vector<32x1xf32>
    %130 = arith.divf %128, %129 : vector<32x1xf32>
    %131 = vector.broadcast %130 : vector<32x1xf32> to vector<32x256xf32>
    %132 = arith.subf %124, %131 : vector<32x256xf32>
    %133 = arith.mulf %132, %132 : vector<32x256xf32>
    %cst_72 = arith.constant dense<0.000000e+00> : vector<32xf32>
    %134 = vector.multi_reduction <add>, %133, %cst_72 [1] : vector<32x256xf32> to vector<32xf32>
    %135 = vector.shape_cast %134 : vector<32xf32> to vector<32x1xf32>
    %cst_73 = arith.constant 2.560000e+02 : f32
    %136 = vector.broadcast %cst_73 : f32 to vector<32x1xf32>
    %137 = arith.divf %135, %136 : vector<32x1xf32>
    %138 = vector.broadcast %130 : vector<32x1xf32> to vector<32x256xf32>
    %139 = arith.subf %124, %138 : vector<32x256xf32>
    %cst_74 = arith.constant 9.99999974E-6 : f32
    %140 = vector.broadcast %cst_74 : f32 to vector<32x1xf32>
    %141 = arith.addf %137, %140 : vector<32x1xf32>
    %142 = math.rsqrt %141 : vector<32x1xf32>
    %143 = vector.broadcast %142 : vector<32x1xf32> to vector<32x256xf32>
    %144 = arith.mulf %139, %143 : vector<32x256xf32>
    %145 = vector.broadcast %125 : vector<1x256xf32> to vector<32x256xf32>
    %146 = arith.mulf %144, %145 : vector<32x256xf32>
    %147 = vector.broadcast %126 : vector<1x256xf32> to vector<32x256xf32>
    %148 = arith.addf %146, %147 : vector<32x256xf32>
    %c10 = arith.constant 10 : index
    %c0_75 = arith.constant 0 : index
    %149 = vector.load %arg5[%c10, %c0_75] : memref<15x512xf32, #tpu.memory_space<vmem>>, vector<1x512xf32>
    %150 = vector.extract_strided_slice %148 {offsets = [0, 0], sizes = [8, 256], strides = [1, 1]} : vector<32x256xf32> to vector<8x256xf32>
    %151 = vector.extract_strided_slice %148 {offsets = [8, 0], sizes = [8, 256], strides = [1, 1]} : vector<32x256xf32> to vector<8x256xf32>
    %152 = vector.extract_strided_slice %148 {offsets = [16, 0], sizes = [8, 256], strides = [1, 1]} : vector<32x256xf32> to vector<8x256xf32>
    %153 = vector.extract_strided_slice %148 {offsets = [24, 0], sizes = [8, 256], strides = [1, 1]} : vector<32x256xf32> to vector<8x256xf32>
    %154 = tpu.concatenate %150, %151, %152, %153 in 1 : vector<8x256xf32>, vector<8x256xf32>, vector<8x256xf32>, vector<8x256xf32> -> vector<8x1024xf32>
    %155 = arith.truncf %154 : vector<8x1024xf32> to vector<8x1024xbf16>
    %c256_76 = arith.constant 256 : index
    %c0_77 = arith.constant 0 : index
    %156 = vector.load %arg4[%c256_76, %c0_77] : memref<1280x512xbf16, #tpu.memory_space<vmem>>, vector<1024x512xbf16>
    %cst_78 = arith.constant dense<0.000000e+00> : vector<8x512xf32>
    %157 = tpu.matmul %155, %156, %cst_78 {dimension_numbers = #tpu.dot_dimension_numbers<[1], [0], [0], [1], [0, 0, 1, 1], [], []>} : vector<8x1024xbf16>, vector<1024x512xbf16>, vector<8x512xf32> -> vector<8x512xf32>
    %158 = vector.broadcast %149 : vector<1x512xf32> to vector<8x512xf32>
    %159 = arith.addf %157, %158 : vector<8x512xf32>
    %160 = vector.extract_strided_slice %159 {offsets = [0, 0], sizes = [8, 256], strides = [1, 1]} : vector<8x512xf32> to vector<8x256xf32>
    %161 = vector.extract_strided_slice %159 {offsets = [0, 256], sizes = [8, 256], strides = [1, 1]} : vector<8x512xf32> to vector<8x256xf32>
    %162 = arith.negf %161 : vector<8x256xf32>
    %163 = math.exp %162 : vector<8x256xf32>
    %cst_79 = arith.constant 1.000000e+00 : f32
    %164 = vector.broadcast %cst_79 : f32 to vector<8x256xf32>
    %165 = arith.addf %164, %163 : vector<8x256xf32>
    %166 = arith.divf %164, %165 : vector<8x256xf32>
    %167 = arith.mulf %160, %166 : vector<8x256xf32>
    %c11 = arith.constant 11 : index
    %c0_80 = arith.constant 0 : index
    %168 = vector.load %arg5[%c11, %c0_80] : memref<15x512xf32, #tpu.memory_space<vmem>>, vector<1x256xf32>
    %c12 = arith.constant 12 : index
    %c0_81 = arith.constant 0 : index
    %169 = vector.load %arg5[%c12, %c0_81] : memref<15x512xf32, #tpu.memory_space<vmem>>, vector<1x256xf32>
    %cst_82 = arith.constant dense<0.000000e+00> : vector<8xf32>
    %170 = vector.multi_reduction <add>, %167, %cst_82 [1] : vector<8x256xf32> to vector<8xf32>
    %171 = vector.shape_cast %170 : vector<8xf32> to vector<8x1xf32>
    %cst_83 = arith.constant 2.560000e+02 : f32
    %172 = vector.broadcast %cst_83 : f32 to vector<8x1xf32>
    %173 = arith.divf %171, %172 : vector<8x1xf32>
    %174 = vector.broadcast %173 : vector<8x1xf32> to vector<8x256xf32>
    %175 = arith.subf %167, %174 : vector<8x256xf32>
    %176 = arith.mulf %175, %175 : vector<8x256xf32>
    %cst_84 = arith.constant dense<0.000000e+00> : vector<8xf32>
    %177 = vector.multi_reduction <add>, %176, %cst_84 [1] : vector<8x256xf32> to vector<8xf32>
    %178 = vector.shape_cast %177 : vector<8xf32> to vector<8x1xf32>
    %cst_85 = arith.constant 2.560000e+02 : f32
    %179 = vector.broadcast %cst_85 : f32 to vector<8x1xf32>
    %180 = arith.divf %178, %179 : vector<8x1xf32>
    %181 = vector.broadcast %173 : vector<8x1xf32> to vector<8x256xf32>
    %182 = arith.subf %167, %181 : vector<8x256xf32>
    %cst_86 = arith.constant 9.99999974E-6 : f32
    %183 = vector.broadcast %cst_86 : f32 to vector<8x1xf32>
    %184 = arith.addf %180, %183 : vector<8x1xf32>
    %185 = math.rsqrt %184 : vector<8x1xf32>
    %186 = vector.broadcast %185 : vector<8x1xf32> to vector<8x256xf32>
    %187 = arith.mulf %182, %186 : vector<8x256xf32>
    %188 = vector.broadcast %168 : vector<1x256xf32> to vector<8x256xf32>
    %189 = arith.mulf %187, %188 : vector<8x256xf32>
    %190 = vector.broadcast %169 : vector<1x256xf32> to vector<8x256xf32>
    %191 = arith.addf %189, %190 : vector<8x256xf32>
    %c13 = arith.constant 13 : index
    %c0_87 = arith.constant 0 : index
    %192 = vector.load %arg5[%c13, %c0_87] : memref<15x512xf32, #tpu.memory_space<vmem>>, vector<1x256xf32>
    %193 = arith.truncf %191 : vector<8x256xf32> to vector<8x256xbf16>
    %c1024 = arith.constant 1024 : index
    %c0_88 = arith.constant 0 : index
    %194 = vector.load %arg3[%c1024, %c0_88] : memref<1280x256xbf16, #tpu.memory_space<vmem>>, vector<256x256xbf16>
    %cst_89 = arith.constant dense<0.000000e+00> : vector<8x256xf32>
    %195 = tpu.matmul %193, %194, %cst_89 {dimension_numbers = #tpu.dot_dimension_numbers<[1], [0], [0], [1], [0, 0, 1, 1], [], []>} : vector<8x256xbf16>, vector<256x256xbf16>, vector<8x256xf32> -> vector<8x256xf32>
    %196 = vector.broadcast %192 : vector<1x256xf32> to vector<8x256xf32>
    %197 = arith.addf %195, %196 : vector<8x256xf32>
    %198 = arith.negf %197 : vector<8x256xf32>
    %199 = math.exp %198 : vector<8x256xf32>
    %cst_90 = arith.constant 1.000000e+00 : f32
    %200 = vector.broadcast %cst_90 : f32 to vector<8x256xf32>
    %201 = arith.addf %200, %199 : vector<8x256xf32>
    %202 = arith.divf %200, %201 : vector<8x256xf32>
    %c14 = arith.constant 14 : index
    %c0_91 = arith.constant 0 : index
    %203 = vector.load %arg5[%c14, %c0_91] : memref<15x512xf32, #tpu.memory_space<vmem>>, vector<1x128xf32>
    %204 = arith.truncf %202 : vector<8x256xf32> to vector<8x256xbf16>
    %c384 = arith.constant 384 : index
    %c0_92 = arith.constant 0 : index
    %205 = vector.load %arg2[%c384, %c0_92] : memref<640x128xbf16, #tpu.memory_space<vmem>>, vector<256x128xbf16>
    %cst_93 = arith.constant dense<0.000000e+00> : vector<8x128xf32>
    %206 = tpu.matmul %204, %205, %cst_93 {dimension_numbers = #tpu.dot_dimension_numbers<[1], [0], [0], [1], [0, 0, 1, 1], [], []>} : vector<8x256xbf16>, vector<256x128xbf16>, vector<8x128xf32> -> vector<8x128xf32>
    %207 = vector.broadcast %203 : vector<1x128xf32> to vector<8x128xf32>
    %208 = arith.addf %206, %207 : vector<8x128xf32>
    %c0_94 = arith.constant 0 : index
    %c0_95 = arith.constant 0 : index
    %209 = vector.load %arg6[%c0_94, %c0_95] : memref<8x128xf32, #tpu.memory_space<vmem>>, vector<8x128xf32>
    tpu.vector_store %arg6[%c0_94, %c0_95], %208 {strides = array<i32>} : memref<8x128xf32, #tpu.memory_space<vmem>>, vector<8x128xf32>,
    return
  }
  func.func @transform_0(%arg0: i32) -> (i32, i32, i32) {
    %c0_i32 = arith.constant 0 : i32
    %c0_i32_0 = arith.constant 0 : i32
    %c0_i32_1 = arith.constant 0 : i32
    return %c0_i32, %arg0, %c0_i32_0 : i32, i32, i32
  }
  func.func @transform_1(%arg0: i32) -> (i32, i32) {
    %c0_i32 = arith.constant 0 : i32
    %c0_i32_0 = arith.constant 0 : i32
    %c0_i32_1 = arith.constant 0 : i32
    return %c0_i32, %c0_i32_0 : i32, i32
  }
  func.func @transform_2(%arg0: i32) -> (i32, i32) {
    %c0_i32 = arith.constant 0 : i32
    %c0_i32_0 = arith.constant 0 : i32
    %c0_i32_1 = arith.constant 0 : i32
    return %c0_i32, %c0_i32_0 : i32, i32
  }
  func.func @transform_3(%arg0: i32) -> (i32, i32) {
    %c0_i32 = arith.constant 0 : i32
    %c0_i32_0 = arith.constant 0 : i32
    %c0_i32_1 = arith.constant 0 : i32
    return %c0_i32, %c0_i32_0 : i32, i32
  }
  func.func @transform_4(%arg0: i32) -> (i32, i32) {
    %c0_i32 = arith.constant 0 : i32
    %c0_i32_0 = arith.constant 0 : i32
    %c0_i32_1 = arith.constant 0 : i32
    return %c0_i32, %c0_i32_0 : i32, i32
  }
  func.func @transform_5(%arg0: i32) -> (i32, i32) {
    %c0_i32 = arith.constant 0 : i32
    %c0_i32_0 = arith.constant 0 : i32
    return %arg0, %c0_i32 : i32, i32
  }
}

</mosaic_0001>

<llo_original>
// kernel: _lambda_.1
$region0: #{_lambda_.1}
  #allocation0 [shape = 'u32[]', space=smem, size = 0x4, offset = 0x4, fixed_abs, tag = 'smem constant byte address 0x4 - core index']
  #allocation1 [shape = 'u32[72,128]{1,0:T(1,128)}', space=vmem, size = 0x9000, scoped, tag = 'internal scratch']
  %s0 = inlined_call_operand.vmem [shape: f32[8,8,128], index: 0, kind: input, shape index: {}]
  %s1 = inlined_call_operand.hbm [shape: bf16[640,128], index: 1, kind: input, shape index: {}]
  %s2 = inlined_call_operand.hbm [shape: bf16[1280,256], index: 2, kind: input, shape index: {}]
  %s3 = inlined_call_operand.hbm [shape: bf16[1280,512], index: 3, kind: input, shape index: {}]
  %s4 = inlined_call_operand.hbm [shape: f32[15,512], index: 4, kind: input, shape index: {}]
  %s5 = inlined_call_operand.vmem [shape: f32[8,128], index: 5, kind: output, shape index: {}]
  %s6 = sld [smem:[#allocation0]]
  $region46: #{_lambda_.1} parent=0
    _
  %s8 = ssub.s32 1, %s6
  %s9 = scalar_select 0, %s8, %s6
  $region1: #{_lambda_.1} parent=0
    #allocation2 [shape = 'u8[163840]{0}', space=vmem, size = 0x28000, scoped, tag = 'input window, operand 1, single buffered']
    #allocation3 [shape = 's32[1]{0}', space=sflag, size = 0x4, scoped, tag = 'scoped memory for _lambda_.1']
    #allocation4 [shape = 'u8[655360]{0}', space=vmem, size = 0xa0000, scoped, tag = 'input window, operand 2, single buffered']
    #allocation5 [shape = 's32[1]{0}', space=sflag, size = 0x4, scoped, tag = 'scoped memory for _lambda_.1']
    #allocation6 [shape = 'u8[1310720]{0}', space=vmem, size = 0x140000, scoped, tag = 'input window, operand 3, single buffered']
    #allocation7 [shape = 'u8[32768]{0}', space=vmem, size = 0x8000, scoped, tag = 'input window, operand 4, single buffered']
    #allocation8 [shape = 's32[1]{0}', space=sflag, size = 0x4, scoped, tag = 'scoped memory for _lambda_.1']
    %10 = vsyncpa [#allocation3], 0
    %11 = vsyncpa [#allocation5], 0
    %12 = vsyncpa [#allocation8], 0
    // Predicated region
    $region2: #{_lambda_.1} parent=1 // pred_check
      _
    $region3: #{_lambda_.1} parent=1 // pred_check_branch
      %14 = sbr.rel (0) target = $region5
    $region4: #{_lambda_.1} parent=1 // pred_region
      _
    $region5: #{_lambda_.1} parent=1 // pred_fallthru
      _
    // Predicated region
    $region6: #{_lambda_.1} parent=1 // pred_check
      _
    $region7: #{_lambda_.1} parent=1 // pred_check_branch
      %16 = sbr.rel (0) target = $region9
    $region8: #{_lambda_.1} parent=1 // pred_region
      %18 = vsyncadd [#allocation3], 0
      %s19 = sshll.u32 %s1, 4
      %s20 = int_to_ptr.hbm [resolvable:$true] %s19
      %s21 = sshll.u32 [#allocation2], 4
      %s22 = int_to_ptr.vmem [resolvable:$true] %s21
      %27 = dma.hbm_to_vmem [thread:$0]  %s20, 5120, %s22, [#allocation3], 64, 64, 4
    $region9: #{_lambda_.1} parent=1 // pred_fallthru
      _
    // Predicated region
    $region10: #{_lambda_.1} parent=1 // pred_check
      _
    $region11: #{_lambda_.1} parent=1 // pred_check_branch
      %29 = sbr.rel (0) target = $region13
    $region12: #{_lambda_.1} parent=1 // pred_region
      %31 = vsyncadd [#allocation5], 0
      %s32 = sshll.u32 %s2, 4
      %s33 = int_to_ptr.hbm [resolvable:$true] %s32
      %s34 = sshll.u32 [#allocation4], 4
      %s35 = int_to_ptr.vmem [resolvable:$true] %s34
      %40 = dma.hbm_to_vmem [thread:$0]  %s33, 20480, %s35, [#allocation5], 128, 128, 8
    $region13: #{_lambda_.1} parent=1 // pred_fallthru
      _
    // Predicated region
    $region14: #{_lambda_.1} parent=1 // pred_check
      _
    $region15: #{_lambda_.1} parent=1 // pred_check_branch
      %42 = sbr.rel (0) target = $region17
    $region16: #{_lambda_.1} parent=1 // pred_region
      %44 = vsyncadd [#allocation5], 0
      %s45 = sshll.u32 %s3, 4
      %s46 = int_to_ptr.hbm [resolvable:$true] %s45
      %s47 = sshll.u32 [#allocation6], 4
      %s48 = int_to_ptr.vmem [resolvable:$true] %s47
      %53 = dma.hbm_to_vmem [thread:$0]  %s46, 40960, %s48, [#allocation5], 256, 256, 16
    $region17: #{_lambda_.1} parent=1 // pred_fallthru
      _
    // Predicated region
    $region18: #{_lambda_.1} parent=1 // pred_check
      _
    $region19: #{_lambda_.1} parent=1 // pred_check_branch
      %55 = sbr.rel (0) target = $region21
    $region20: #{_lambda_.1} parent=1 // pred_region
      %57 = vsyncadd [#allocation8], 0
      %s58 = sshll.u32 %s4, 4
      %s59 = int_to_ptr.hbm [resolvable:$true] %s58
      %s60 = sshll.u32 [#allocation7], 4
      %s61 = int_to_ptr.vmem [resolvable:$true] %s60
      %66 = dma.hbm_to_vmem [thread:$0]  %s59, 1024, %s61, [#allocation8], 512, 512, 32
    $region21: #{_lambda_.1} parent=1 // pred_fallthru
      _
    // Predicated region
    $region22: #{_lambda_.1} parent=1 // pred_check
      _
    $region23: #{_lambda_.1} parent=1 // pred_check_branch
      %68 = sbr.rel (0) target = $region25
    $region24: #{_lambda_.1} parent=1 // pred_region
      %70 = dma.done [#allocation3], 5120
    $region25: #{_lambda_.1} parent=1 // pred_fallthru
      _
    // Predicated region
    $region26: #{_lambda_.1} parent=1 // pred_check
      _
    $region27: #{_lambda_.1} parent=1 // pred_check_branch
      %72 = sbr.rel (0) target = $region29
    $region28: #{_lambda_.1} parent=1 // pred_region
      %74 = dma.done [#allocation5], 20480
    $region29: #{_lambda_.1} parent=1 // pred_fallthru
      _
    // Predicated region
    $region30: #{_lambda_.1} parent=1 // pred_check
      _
    $region31: #{_lambda_.1} parent=1 // pred_check_branch
      %76 = sbr.rel (0) target = $region33
    $region32: #{_lambda_.1} parent=1 // pred_region
      %78 = dma.done [#allocation5], 40960
    $region33: #{_lambda_.1} parent=1 // pred_fallthru
      _
    // Predicated region
    $region34: #{_lambda_.1} parent=1 // pred_check
      _
    $region35: #{_lambda_.1} parent=1 // pred_check_branch
      %80 = sbr.rel (0) target = $region37
    $region36: #{_lambda_.1} parent=1 // pred_region
      %82 = dma.done [#allocation8], 1024
    $region37: #{_lambda_.1} parent=1 // pred_fallthru
      _
    %v83 = vld [vmem:[%s0] sm:$0xff]
    %s84 = scalar_lea.vmem %s0, 8
    %v85 = vld [vmem:[%s84] sm:$0xff]
    %s86 = scalar_lea.vmem %s0, 16
    %v87 = vld [vmem:[%s86] sm:$0xff]
    %s88 = scalar_lea.vmem %s0, 24
    %v89 = vld [vmem:[%s88] sm:$0xff]
    %s90 = scalar_lea.vmem %s0, 32
    %v91 = vld [vmem:[%s90] sm:$0xff]
    %s92 = scalar_lea.vmem %s0, 40
    %v93 = vld [vmem:[%s92] sm:$0xff]
    %s94 = scalar_lea.vmem %s0, 48
    %v95 = vld [vmem:[%s94] sm:$0xff]
    %s96 = scalar_lea.vmem %s0, 56
    %v97 = vld [vmem:[%s96] sm:$0xff]
    %v98 = vld [vmem:[#allocation7] ss:$8 sm:$0x3]
    %v99 = vpack.c.bf16 %v85, %v83
    %v100 = vpack.c.bf16 %v89, %v87
    %v101 = vpack.c.bf16 %v93, %v91
    %v102 = vpack.c.bf16 %v95, %v95
    %v103 = vld [vmem:[#allocation4] sm:$0xff]
    %v104 = vld [vmem:[#allocation4 + $0x8] sm:$0xff]
    %v105 = vld [vmem:[#allocation4 + $0x10] sm:$0xff]
    %v106 = vld [vmem:[#allocation4 + $0x18] sm:$0xff]
    %v107 = vld [vmem:[#allocation4 + $0x20] sm:$0xff]
    %v108 = vld [vmem:[#allocation4 + $0x28] sm:$0xff]
    %v109 = vld [vmem:[#allocation4 + $0x30] sm:$0xff]
    %v110 = vld [vmem:[#allocation4 + $0x38] sm:$0xff]
    %v111 = vld [vmem:[#allocation4 + $0x40] sm:$0xff]
    %v112 = vld [vmem:[#allocation4 + $0x48] sm:$0xff]
    %v113 = vld [vmem:[#allocation4 + $0x50] sm:$0xff]
    %v114 = vld [vmem:[#allocation4 + $0x58] sm:$0xff]
    %v115 = vld [vmem:[#allocation4 + $0x60] sm:$0xff]
    %v116 = vld [vmem:[#allocation4 + $0x68] sm:$0xff]
    %v117 = vld [vmem:[#allocation4 + $0x70] sm:$0xff]
    %v118 = vld [vmem:[#allocation4 + $0x78] sm:$0xff]
    %v119 = vpack.c.bf16 %v87, %v85
    %v120 = vpack.c.bf16 %v91, %v89
    %v121 = vpack.c.bf16 %v95, %v93
    %v122 = vpack.c.bf16 %v97, %v97
    %v123 = vld [vmem:[#allocation4 + $0x80] sm:$0xff]
    %v124 = vld [vmem:[#allocation4 + $0x88] sm:$0xff]
    %v125 = vld [vmem:[#allocation4 + $0x90] sm:$0xff]
    %v126 = vld [vmem:[#allocation4 + $0x98] sm:$0xff]
    %v127 = vld [vmem:[#allocation4 + $0xa0] sm:$0xff]
    %v128 = vld [vmem:[#allocation4 + $0xa8] sm:$0xff]
    %v129 = vld [vmem:[#allocation4 + $0xb0] sm:$0xff]
    %v130 = vld [vmem:[#allocation4 + $0xb8] sm:$0xff]
    %v131 = vld [vmem:[#allocation4 + $0xc0] sm:$0xff]
    %v132 = vld [vmem:[#allocation4 + $0xc8] sm:$0xff]
    %v133 = vld [vmem:[#allocation4 + $0xd0] sm:$0xff]
    %v134 = vld [vmem:[#allocation4 + $0xd8] sm:$0xff]
    %v135 = vld [vmem:[#allocation4 + $0xe0] sm:$0xff]
    %v136 = vld [vmem:[#allocation4 + $0xe8] sm:$0xff]
    %v137 = vld [vmem:[#allocation4 + $0xf0] sm:$0xff]
    %v138 = vld [vmem:[#allocation4 + $0xf8] sm:$0xff]
    %v155 = vunpack.c.l.b16 %v123
    %v156 = vunpack.c.h.b16 %v123
    %v157 = vunpack.c.l.b16 %v124
    %v158 = vunpack.c.h.b16 %v124
    %v159 = vunpack.c.l.b16 %v125
    %v160 = vunpack.c.h.b16 %v125
    %v161 = vunpack.c.l.b16 %v126
    %v162 = vunpack.c.h.b16 %v126
    %v163 = vunpack.c.l.b16 %v127
    %v164 = vunpack.c.h.b16 %v127
    %v165 = vunpack.c.l.b16 %v128
    %v166 = vunpack.c.h.b16 %v128
    %v167 = vunpack.c.l.b16 %v129
    %v168 = vunpack.c.h.b16 %v129
    %v169 = vunpack.c.l.b16 %v130
    %v170 = vunpack.c.h.b16 %v130
    %v171 = vunpack.c.l.b16 %v131
    %v172 = vunpack.c.h.b16 %v131
    %v173 = vunpack.c.l.b16 %v132
    %v174 = vunpack.c.h.b16 %v132
    %v175 = vunpack.c.l.b16 %v133
    %v176 = vunpack.c.h.b16 %v133
    %v177 = vunpack.c.l.b16 %v134
    %v178 = vunpack.c.h.b16 %v134
    %v179 = vunpack.c.l.b16 %v135
    %v180 = vunpack.c.h.b16 %v135
    %v181 = vunpack.c.l.b16 %v136
    %v182 = vunpack.c.h.b16 %v136
    %v183 = vunpack.c.l.b16 %v137
    %v184 = vunpack.c.h.b16 %v137
    %v185 = vunpack.c.l.b16 %v138
    %v186 = vunpack.c.h.b16 %v138
    %v187 = vpack.c.b16 %v157, %v155
    %v188 = vpack.c.b16 %v158, %v156
    %v189 = vpack.c.b16 %v161, %v159
    %v190 = vpack.c.b16 %v162, %v160
    %v191 = vpack.c.b16 %v165, %v163
    %v192 = vpack.c.b16 %v166, %v164
    %v193 = vpack.c.b16 %v169, %v167
    %v194 = vpack.c.b16 %v170, %v168
    %v195 = vpack.c.b16 %v173, %v171
    %v196 = vpack.c.b16 %v174, %v172
    %v197 = vpack.c.b16 %v177, %v175
    %v198 = vpack.c.b16 %v178, %v176
    %v199 = vpack.c.b16 %v181, %v179
    %v200 = vpack.c.b16 %v182, %v180
    %v201 = vpack.c.b16 %v185, %v183
    %v202 = vpack.c.b16 %v186, %v184
    %219 = vmatpush.bf16.msra.mxu0 %v201
    %220 = vmatpush.bf16.msra.mxu0 %v199
    %221 = vmatpush.bf16.msra.mxu0 %v197
    %222 = vmatpush.bf16.msra.mxu0 %v195
    %223 = vmatpush.bf16.msra.mxu0 %v193
    %224 = vmatpush.bf16.msra.mxu0 %v191
    %225 = vmatpush.bf16.msra.mxu0 %v189
    %226 = vmatpush.bf16.msra.mxu0 %v187
    %227 = vmatmul.bf16.gmra.mxu0 %v119
    %v228 = vpop.f32.mrf.mxu0
    %v229 = vadd.f32 0.0, %v228
    %v230 = vpop.f32.mrf.mxu0
    %v231 = vadd.f32 0.0, %v230
    %232 = vmatmul.bf16.gmra.mxu0 %v120
    %v233 = vpop.f32.mrf.mxu0
    %v234 = vadd.f32 0.0, %v233
    %v235 = vpop.f32.mrf.mxu0
    %v236 = vadd.f32 0.0, %v235
    %237 = vmatmul.bf16.gmra.mxu0 %v121
    %v238 = vpop.f32.mrf.mxu0
    %v239 = vadd.f32 0.0, %v238
    %v240 = vpop.f32.mrf.mxu0
    %v241 = vadd.f32 0.0, %v240
    %242 = vmatmul.bf16.gmra.mxu0 %v122
    %v243 = vpop.f32.mrf.mxu0
    %v244 = vadd.f32 0.0, %v243
    %v245 = vpop.f32.mrf.mxu0
    %246 = vdwg.mxu0
    %247 = vmatpush.bf16.msra.mxu0 %v202
    %248 = vmatpush.bf16.msra.mxu0 %v200
    %249 = vmatpush.bf16.msra.mxu0 %v198
    %250 = vmatpush.bf16.msra.mxu0 %v196
    %251 = vmatpush.bf16.msra.mxu0 %v194
    %252 = vmatpush.bf16.msra.mxu0 %v192
    %253 = vmatpush.bf16.msra.mxu0 %v190
    %254 = vmatpush.bf16.msra.mxu0 %v188
    %255 = vmatmul.bf16.gmra.mxu0 %v119
    %v256 = vpop.f32.mrf.mxu0
    %v257 = vadd.f32 0.0, %v256
    %v258 = vpop.f32.mrf.mxu0
    %v259 = vadd.f32 0.0, %v258
    %260 = vmatmul.bf16.gmra.mxu0 %v120
    %v261 = vpop.f32.mrf.mxu0
    %v262 = vadd.f32 0.0, %v261
    %v263 = vpop.f32.mrf.mxu0
    %v264 = vadd.f32 0.0, %v263
    %265 = vmatmul.bf16.gmra.mxu0 %v121
    %v266 = vpop.f32.mrf.mxu0
    %v267 = vadd.f32 0.0, %v266
    %v268 = vpop.f32.mrf.mxu0
    %v269 = vadd.f32 0.0, %v268
    %270 = vmatmul.bf16.gmra.mxu0 %v122
    %v271 = vpop.f32.mrf.mxu0
    %v272 = vadd.f32 0.0, %v271
    %v273 = vpop.f32.mrf.mxu0
    %274 = vdwg.mxu0
    %v291 = vunpack.c.l.b16 %v103
    %v292 = vunpack.c.h.b16 %v103
    %v293 = vunpack.c.l.b16 %v104
    %v294 = vunpack.c.h.b16 %v104
    %v295 = vunpack.c.l.b16 %v105
    %v296 = vunpack.c.h.b16 %v105
    %v297 = vunpack.c.l.b16 %v106
    %v298 = vunpack.c.h.b16 %v106
    %v299 = vunpack.c.l.b16 %v107
    %v300 = vunpack.c.h.b16 %v107
    %v301 = vunpack.c.l.b16 %v108
    %v302 = vunpack.c.h.b16 %v108
    %v303 = vunpack.c.l.b16 %v109
    %v304 = vunpack.c.h.b16 %v109
    %v305 = vunpack.c.l.b16 %v110
    %v306 = vunpack.c.h.b16 %v110
    %v307 = vunpack.c.l.b16 %v111
    %v308 = vunpack.c.h.b16 %v111
    %v309 = vunpack.c.l.b16 %v112
    %v310 = vunpack.c.h.b16 %v112
    %v311 = vunpack.c.l.b16 %v113
    %v312 = vunpack.c.h.b16 %v113
    %v313 = vunpack.c.l.b16 %v114
    %v314 = vunpack.c.h.b16 %v114
    %v315 = vunpack.c.l.b16 %v115
    %v316 = vunpack.c.h.b16 %v115
    %v317 = vunpack.c.l.b16 %v116
    %v318 = vunpack.c.h.b16 %v116
    %v319 = vunpack.c.l.b16 %v117
    %v320 = vunpack.c.h.b16 %v117
    %v321 = vunpack.c.l.b16 %v118
    %v322 = vunpack.c.h.b16 %v118
    %v323 = vpack.c.b16 %v293, %v291
    %v324 = vpack.c.b16 %v294, %v292
    %v325 = vpack.c.b16 %v297, %v295
    %v326 = vpack.c.b16 %v298, %v296
    %v327 = vpack.c.b16 %v301, %v299
    %v328 = vpack.c.b16 %v302, %v300
    %v329 = vpack.c.b16 %v305, %v303
    %v330 = vpack.c.b16 %v306, %v304
    %v331 = vpack.c.b16 %v309, %v307
    %v332 = vpack.c.b16 %v310, %v308
    %v333 = vpack.c.b16 %v313, %v311
    %v334 = vpack.c.b16 %v314, %v312
    %v335 = vpack.c.b16 %v317, %v315
    %v336 = vpack.c.b16 %v318, %v316
    %v337 = vpack.c.b16 %v321, %v319
    %v338 = vpack.c.b16 %v322, %v320
    %355 = vmatpush.bf16.msra.mxu0 %v337
    %356 = vmatpush.bf16.msra.mxu0 %v335
    %357 = vmatpush.bf16.msra.mxu0 %v333
    %358 = vmatpush.bf16.msra.mxu0 %v331
    %359 = vmatpush.bf16.msra.mxu0 %v329
    %360 = vmatpush.bf16.msra.mxu0 %v327
    %361 = vmatpush.bf16.msra.mxu0 %v325
    %362 = vmatpush.bf16.msra.mxu0 %v323
    %363 = vmatmul.bf16.gmra.mxu0 %v99
    %v364 = vpop.f32.mrf.mxu0
    %v365 = vadd.f32 %v229, %v364
    %v366 = vpop.f32.mrf.mxu0
    %v367 = vadd.f32 %v231, %v366
    %368 = vmatmul.bf16.gmra.mxu0 %v100
    %v369 = vpop.f32.mrf.mxu0
    %v370 = vadd.f32 %v234, %v369
    %v371 = vpop.f32.mrf.mxu0
    %v372 = vadd.f32 %v236, %v371
    %373 = vmatmul.bf16.gmra.mxu0 %v101
    %v374 = vpop.f32.mrf.mxu0
    %v375 = vadd.f32 %v239, %v374
    %v376 = vpop.f32.mrf.mxu0
    %v377 = vadd.f32 %v241, %v376
    %378 = vmatmul.bf16.gmra.mxu0 %v102
    %v379 = vpop.f32.mrf.mxu0
    %v380 = vadd.f32 %v244, %v379
    %v381 = vpop.f32.mrf.mxu0
    %382 = vdwg.mxu0
    %383 = vmatpush.bf16.msra.mxu0 %v338
    %384 = vmatpush.bf16.msra.mxu0 %v336
    %385 = vmatpush.bf16.msra.mxu0 %v334
    %386 = vmatpush.bf16.msra.mxu0 %v332
    %387 = vmatpush.bf16.msra.mxu0 %v330
    %388 = vmatpush.bf16.msra.mxu0 %v328
    %389 = vmatpush.bf16.msra.mxu0 %v326
    %390 = vmatpush.bf16.msra.mxu0 %v324
    %391 = vmatmul.bf16.gmra.mxu0 %v99
    %v392 = vpop.f32.mrf.mxu0
    %v393 = vadd.f32 %v257, %v392
    %v394 = vpop.f32.mrf.mxu0
    %v395 = vadd.f32 %v259, %v394
    %396 = vmatmul.bf16.gmra.mxu0 %v100
    %v397 = vpop.f32.mrf.mxu0
    %v398 = vadd.f32 %v262, %v397
    %v399 = vpop.f32.mrf.mxu0
    %v400 = vadd.f32 %v264, %v399
    %401 = vmatmul.bf16.gmra.mxu0 %v101
    %v402 = vpop.f32.mrf.mxu0
    %v403 = vadd.f32 %v267, %v402
    %v404 = vpop.f32.mrf.mxu0
    %v405 = vadd.f32 %v269, %v404
    %406 = vmatmul.bf16.gmra.mxu0 %v102
    %v407 = vpop.f32.mrf.mxu0
    %v408 = vadd.f32 %v272, %v407
    %v409 = vpop.f32.mrf.mxu0
    %410 = vdwg.mxu0
    %v412 = vperm.slane %v98, 0
    %v413 = vperm.slane %v98, 1
    %v416 = vadd.f32 %v365, %v412
    %v417 = vadd.f32 %v393, %v413
    %v418 = vadd.f32 %v367, %v412
    %v419 = vadd.f32 %v395, %v413
    %v420 = vadd.f32 %v370, %v412
    %v421 = vadd.f32 %v398, %v413
    %v422 = vadd.f32 %v372, %v412
    %v423 = vadd.f32 %v400, %v413
    %v424 = vadd.f32 %v375, %v412
    %v425 = vadd.f32 %v403, %v413
    %v426 = vadd.f32 %v377, %v412
    %v427 = vadd.f32 %v405, %v413
    %v428 = vadd.f32 %v380, %v412
    %v429 = vadd.f32 %v408, %v413
    %v430 = vxor.u32 %v417, 2147483648
    %v431 = vxor.u32 %v419, 2147483648
    %v432 = vxor.u32 %v421, 2147483648
    %v433 = vxor.u32 %v423, 2147483648
    %v434 = vxor.u32 %v425, 2147483648
    %v435 = vxor.u32 %v427, 2147483648
    %v436 = vxor.u32 %v429, 2147483648
    %v437 = vmul.f32 %v430, 1.442695
    %v438 = vpow.pop %v437
    %v439 = vmul.f32 %v431, 1.442695
    %v440 = vpow.pop %v439
    %v441 = vmul.f32 %v432, 1.442695
    %v442 = vpow.pop %v441
    %v443 = vmul.f32 %v433, 1.442695
    %v444 = vpow.pop %v443
    %v445 = vmul.f32 %v434, 1.442695
    %v446 = vpow.pop %v445
    %v447 = vmul.f32 %v435, 1.442695
    %v448 = vpow.pop %v447
    %v449 = vmul.f32 %v436, 1.442695
    %v450 = vpow.pop %v449
    %v451 = vadd.f32 %v438, 1.0
    %v452 = vadd.f32 %v440, 1.0
    %v453 = vadd.f32 %v442, 1.0
    %v454 = vadd.f32 %v444, 1.0
    %v455 = vadd.f32 %v446, 1.0
    %v456 = vadd.f32 %v448, 1.0
    %v457 = vadd.f32 %v450, 1.0
    %v458 = vrcp.pop %v451
    %v459 = vmul.f32 %v451, %v458
    %v460 = vsub.f32 1.0, %v459
    %v461 = vmul.f32 %v458, %v460
    %v462 = vadd.f32 %v458, %v461
    %vm463 = vweird.f32 %v451
    %vm464 = vweird.f32 %v458
    %vm465 = vmor %vm463, %vm464
    %v466 = vsel %vm465, %v458, %v462
    %v467 = vand.u32 2147483647, %v451
    %vm468 = vcmp.eq.f32.partialorder %v467, 8.507059e+37
    %v469 = vand.u32 %v451, 2147483648
    %v470 = vor.u32 1.1754944e-38, %v469
    %v471 = vsel %vm468, %v470, %v466
    %v472 = vmul.f32 1.0, %v471
    %v473 = vrcp.pop %v452
    %v474 = vmul.f32 %v452, %v473
    %v475 = vsub.f32 1.0, %v474
    %v476 = vmul.f32 %v473, %v475
    %v477 = vadd.f32 %v473, %v476
    %vm478 = vweird.f32 %v452
    %vm479 = vweird.f32 %v473
    %vm480 = vmor %vm478, %vm479
    %v481 = vsel %vm480, %v473, %v477
    %v482 = vand.u32 2147483647, %v452
    %vm483 = vcmp.eq.f32.partialorder %v482, 8.507059e+37
    %v484 = vand.u32 %v452, 2147483648
    %v485 = vor.u32 1.1754944e-38, %v484
    %v486 = vsel %vm483, %v485, %v481
    %v487 = vmul.f32 1.0, %v486
    %v488 = vrcp.pop %v453
    %v489 = vmul.f32 %v453, %v488
    %v490 = vsub.f32 1.0, %v489
    %v491 = vmul.f32 %v488, %v490
    %v492 = vadd.f32 %v488, %v491
    %vm493 = vweird.f32 %v453
    %vm494 = vweird.f32 %v488
    %vm495 = vmor %vm493, %vm494
    %v496 = vsel %vm495, %v488, %v492
    %v497 = vand.u32 2147483647, %v453
    %vm498 = vcmp.eq.f32.partialorder %v497, 8.507059e+37
    %v499 = vand.u32 %v453, 2147483648
    %v500 = vor.u32 1.1754944e-38, %v499
    %v501 = vsel %vm498, %v500, %v496
    %v502 = vmul.f32 1.0, %v501
    %v503 = vrcp.pop %v454
    %v504 = vmul.f32 %v454, %v503
    %v505 = vsub.f32 1.0, %v504
    %v506 = vmul.f32 %v503, %v505
    %v507 = vadd.f32 %v503, %v506
    %vm508 = vweird.f32 %v454
    %vm509 = vweird.f32 %v503
    %vm510 = vmor %vm508, %vm509
    %v511 = vsel %vm510, %v503, %v507
    %v512 = vand.u32 2147483647, %v454
    %vm513 = vcmp.eq.f32.partialorder %v512, 8.507059e+37
    %v514 = vand.u32 %v454, 2147483648
    %v515 = vor.u32 1.1754944e-38, %v514
    %v516 = vsel %vm513, %v515, %v511
    %v517 = vmul.f32 1.0, %v516
    %v518 = vrcp.pop %v455
    %v519 = vmul.f32 %v455, %v518
    %v520 = vsub.f32 1.0, %v519
    %v521 = vmul.f32 %v518, %v520
    %v522 = vadd.f32 %v518, %v521
    %vm523 = vweird.f32 %v455
    %vm524 = vweird.f32 %v518
    %vm525 = vmor %vm523, %vm524
    %v526 = vsel %vm525, %v518, %v522
    %v527 = vand.u32 2147483647, %v455
    %vm528 = vcmp.eq.f32.partialorder %v527, 8.507059e+37
    %v529 = vand.u32 %v455, 2147483648
    %v530 = vor.u32 1.1754944e-38, %v529
    %v531 = vsel %vm528, %v530, %v526
    %v532 = vmul.f32 1.0, %v531
    %v533 = vrcp.pop %v456
    %v534 = vmul.f32 %v456, %v533
    %v535 = vsub.f32 1.0, %v534
    %v536 = vmul.f32 %v533, %v535
    %v537 = vadd.f32 %v533, %v536
    %vm538 = vweird.f32 %v456
    %vm539 = vweird.f32 %v533
    %vm540 = vmor %vm538, %vm539
    %v541 = vsel %vm540, %v533, %v537
    %v542 = vand.u32 2147483647, %v456
    %vm543 = vcmp.eq.f32.partialorder %v542, 8.507059e+37
    %v544 = vand.u32 %v456, 2147483648
    %v545 = vor.u32 1.1754944e-38, %v544
    %v546 = vsel %vm543, %v545, %v541
    %v547 = vmul.f32 1.0, %v546
    %v548 = vrcp.pop %v457
    %v549 = vmul.f32 %v457, %v548
    %v550 = vsub.f32 1.0, %v549
    %v551 = vmul.f32 %v548, %v550
    %v552 = vadd.f32 %v548, %v551
    %vm553 = vweird.f32 %v457
    %vm554 = vweird.f32 %v548
    %vm555 = vmor %vm553, %vm554
    %v556 = vsel %vm555, %v548, %v552
    %v557 = vand.u32 2147483647, %v457
    %vm558 = vcmp.eq.f32.partialorder %v557, 8.507059e+37
    %v559 = vand.u32 %v457, 2147483648
    %v560 = vor.u32 1.1754944e-38, %v559
    %v561 = vsel %vm558, %v560, %v556
    %v562 = vmul.f32 1.0, %v561
    %v563 = vmul.f32 %v416, %v472
    %v564 = vmul.f32 %v418, %v487
    %v565 = vmul.f32 %v420, %v502
    %v566 = vmul.f32 %v422, %v517
    %v567 = vmul.f32 %v424, %v532
    %v568 = vmul.f32 %v426, %v547
    %v569 = vmul.f32 %v428, %v562
    %v570 = vld [vmem:[#allocation7 + $0x1] ss:$0 sm:$0xff]
    %v571 = vpack.c.bf16 %v564, %v563
    %v572 = vpack.c.bf16 %v566, %v565
    %v573 = vpack.c.bf16 %v568, %v567
    %v574 = vpack.c.bf16 %v569, %v569
    %v575 = vld [vmem:[#allocation2] sm:$0xf]
    %v576 = vld [vmem:[#allocation2 + $0x4] sm:$0xf]
    %v577 = vld [vmem:[#allocation2 + $0x8] sm:$0xf]
    %v578 = vld [vmem:[#allocation2 + $0xc] sm:$0xf]
    %v579 = vld [vmem:[#allocation2 + $0x10] sm:$0xf]
    %v580 = vld [vmem:[#allocation2 + $0x14] sm:$0xf]
    %v581 = vld [vmem:[#allocation2 + $0x18] sm:$0xf]
    %v582 = vld [vmem:[#allocation2 + $0x1c] sm:$0xf]
    %v583 = vld [vmem:[#allocation2 + $0x20] sm:$0xf]
    %v584 = vld [vmem:[#allocation2 + $0x24] sm:$0xf]
    %v585 = vld [vmem:[#allocation2 + $0x28] sm:$0xf]
    %v586 = vld [vmem:[#allocation2 + $0x2c] sm:$0xf]
    %v587 = vld [vmem:[#allocation2 + $0x30] sm:$0xf]
    %v588 = vld [vmem:[#allocation2 + $0x34] sm:$0xf]
    %v589 = vld [vmem:[#allocation2 + $0x38] sm:$0xf]
    %v590 = vld [vmem:[#allocation2 + $0x3c] sm:$0xf]
    %v607 = vunpack.c.l.b16 %v575
    %v608 = vunpack.c.l.b16 %v576
    %v609 = vunpack.c.l.b16 %v577
    %v610 = vunpack.c.l.b16 %v578
    %v611 = vunpack.c.l.b16 %v579
    %v612 = vunpack.c.l.b16 %v580
    %v613 = vunpack.c.l.b16 %v581
    %v614 = vunpack.c.l.b16 %v582
    %v615 = vunpack.c.l.b16 %v583
    %v616 = vunpack.c.l.b16 %v584
    %v617 = vunpack.c.l.b16 %v585
    %v618 = vunpack.c.l.b16 %v586
    %v619 = vunpack.c.l.b16 %v587
    %v620 = vunpack.c.l.b16 %v588
    %v621 = vunpack.c.l.b16 %v589
    %v622 = vunpack.c.l.b16 %v590
    %v623 = vpack.c.b16 %v608, %v607
    %v624 = vpack.c.b16 %v610, %v609
    %v625 = vpack.c.b16 %v612, %v611
    %v626 = vpack.c.b16 %v614, %v613
    %v627 = vpack.c.b16 %v616, %v615
    %v628 = vpack.c.b16 %v618, %v617
    %v629 = vpack.c.b16 %v620, %v619
    %v630 = vpack.c.b16 %v622, %v621
    %639 = vmatpush.bf16.msra.mxu0 %v630
    %640 = vmatpush.bf16.msra.mxu0 %v629
    %641 = vmatpush.bf16.msra.mxu0 %v628
    %642 = vmatpush.bf16.msra.mxu0 %v627
    %643 = vmatpush.bf16.msra.mxu0 %v626
    %644 = vmatpush.bf16.msra.mxu0 %v625
    %645 = vmatpush.bf16.msra.mxu0 %v624
    %646 = vmatpush.bf16.msra.mxu0 %v623
    %647 = vmatmul.bf16.gmra.mxu0 %v571
    %v648 = vpop.f32.mrf.mxu0
    %v649 = vadd.f32 %v570, %v648
    %v650 = vpop.f32.mrf.mxu0
    %v651 = vadd.f32 %v570, %v650
    %652 = vmatmul.bf16.gmra.mxu0 %v572
    %v653 = vpop.f32.mrf.mxu0
    %v654 = vadd.f32 %v570, %v653
    %v655 = vpop.f32.mrf.mxu0
    %v656 = vadd.f32 %v570, %v655
    %657 = vmatmul.bf16.gmra.mxu0 %v573
    %v658 = vpop.f32.mrf.mxu0
    %v659 = vadd.f32 %v570, %v658
    %v660 = vpop.f32.mrf.mxu0
    %v661 = vadd.f32 %v570, %v660
    %662 = vmatmul.bf16.gmra.mxu0 %v574
    %v663 = vpop.f32.mrf.mxu0
    %v664 = vadd.f32 %v570, %v663
    %v665 = vpop.f32.mrf.mxu0
    %666 = vdwg.mxu0
    %v667 = vmax.f32 %v649, 0.0
    %v668 = vmax.f32 %v651, 0.0
    %v669 = vmax.f32 %v654, 0.0
    %v670 = vmax.f32 %v656, 0.0
    %v671 = vmax.f32 %v659, 0.0
    %v672 = vmax.f32 %v661, 0.0
    %v673 = vmax.f32 %v664, 0.0
    %v674 = vld [vmem:[#allocation7 + $0x2] ss:$0 sm:$0xff]
    %v675 = vpack.c.bf16 %v668, %v667
    %v676 = vpack.c.bf16 %v670, %v669
    %v677 = vpack.c.bf16 %v672, %v671
    %v678 = vld [vmem:[#allocation2 + $0x40] sm:$0xf]
    %v679 = vld [vmem:[#allocation2 + $0x44] sm:$0xf]
    %v680 = vld [vmem:[#allocation2 + $0x48] sm:$0xf]
    %v681 = vld [vmem:[#allocation2 + $0x4c] sm:$0xf]
    %v682 = vld [vmem:[#allocation2 + $0x50] sm:$0xf]
    %v683 = vld [vmem:[#allocation2 + $0x54] sm:$0xf]
    %v684 = vld [vmem:[#allocation2 + $0x58] sm:$0xf]
    %v685 = vld [vmem:[#allocation2 + $0x5c] sm:$0xf]
    %v686 = vld [vmem:[#allocation2 + $0x60] sm:$0xf]
    %v687 = vld [vmem:[#allocation2 + $0x64] sm:$0xf]
    %v688 = vld [vmem:[#allocation2 + $0x68] sm:$0xf]
    %v689 = vld [vmem:[#allocation2 + $0x6c] sm:$0xf]
    %v690 = vld [vmem:[#allocation2 + $0x70] sm:$0xf]
    %v691 = vld [vmem:[#allocation2 + $0x74] sm:$0xf]
    %v692 = vld [vmem:[#allocation2 + $0x78] sm:$0xf]
    %v693 = vld [vmem:[#allocation2 + $0x7c] sm:$0xf]
    %v694 = vpack.c.bf16 %v669, %v668
    %v695 = vpack.c.bf16 %v671, %v670
    %v696 = vpack.c.bf16 %v673, %v672
    %v697 = vld [vmem:[#allocation2 + $0x80] sm:$0xf]
    %v698 = vld [vmem:[#allocation2 + $0x84] sm:$0xf]
    %v699 = vld [vmem:[#allocation2 + $0x88] sm:$0xf]
    %v700 = vld [vmem:[#allocation2 + $0x8c] sm:$0xf]
    %v701 = vld [vmem:[#allocation2 + $0x90] sm:$0xf]
    %v702 = vld [vmem:[#allocation2 + $0x94] sm:$0xf]
    %v703 = vld [vmem:[#allocation2 + $0x98] sm:$0xf]
    %v704 = vld [vmem:[#allocation2 + $0x9c] sm:$0xf]
    %v705 = vld [vmem:[#allocation2 + $0xa0] sm:$0xf]
    %v706 = vld [vmem:[#allocation2 + $0xa4] sm:$0xf]
    %v707 = vld [vmem:[#allocation2 + $0xa8] sm:$0xf]
    %v708 = vld [vmem:[#allocation2 + $0xac] sm:$0xf]
    %v709 = vld [vmem:[#allocation2 + $0xb0] sm:$0xf]
    %v710 = vld [vmem:[#allocation2 + $0xb4] sm:$0xf]
    %v711 = vld [vmem:[#allocation2 + $0xb8] sm:$0xf]
    %v712 = vld [vmem:[#allocation2 + $0xbc] sm:$0xf]
    %v729 = vunpack.c.l.b16 %v697
    %v730 = vunpack.c.l.b16 %v698
    %v731 = vunpack.c.l.b16 %v699
    %v732 = vunpack.c.l.b16 %v700
    %v733 = vunpack.c.l.b16 %v701
    %v734 = vunpack.c.l.b16 %v702
    %v735 = vunpack.c.l.b16 %v703
    %v736 = vunpack.c.l.b16 %v704
    %v737 = vunpack.c.l.b16 %v705
    %v738 = vunpack.c.l.b16 %v706
    %v739 = vunpack.c.l.b16 %v707
    %v740 = vunpack.c.l.b16 %v708
    %v741 = vunpack.c.l.b16 %v709
    %v742 = vunpack.c.l.b16 %v710
    %v743 = vunpack.c.l.b16 %v711
    %v744 = vunpack.c.l.b16 %v712
    %v745 = vpack.c.b16 %v730, %v729
    %v746 = vpack.c.b16 %v732, %v731
    %v747 = vpack.c.b16 %v734, %v733
    %v748 = vpack.c.b16 %v736, %v735
    %v749 = vpack.c.b16 %v738, %v737
    %v750 = vpack.c.b16 %v740, %v739
    %v751 = vpack.c.b16 %v742, %v741
    %v752 = vpack.c.b16 %v744, %v743
    %761 = vmatpush.bf16.msra.mxu0 %v752
    %762 = vmatpush.bf16.msra.mxu0 %v751
    %763 = vmatpush.bf16.msra.mxu0 %v750
    %764 = vmatpush.bf16.msra.mxu0 %v749
    %765 = vmatpush.bf16.msra.mxu0 %v748
    %766 = vmatpush.bf16.msra.mxu0 %v747
    %767 = vmatpush.bf16.msra.mxu0 %v746
    %768 = vmatpush.bf16.msra.mxu0 %v745
    %769 = vmatmul.bf16.gmra.mxu0 %v694
    %v770 = vpop.f32.mrf.mxu0
    %v771 = vadd.f32 0.0, %v770
    %v772 = vpop.f32.mrf.mxu0
    %v773 = vadd.f32 0.0, %v772
    %774 = vmatmul.bf16.gmra.mxu0 %v695
    %v775 = vpop.f32.mrf.mxu0
    %v776 = vadd.f32 0.0, %v775
    %v777 = vpop.f32.mrf.mxu0
    %v778 = vadd.f32 0.0, %v777
    %779 = vmatmul.bf16.gmra.mxu0 %v696
    %v780 = vpop.f32.mrf.mxu0
    %v781 = vadd.f32 0.0, %v780
    %v782 = vpop.f32.mrf.mxu0
    %v783 = vadd.f32 0.0, %v782
    %784 = vdwg.mxu0
    %v801 = vunpack.c.l.b16 %v678
    %v802 = vunpack.c.l.b16 %v679
    %v803 = vunpack.c.l.b16 %v680
    %v804 = vunpack.c.l.b16 %v681
    %v805 = vunpack.c.l.b16 %v682
    %v806 = vunpack.c.l.b16 %v683
    %v807 = vunpack.c.l.b16 %v684
    %v808 = vunpack.c.l.b16 %v685
    %v809 = vunpack.c.l.b16 %v686
    %v810 = vunpack.c.l.b16 %v687
    %v811 = vunpack.c.l.b16 %v688
    %v812 = vunpack.c.l.b16 %v689
    %v813 = vunpack.c.l.b16 %v690
    %v814 = vunpack.c.l.b16 %v691
    %v815 = vunpack.c.l.b16 %v692
    %v816 = vunpack.c.l.b16 %v693
    %v817 = vpack.c.b16 %v802, %v801
    %v818 = vpack.c.b16 %v804, %v803
    %v819 = vpack.c.b16 %v806, %v805
    %v820 = vpack.c.b16 %v808, %v807
    %v821 = vpack.c.b16 %v810, %v809
    %v822 = vpack.c.b16 %v812, %v811
    %v823 = vpack.c.b16 %v814, %v813
    %v824 = vpack.c.b16 %v816, %v815
    %833 = vmatpush.bf16.msra.mxu0 %v824
    %834 = vmatpush.bf16.msra.mxu0 %v823
    %835 = vmatpush.bf16.msra.mxu0 %v822
    %836 = vmatpush.bf16.msra.mxu0 %v821
    %837 = vmatpush.bf16.msra.mxu0 %v820
    %838 = vmatpush.bf16.msra.mxu0 %v819
    %839 = vmatpush.bf16.msra.mxu0 %v818
    %840 = vmatpush.bf16.msra.mxu0 %v817
    %841 = vmatmul.bf16.gmra.mxu0 %v675
    %v842 = vpop.f32.mrf.mxu0
    %v843 = vadd.f32 %v771, %v842
    %v844 = vpop.f32.mrf.mxu0
    %v845 = vadd.f32 %v773, %v844
    %846 = vmatmul.bf16.gmra.mxu0 %v676
    %v847 = vpop.f32.mrf.mxu0
    %v848 = vadd.f32 %v776, %v847
    %v849 = vpop.f32.mrf.mxu0
    %v850 = vadd.f32 %v778, %v849
    %851 = vmatmul.bf16.gmra.mxu0 %v677
    %v852 = vpop.f32.mrf.mxu0
    %v853 = vadd.f32 %v781, %v852
    %v854 = vpop.f32.mrf.mxu0
    %v855 = vadd.f32 %v783, %v854
    %856 = vdwg.mxu0
    %v857 = vadd.f32 %v843, %v674
    %v858 = vadd.f32 %v845, %v674
    %v859 = vadd.f32 %v848, %v674
    %v860 = vadd.f32 %v850, %v674
    %v861 = vadd.f32 %v853, %v674
    %v862 = vadd.f32 %v855, %v674
    %v863 = vmax.f32 %v857, 0.0
    %v864 = vmax.f32 %v858, 0.0
    %v865 = vmax.f32 %v859, 0.0
    %v866 = vmax.f32 %v860, 0.0
    %v867 = vmax.f32 %v861, 0.0
    %v868 = vmax.f32 %v862, 0.0
    %v869 = vld [vmem:[#allocation7 + $0x3] ss:$0 sm:$0xff]
    %v870 = vld [vmem:[#allocation7 + $0x4] ss:$0 sm:$0xff]
    %871 = vadd.xlane.f32.xlu0 %v863
    %v872 = vpop.xlane.xlu0 %871
    %873 = vadd.xlane.f32.xlu0 %v864
    %v874 = vpop.xlane.xlu0 %873
    %875 = vadd.xlane.f32.xlu0 %v865
    %v876 = vpop.xlane.xlu0 %875
    %877 = vadd.xlane.f32.xlu0 %v866
    %v878 = vpop.xlane.xlu0 %877
    %879 = vadd.xlane.f32.xlu0 %v867
    %v880 = vpop.xlane.xlu0 %879
    %881 = vadd.xlane.f32.xlu0 %v868
    %v882 = vpop.xlane.xlu0 %881
    %v883 = vrcp.pop 128.0
    %v884 = vmul.f32 128.0, %v883
    %v885 = vsub.f32 1.0, %v884
    %v886 = vmul.f32 %v883, %v885
    %v887 = vadd.f32 %v883, %v886
    %vm888 = vweird.f32 %v883
    %v889 = vsel %vm888, %v883, %v887
    %v890 = vmul.f32 %v872, %v889
    %v891 = vmul.f32 %v874, %v889
    %v892 = vmul.f32 %v876, %v889
    %v893 = vmul.f32 %v878, %v889
    %v894 = vmul.f32 %v880, %v889
    %v895 = vmul.f32 %v882, %v889
    %v896 = vsub.f32 %v863, %v890
    %v897 = vsub.f32 %v864, %v891
    %v898 = vsub.f32 %v865, %v892
    %v899 = vsub.f32 %v866, %v893
    %v900 = vsub.f32 %v867, %v894
    %v901 = vsub.f32 %v868, %v895
    %v902 = vmul.f32 %v896, %v896
    %v903 = vmul.f32 %v897, %v897
    %v904 = vmul.f32 %v898, %v898
    %v905 = vmul.f32 %v899, %v899
    %v906 = vmul.f32 %v900, %v900
    %v907 = vmul.f32 %v901, %v901
    %908 = vadd.xlane.f32.xlu0 %v902
    %v909 = vpop.xlane.xlu0 %908
    %910 = vadd.xlane.f32.xlu0 %v903
    %v911 = vpop.xlane.xlu0 %910
    %912 = vadd.xlane.f32.xlu0 %v904
    %v913 = vpop.xlane.xlu0 %912
    %914 = vadd.xlane.f32.xlu0 %v905
    %v915 = vpop.xlane.xlu0 %914
    %916 = vadd.xlane.f32.xlu0 %v906
    %v917 = vpop.xlane.xlu0 %916
    %918 = vadd.xlane.f32.xlu0 %v907
    %v919 = vpop.xlane.xlu0 %918
    %v920 = vmul.f32 %v909, %v889
    %v921 = vmul.f32 %v911, %v889
    %v922 = vmul.f32 %v913, %v889
    %v923 = vmul.f32 %v915, %v889
    %v924 = vmul.f32 %v917, %v889
    %v925 = vmul.f32 %v919, %v889
    %v926 = vadd.f32 %v920, 1e-05
    %v927 = vadd.f32 %v921, 1e-05
    %v928 = vadd.f32 %v922, 1e-05
    %v929 = vadd.f32 %v923, 1e-05
    %v930 = vadd.f32 %v924, 1e-05
    %v931 = vadd.f32 %v925, 1e-05
    %v932 = vrsqrt.pop %v926
    %v933 = vmul.f32 %v932, %v926
    %v934 = vmul.f32 %v933, %v932
    %v935 = vmul.f32 0.5, %v934
    %v936 = vsub.f32 1.5, %v935
    %v937 = vmul.f32 %v932, %v936
    %vm938 = vweird.f32 %v926
    %vm939 = vweird.f32 %v932
    %vm940 = vmor %vm938, %vm939
    %v941 = vsel %vm940, %v932, %v937
    %v942 = vrsqrt.pop %v927
    %v943 = vmul.f32 %v942, %v927
    %v944 = vmul.f32 %v943, %v942
    %v945 = vmul.f32 0.5, %v944
    %v946 = vsub.f32 1.5, %v945
    %v947 = vmul.f32 %v942, %v946
    %vm948 = vweird.f32 %v927
    %vm949 = vweird.f32 %v942
    %vm950 = vmor %vm948, %vm949
    %v951 = vsel %vm950, %v942, %v947
    %v952 = vrsqrt.pop %v928
    %v953 = vmul.f32 %v952, %v928
    %v954 = vmul.f32 %v953, %v952
    %v955 = vmul.f32 0.5, %v954
    %v956 = vsub.f32 1.5, %v955
    %v957 = vmul.f32 %v952, %v956
    %vm958 = vweird.f32 %v928
    %vm959 = vweird.f32 %v952
    %vm960 = vmor %vm958, %vm959
    %v961 = vsel %vm960, %v952, %v957
    %v962 = vrsqrt.pop %v929
    %v963 = vmul.f32 %v962, %v929
    %v964 = vmul.f32 %v963, %v962
    %v965 = vmul.f32 0.5, %v964
    %v966 = vsub.f32 1.5, %v965
    %v967 = vmul.f32 %v962, %v966
    %vm968 = vweird.f32 %v929
    %vm969 = vweird.f32 %v962
    %vm970 = vmor %vm968, %vm969
    %v971 = vsel %vm970, %v962, %v967
    %v972 = vrsqrt.pop %v930
    %v973 = vmul.f32 %v972, %v930
    %v974 = vmul.f32 %v973, %v972
    %v975 = vmul.f32 0.5, %v974
    %v976 = vsub.f32 1.5, %v975
    %v977 = vmul.f32 %v972, %v976
    %vm978 = vweird.f32 %v930
    %vm979 = vweird.f32 %v972
    %vm980 = vmor %vm978, %vm979
    %v981 = vsel %vm980, %v972, %v977
    %v982 = vrsqrt.pop %v931
    %v983 = vmul.f32 %v982, %v931
    %v984 = vmul.f32 %v983, %v982
    %v985 = vmul.f32 0.5, %v984
    %v986 = vsub.f32 1.5, %v985
    %v987 = vmul.f32 %v982, %v986
    %vm988 = vweird.f32 %v931
    %vm989 = vweird.f32 %v982
    %vm990 = vmor %vm988, %vm989
    %v991 = vsel %vm990, %v982, %v987
    %v992 = vmul.f32 %v896, %v941
    %v993 = vmul.f32 %v897, %v951
    %v994 = vmul.f32 %v898, %v961
    %v995 = vmul.f32 %v899, %v971
    %v996 = vmul.f32 %v900, %v981
    %v997 = vmul.f32 %v901, %v991
    %v998 = vmul.f32 %v992, %v869
    %v999 = vmul.f32 %v993, %v869
    %v1000 = vmul.f32 %v994, %v869
    %v1001 = vmul.f32 %v995, %v869
    %v1002 = vmul.f32 %v996, %v869
    %v1003 = vmul.f32 %v997, %v869
    %v1004 = vadd.f32 %v998, %v870
    %v1005 = vadd.f32 %v999, %v870
    %v1006 = vadd.f32 %v1000, %v870
    %v1007 = vadd.f32 %v1001, %v870
    %v1008 = vadd.f32 %v1002, %v870
    %v1009 = vadd.f32 %v1003, %v870
    %s1010 = scalar_lea.vmem [#allocation7], 5
    %v1011 = vld [vmem:[%s1010] ss:$8 sm:$0xf]
    %v1012 = vpack.c.bf16 %v1005, %v1004
    %v1013 = vpack.c.bf16 %v1007, %v1006
    %v1014 = vpack.c.bf16 %v1008, %v1008
    %v1015 = vld [vmem:[#allocation6] sm:$0xff]
    %v1016 = vld [vmem:[#allocation6 + $0x8] sm:$0xff]
    %v1017 = vld [vmem:[#allocation6 + $0x10] sm:$0xff]
    %v1018 = vld [vmem:[#allocation6 + $0x18] sm:$0xff]
    %v1019 = vld [vmem:[#allocation6 + $0x20] sm:$0xff]
    %v1020 = vld [vmem:[#allocation6 + $0x28] sm:$0xff]
    %v1021 = vld [vmem:[#allocation6 + $0x30] sm:$0xff]
    %v1022 = vld [vmem:[#allocation6 + $0x38] sm:$0xff]
    %v1023 = vld [vmem:[#allocation6 + $0x40] sm:$0xff]
    %v1024 = vld [vmem:[#allocation6 + $0x48] sm:$0xff]
    %v1025 = vld [vmem:[#allocation6 + $0x50] sm:$0xff]
    %v1026 = vld [vmem:[#allocation6 + $0x58] sm:$0xff]
    %v1027 = vld [vmem:[#allocation6 + $0x60] sm:$0xff]
    %v1028 = vld [vmem:[#allocation6 + $0x68] sm:$0xff]
    %v1029 = vld [vmem:[#allocation6 + $0x70] sm:$0xff]
    %v1030 = vld [vmem:[#allocation6 + $0x78] sm:$0xff]
    %v1031 = vld [vmem:[#allocation6 + $0x80] sm:$0xff]
    %v1032 = vld [vmem:[#allocation6 + $0x88] sm:$0xff]
    %v1033 = vld [vmem:[#allocation6 + $0x90] sm:$0xff]
    %v1034 = vld [vmem:[#allocation6 + $0x98] sm:$0xff]
    %v1035 = vld [vmem:[#allocation6 + $0xa0] sm:$0xff]
    %v1036 = vld [vmem:[#allocation6 + $0xa8] sm:$0xff]
    %v1037 = vld [vmem:[#allocation6 + $0xb0] sm:$0xff]
    %v1038 = vld [vmem:[#allocation6 + $0xb8] sm:$0xff]
    %v1039 = vld [vmem:[#allocation6 + $0xc0] sm:$0xff]
    %v1040 = vld [vmem:[#allocation6 + $0xc8] sm:$0xff]
    %v1041 = vld [vmem:[#allocation6 + $0xd0] sm:$0xff]
    %v1042 = vld [vmem:[#allocation6 + $0xd8] sm:$0xff]
    %v1043 = vld [vmem:[#allocation6 + $0xe0] sm:$0xff]
    %v1044 = vld [vmem:[#allocation6 + $0xe8] sm:$0xff]
    %v1045 = vld [vmem:[#allocation6 + $0xf0] sm:$0xff]
    %v1046 = vld [vmem:[#allocation6 + $0xf8] sm:$0xff]
    %v1047 = vpack.c.bf16 %v1006, %v1005
    %v1048 = vpack.c.bf16 %v1008, %v1007
    %v1049 = vpack.c.bf16 %v1009, %v1009
    %v1050 = vld [vmem:[#allocation6 + $0x100] sm:$0xff]
    %v1051 = vld [vmem:[#allocation6 + $0x108] sm:$0xff]
    %v1052 = vld [vmem:[#allocation6 + $0x110] sm:$0xff]
    %v1053 = vld [vmem:[#allocation6 + $0x118] sm:$0xff]
    %v1054 = vld [vmem:[#allocation6 + $0x120] sm:$0xff]
    %v1055 = vld [vmem:[#allocation6 + $0x128] sm:$0xff]
    %v1056 = vld [vmem:[#allocation6 + $0x130] sm:$0xff]
    %v1057 = vld [vmem:[#allocation6 + $0x138] sm:$0xff]
    %v1058 = vld [vmem:[#allocation6 + $0x140] sm:$0xff]
    %v1059 = vld [vmem:[#allocation6 + $0x148] sm:$0xff]
    %v1060 = vld [vmem:[#allocation6 + $0x150] sm:$0xff]
    %v1061 = vld [vmem:[#allocation6 + $0x158] sm:$0xff]
    %v1062 = vld [vmem:[#allocation6 + $0x160] sm:$0xff]
    %v1063 = vld [vmem:[#allocation6 + $0x168] sm:$0xff]
    %v1064 = vld [vmem:[#allocation6 + $0x170] sm:$0xff]
    %v1065 = vld [vmem:[#allocation6 + $0x178] sm:$0xff]
    %v1066 = vld [vmem:[#allocation6 + $0x180] sm:$0xff]
    %v1067 = vld [vmem:[#allocation6 + $0x188] sm:$0xff]
    %v1068 = vld [vmem:[#allocation6 + $0x190] sm:$0xff]
    %v1069 = vld [vmem:[#allocation6 + $0x198] sm:$0xff]
    %v1070 = vld [vmem:[#allocation6 + $0x1a0] sm:$0xff]
    %v1071 = vld [vmem:[#allocation6 + $0x1a8] sm:$0xff]
    %v1072 = vld [vmem:[#allocation6 + $0x1b0] sm:$0xff]
    %v1073 = vld [vmem:[#allocation6 + $0x1b8] sm:$0xff]
    %v1074 = vld [vmem:[#allocation6 + $0x1c0] sm:$0xff]
    %v1075 = vld [vmem:[#allocation6 + $0x1c8] sm:$0xff]
    %v1076 = vld [vmem:[#allocation6 + $0x1d0] sm:$0xff]
    %v1077 = vld [vmem:[#allocation6 + $0x1d8] sm:$0xff]
    %v1078 = vld [vmem:[#allocation6 + $0x1e0] sm:$0xff]
    %v1079 = vld [vmem:[#allocation6 + $0x1e8] sm:$0xff]
    %v1080 = vld [vmem:[#allocation6 + $0x1f0] sm:$0xff]
    %v1081 = vld [vmem:[#allocation6 + $0x1f8] sm:$0xff]
    %v1114 = vunpack.c.l.b16 %v1050
    %v1115 = vunpack.c.h.b16 %v1050
    %v1116 = vunpack.c.l.b16 %v1051
    %v1117 = vunpack.c.h.b16 %v1051
    %v1118 = vunpack.c.l.b16 %v1052
    %v1119 = vunpack.c.h.b16 %v1052
    %v1120 = vunpack.c.l.b16 %v1053
    %v1121 = vunpack.c.h.b16 %v1053
    %v1122 = vunpack.c.l.b16 %v1054
    %v1123 = vunpack.c.h.b16 %v1054
    %v1124 = vunpack.c.l.b16 %v1055
    %v1125 = vunpack.c.h.b16 %v1055
    %v1126 = vunpack.c.l.b16 %v1056
    %v1127 = vunpack.c.h.b16 %v1056
    %v1128 = vunpack.c.l.b16 %v1057
    %v1129 = vunpack.c.h.b16 %v1057
    %v1130 = vunpack.c.l.b16 %v1058
    %v1131 = vunpack.c.h.b16 %v1058
    %v1132 = vunpack.c.l.b16 %v1059
    %v1133 = vunpack.c.h.b16 %v1059
    %v1134 = vunpack.c.l.b16 %v1060
    %v1135 = vunpack.c.h.b16 %v1060
    %v1136 = vunpack.c.l.b16 %v1061
    %v1137 = vunpack.c.h.b16 %v1061
    %v1138 = vunpack.c.l.b16 %v1062
    %v1139 = vunpack.c.h.b16 %v1062
    %v1140 = vunpack.c.l.b16 %v1063
    %v1141 = vunpack.c.h.b16 %v1063
    %v1142 = vunpack.c.l.b16 %v1064
    %v1143 = vunpack.c.h.b16 %v1064
    %v1144 = vunpack.c.l.b16 %v1065
    %v1145 = vunpack.c.h.b16 %v1065
    %v1146 = vunpack.c.l.b16 %v1066
    %v1147 = vunpack.c.h.b16 %v1066
    %v1148 = vunpack.c.l.b16 %v1067
    %v1149 = vunpack.c.h.b16 %v1067
    %v1150 = vunpack.c.l.b16 %v1068
    %v1151 = vunpack.c.h.b16 %v1068
    %v1152 = vunpack.c.l.b16 %v1069
    %v1153 = vunpack.c.h.b16 %v1069
    %v1154 = vunpack.c.l.b16 %v1070
    %v1155 = vunpack.c.h.b16 %v1070
    %v1156 = vunpack.c.l.b16 %v1071
    %v1157 = vunpack.c.h.b16 %v1071
    %v1158 = vunpack.c.l.b16 %v1072
    %v1159 = vunpack.c.h.b16 %v1072
    %v1160 = vunpack.c.l.b16 %v1073
    %v1161 = vunpack.c.h.b16 %v1073
    %v1162 = vunpack.c.l.b16 %v1074
    %v1163 = vunpack.c.h.b16 %v1074
    %v1164 = vunpack.c.l.b16 %v1075
    %v1165 = vunpack.c.h.b16 %v1075
    %v1166 = vunpack.c.l.b16 %v1076
    %v1167 = vunpack.c.h.b16 %v1076
    %v1168 = vunpack.c.l.b16 %v1077
    %v1169 = vunpack.c.h.b16 %v1077
    %v1170 = vunpack.c.l.b16 %v1078
    %v1171 = vunpack.c.h.b16 %v1078
    %v1172 = vunpack.c.l.b16 %v1079
    %v1173 = vunpack.c.h.b16 %v1079
    %v1174 = vunpack.c.l.b16 %v1080
    %v1175 = vunpack.c.h.b16 %v1080
    %v1176 = vunpack.c.l.b16 %v1081
    %v1177 = vunpack.c.h.b16 %v1081
    %v1178 = vpack.c.b16 %v1118, %v1114
    %v1179 = vpack.c.b16 %v1119, %v1115
    %v1180 = vpack.c.b16 %v1120, %v1116
    %v1181 = vpack.c.b16 %v1121, %v1117
    %v1182 = vpack.c.b16 %v1126, %v1122
    %v1183 = vpack.c.b16 %v1127, %v1123
    %v1184 = vpack.c.b16 %v1128, %v1124
    %v1185 = vpack.c.b16 %v1129, %v1125
    %v1186 = vpack.c.b16 %v1134, %v1130
    %v1187 = vpack.c.b16 %v1135, %v1131
    %v1188 = vpack.c.b16 %v1136, %v1132
    %v1189 = vpack.c.b16 %v1137, %v1133
    %v1190 = vpack.c.b16 %v1142, %v1138
    %v1191 = vpack.c.b16 %v1143, %v1139
    %v1192 = vpack.c.b16 %v1144, %v1140
    %v1193 = vpack.c.b16 %v1145, %v1141
    %v1194 = vpack.c.b16 %v1150, %v1146
    %v1195 = vpack.c.b16 %v1151, %v1147
    %v1196 = vpack.c.b16 %v1152, %v1148
    %v1197 = vpack.c.b16 %v1153, %v1149
    %v1198 = vpack.c.b16 %v1158, %v1154
    %v1199 = vpack.c.b16 %v1159, %v1155
    %v1200 = vpack.c.b16 %v1160, %v1156
    %v1201 = vpack.c.b16 %v1161, %v1157
    %v1202 = vpack.c.b16 %v1166, %v1162
    %v1203 = vpack.c.b16 %v1167, %v1163
    %v1204 = vpack.c.b16 %v1168, %v1164
    %v1205 = vpack.c.b16 %v1169, %v1165
    %v1206 = vpack.c.b16 %v1174, %v1170
    %v1207 = vpack.c.b16 %v1175, %v1171
    %v1208 = vpack.c.b16 %v1176, %v1172
    %v1209 = vpack.c.b16 %v1177, %v1173
    %1242 = vmatpush.bf16.msra.mxu0 %v1206
    %1243 = vmatpush.bf16.msra.mxu0 %v1202
    %1244 = vmatpush.bf16.msra.mxu0 %v1198
    %1245 = vmatpush.bf16.msra.mxu0 %v1194
    %1246 = vmatpush.bf16.msra.mxu0 %v1190
    %1247 = vmatpush.bf16.msra.mxu0 %v1186
    %1248 = vmatpush.bf16.msra.mxu0 %v1182
    %1249 = vmatpush.bf16.msra.mxu0 %v1178
    %1250 = vmatmul.bf16.gmra.mxu0 %v1047
    %v1251 = vpop.f32.mrf.mxu0
    %v1252 = vadd.f32 0.0, %v1251
    %v1253 = vpop.f32.mrf.mxu0
    %v1254 = vadd.f32 0.0, %v1253
    %1255 = vmatmul.bf16.gmra.mxu0 %v1048
    %v1256 = vpop.f32.mrf.mxu0
    %v1257 = vadd.f32 0.0, %v1256
    %v1258 = vpop.f32.mrf.mxu0
    %v1259 = vadd.f32 0.0, %v1258
    %1260 = vmatmul.bf16.gmra.mxu0 %v1049
    %v1261 = vpop.f32.mrf.mxu0
    %v1262 = vadd.f32 0.0, %v1261
    %v1263 = vpop.f32.mrf.mxu0
    %1264 = vdwg.mxu0
    %1265 = vmatpush.bf16.msra.mxu0 %v1207
    %1266 = vmatpush.bf16.msra.mxu0 %v1203
    %1267 = vmatpush.bf16.msra.mxu0 %v1199
    %1268 = vmatpush.bf16.msra.mxu0 %v1195
    %1269 = vmatpush.bf16.msra.mxu0 %v1191
    %1270 = vmatpush.bf16.msra.mxu0 %v1187
    %1271 = vmatpush.bf16.msra.mxu0 %v1183
    %1272 = vmatpush.bf16.msra.mxu0 %v1179
    %1273 = vmatmul.bf16.gmra.mxu0 %v1047
    %v1274 = vpop.f32.mrf.mxu0
    %v1275 = vadd.f32 0.0, %v1274
    %v1276 = vpop.f32.mrf.mxu0
    %v1277 = vadd.f32 0.0, %v1276
    %1278 = vmatmul.bf16.gmra.mxu0 %v1048
    %v1279 = vpop.f32.mrf.mxu0
    %v1280 = vadd.f32 0.0, %v1279
    %v1281 = vpop.f32.mrf.mxu0
    %v1282 = vadd.f32 0.0, %v1281
    %1283 = vmatmul.bf16.gmra.mxu0 %v1049
    %v1284 = vpop.f32.mrf.mxu0
    %v1285 = vadd.f32 0.0, %v1284
    %v1286 = vpop.f32.mrf.mxu0
    %1287 = vdwg.mxu0
    %1288 = vmatpush.bf16.msra.mxu0 %v1208
    %1289 = vmatpush.bf16.msra.mxu0 %v1204
    %1290 = vmatpush.bf16.msra.mxu0 %v1200
    %1291 = vmatpush.bf16.msra.mxu0 %v1196
    %1292 = vmatpush.bf16.msra.mxu0 %v1192
    %1293 = vmatpush.bf16.msra.mxu0 %v1188
    %1294 = vmatpush.bf16.msra.mxu0 %v1184
    %1295 = vmatpush.bf16.msra.mxu0 %v1180
    %1296 = vmatmul.bf16.gmra.mxu0 %v1047
    %v1297 = vpop.f32.mrf.mxu0
    %v1298 = vadd.f32 0.0, %v1297
    %v1299 = vpop.f32.mrf.mxu0
    %v1300 = vadd.f32 0.0, %v1299
    %1301 = vmatmul.bf16.gmra.mxu0 %v1048
    %v1302 = vpop.f32.mrf.mxu0
    %v1303 = vadd.f32 0.0, %v1302
    %v1304 = vpop.f32.mrf.mxu0
    %v1305 = vadd.f32 0.0, %v1304
    %1306 = vmatmul.bf16.gmra.mxu0 %v1049
    %v1307 = vpop.f32.mrf.mxu0
    %v1308 = vadd.f32 0.0, %v1307
    %v1309 = vpop.f32.mrf.mxu0
    %1310 = vdwg.mxu0
    %1311 = vmatpush.bf16.msra.mxu0 %v1209
    %1312 = vmatpush.bf16.msra.mxu0 %v1205
    %1313 = vmatpush.bf16.msra.mxu0 %v1201
    %1314 = vmatpush.bf16.msra.mxu0 %v1197
    %1315 = vmatpush.bf16.msra.mxu0 %v1193
    %1316 = vmatpush.bf16.msra.mxu0 %v1189
    %1317 = vmatpush.bf16.msra.mxu0 %v1185
    %1318 = vmatpush.bf16.msra.mxu0 %v1181
    %1319 = vmatmul.bf16.gmra.mxu0 %v1047
    %v1320 = vpop.f32.mrf.mxu0
    %v1321 = vadd.f32 0.0, %v1320
    %v1322 = vpop.f32.mrf.mxu0
    %v1323 = vadd.f32 0.0, %v1322
    %1324 = vmatmul.bf16.gmra.mxu0 %v1048
    %v1325 = vpop.f32.mrf.mxu0
    %v1326 = vadd.f32 0.0, %v1325
    %v1327 = vpop.f32.mrf.mxu0
    %v1328 = vadd.f32 0.0, %v1327
    %1329 = vmatmul.bf16.gmra.mxu0 %v1049
    %v1330 = vpop.f32.mrf.mxu0
    %v1331 = vadd.f32 0.0, %v1330
    %v1332 = vpop.f32.mrf.mxu0
    %1333 = vdwg.mxu0
    %v1366 = vunpack.c.l.b16 %v1015
    %v1367 = vunpack.c.h.b16 %v1015
    %v1368 = vunpack.c.l.b16 %v1016
    %v1369 = vunpack.c.h.b16 %v1016
    %v1370 = vunpack.c.l.b16 %v1017
    %v1371 = vunpack.c.h.b16 %v1017
    %v1372 = vunpack.c.l.b16 %v1018
    %v1373 = vunpack.c.h.b16 %v1018
    %v1374 = vunpack.c.l.b16 %v1019
    %v1375 = vunpack.c.h.b16 %v1019
    %v1376 = vunpack.c.l.b16 %v1020
    %v1377 = vunpack.c.h.b16 %v1020
    %v1378 = vunpack.c.l.b16 %v1021
    %v1379 = vunpack.c.h.b16 %v1021
    %v1380 = vunpack.c.l.b16 %v1022
    %v1381 = vunpack.c.h.b16 %v1022
    %v1382 = vunpack.c.l.b16 %v1023
    %v1383 = vunpack.c.h.b16 %v1023
    %v1384 = vunpack.c.l.b16 %v1024
    %v1385 = vunpack.c.h.b16 %v1024
    %v1386 = vunpack.c.l.b16 %v1025
    %v1387 = vunpack.c.h.b16 %v1025
    %v1388 = vunpack.c.l.b16 %v1026
    %v1389 = vunpack.c.h.b16 %v1026
    %v1390 = vunpack.c.l.b16 %v1027
    %v1391 = vunpack.c.h.b16 %v1027
    %v1392 = vunpack.c.l.b16 %v1028
    %v1393 = vunpack.c.h.b16 %v1028
    %v1394 = vunpack.c.l.b16 %v1029
    %v1395 = vunpack.c.h.b16 %v1029
    %v1396 = vunpack.c.l.b16 %v1030
    %v1397 = vunpack.c.h.b16 %v1030
    %v1398 = vunpack.c.l.b16 %v1031
    %v1399 = vunpack.c.h.b16 %v1031
    %v1400 = vunpack.c.l.b16 %v1032
    %v1401 = vunpack.c.h.b16 %v1032
    %v1402 = vunpack.c.l.b16 %v1033
    %v1403 = vunpack.c.h.b16 %v1033
    %v1404 = vunpack.c.l.b16 %v1034
    %v1405 = vunpack.c.h.b16 %v1034
    %v1406 = vunpack.c.l.b16 %v1035
    %v1407 = vunpack.c.h.b16 %v1035
    %v1408 = vunpack.c.l.b16 %v1036
    %v1409 = vunpack.c.h.b16 %v1036
    %v1410 = vunpack.c.l.b16 %v1037
    %v1411 = vunpack.c.h.b16 %v1037
    %v1412 = vunpack.c.l.b16 %v1038
    %v1413 = vunpack.c.h.b16 %v1038
    %v1414 = vunpack.c.l.b16 %v1039
    %v1415 = vunpack.c.h.b16 %v1039
    %v1416 = vunpack.c.l.b16 %v1040
    %v1417 = vunpack.c.h.b16 %v1040
    %v1418 = vunpack.c.l.b16 %v1041
    %v1419 = vunpack.c.h.b16 %v1041
    %v1420 = vunpack.c.l.b16 %v1042
    %v1421 = vunpack.c.h.b16 %v1042
    %v1422 = vunpack.c.l.b16 %v1043
    %v1423 = vunpack.c.h.b16 %v1043
    %v1424 = vunpack.c.l.b16 %v1044
    %v1425 = vunpack.c.h.b16 %v1044
    %v1426 = vunpack.c.l.b16 %v1045
    %v1427 = vunpack.c.h.b16 %v1045
    %v1428 = vunpack.c.l.b16 %v1046
    %v1429 = vunpack.c.h.b16 %v1046
    %v1430 = vpack.c.b16 %v1370, %v1366
    %v1431 = vpack.c.b16 %v1371, %v1367
    %v1432 = vpack.c.b16 %v1372, %v1368
    %v1433 = vpack.c.b16 %v1373, %v1369
    %v1434 = vpack.c.b16 %v1378, %v1374
    %v1435 = vpack.c.b16 %v1379, %v1375
    %v1436 = vpack.c.b16 %v1380, %v1376
    %v1437 = vpack.c.b16 %v1381, %v1377
    %v1438 = vpack.c.b16 %v1386, %v1382
    %v1439 = vpack.c.b16 %v1387, %v1383
    %v1440 = vpack.c.b16 %v1388, %v1384
    %v1441 = vpack.c.b16 %v1389, %v1385
    %v1442 = vpack.c.b16 %v1394, %v1390
    %v1443 = vpack.c.b16 %v1395, %v1391
    %v1444 = vpack.c.b16 %v1396, %v1392
    %v1445 = vpack.c.b16 %v1397, %v1393
    %v1446 = vpack.c.b16 %v1402, %v1398
    %v1447 = vpack.c.b16 %v1403, %v1399
    %v1448 = vpack.c.b16 %v1404, %v1400
    %v1449 = vpack.c.b16 %v1405, %v1401
    %v1450 = vpack.c.b16 %v1410, %v1406
    %v1451 = vpack.c.b16 %v1411, %v1407
    %v1452 = vpack.c.b16 %v1412, %v1408
    %v1453 = vpack.c.b16 %v1413, %v1409
    %v1454 = vpack.c.b16 %v1418, %v1414
    %v1455 = vpack.c.b16 %v1419, %v1415
    %v1456 = vpack.c.b16 %v1420, %v1416
    %v1457 = vpack.c.b16 %v1421, %v1417
    %v1458 = vpack.c.b16 %v1426, %v1422
    %v1459 = vpack.c.b16 %v1427, %v1423
    %v1460 = vpack.c.b16 %v1428, %v1424
    %v1461 = vpack.c.b16 %v1429, %v1425
    %1494 = vmatpush.bf16.msra.mxu0 %v1458
    %1495 = vmatpush.bf16.msra.mxu0 %v1454
    %1496 = vmatpush.bf16.msra.mxu0 %v1450
    %1497 = vmatpush.bf16.msra.mxu0 %v1446
    %1498 = vmatpush.bf16.msra.mxu0 %v1442
    %1499 = vmatpush.bf16.msra.mxu0 %v1438
    %1500 = vmatpush.bf16.msra.mxu0 %v1434
    %1501 = vmatpush.bf16.msra.mxu0 %v1430
    %1502 = vmatmul.bf16.gmra.mxu0 %v1012
    %v1503 = vpop.f32.mrf.mxu0
    %v1504 = vadd.f32 %v1252, %v1503
    %v1505 = vpop.f32.mrf.mxu0
    %v1506 = vadd.f32 %v1254, %v1505
    %1507 = vmatmul.bf16.gmra.mxu0 %v1013
    %v1508 = vpop.f32.mrf.mxu0
    %v1509 = vadd.f32 %v1257, %v1508
    %v1510 = vpop.f32.mrf.mxu0
    %v1511 = vadd.f32 %v1259, %v1510
    %1512 = vmatmul.bf16.gmra.mxu0 %v1014
    %v1513 = vpop.f32.mrf.mxu0
    %v1514 = vadd.f32 %v1262, %v1513
    %v1515 = vpop.f32.mrf.mxu0
    %1516 = vdwg.mxu0
    %1517 = vmatpush.bf16.msra.mxu0 %v1459
    %1518 = vmatpush.bf16.msra.mxu0 %v1455
    %1519 = vmatpush.bf16.msra.mxu0 %v1451
    %1520 = vmatpush.bf16.msra.mxu0 %v1447
    %1521 = vmatpush.bf16.msra.mxu0 %v1443
    %1522 = vmatpush.bf16.msra.mxu0 %v1439
    %1523 = vmatpush.bf16.msra.mxu0 %v1435
    %1524 = vmatpush.bf16.msra.mxu0 %v1431
    %1525 = vmatmul.bf16.gmra.mxu0 %v1012
    %v1526 = vpop.f32.mrf.mxu0
    %v1527 = vadd.f32 %v1275, %v1526
    %v1528 = vpop.f32.mrf.mxu0
    %v1529 = vadd.f32 %v1277, %v1528
    %1530 = vmatmul.bf16.gmra.mxu0 %v1013
    %v1531 = vpop.f32.mrf.mxu0
    %v1532 = vadd.f32 %v1280, %v1531
    %v1533 = vpop.f32.mrf.mxu0
    %v1534 = vadd.f32 %v1282, %v1533
    %1535 = vmatmul.bf16.gmra.mxu0 %v1014
    %v1536 = vpop.f32.mrf.mxu0
    %v1537 = vadd.f32 %v1285, %v1536
    %v1538 = vpop.f32.mrf.mxu0
    %1539 = vdwg.mxu0
    %1540 = vmatpush.bf16.msra.mxu0 %v1460
    %1541 = vmatpush.bf16.msra.mxu0 %v1456
    %1542 = vmatpush.bf16.msra.mxu0 %v1452
    %1543 = vmatpush.bf16.msra.mxu0 %v1448
    %1544 = vmatpush.bf16.msra.mxu0 %v1444
    %1545 = vmatpush.bf16.msra.mxu0 %v1440
    %1546 = vmatpush.bf16.msra.mxu0 %v1436
    %1547 = vmatpush.bf16.msra.mxu0 %v1432
    %1548 = vmatmul.bf16.gmra.mxu0 %v1012
    %v1549 = vpop.f32.mrf.mxu0
    %v1550 = vadd.f32 %v1298, %v1549
    %v1551 = vpop.f32.mrf.mxu0
    %v1552 = vadd.f32 %v1300, %v1551
    %1553 = vmatmul.bf16.gmra.mxu0 %v1013
    %v1554 = vpop.f32.mrf.mxu0
    %v1555 = vadd.f32 %v1303, %v1554
    %v1556 = vpop.f32.mrf.mxu0
    %v1557 = vadd.f32 %v1305, %v1556
    %1558 = vmatmul.bf16.gmra.mxu0 %v1014
    %v1559 = vpop.f32.mrf.mxu0
    %v1560 = vadd.f32 %v1308, %v1559
    %v1561 = vpop.f32.mrf.mxu0
    %1562 = vdwg.mxu0
    %1563 = vmatpush.bf16.msra.mxu0 %v1461
    %1564 = vmatpush.bf16.msra.mxu0 %v1457
    %1565 = vmatpush.bf16.msra.mxu0 %v1453
    %1566 = vmatpush.bf16.msra.mxu0 %v1449
    %1567 = vmatpush.bf16.msra.mxu0 %v1445
    %1568 = vmatpush.bf16.msra.mxu0 %v1441
    %1569 = vmatpush.bf16.msra.mxu0 %v1437
    %1570 = vmatpush.bf16.msra.mxu0 %v1433
    %1571 = vmatmul.bf16.gmra.mxu0 %v1012
    %v1572 = vpop.f32.mrf.mxu0
    %v1573 = vadd.f32 %v1321, %v1572
    %v1574 = vpop.f32.mrf.mxu0
    %v1575 = vadd.f32 %v1323, %v1574
    %1576 = vmatmul.bf16.gmra.mxu0 %v1013
    %v1577 = vpop.f32.mrf.mxu0
    %v1578 = vadd.f32 %v1326, %v1577
    %v1579 = vpop.f32.mrf.mxu0
    %v1580 = vadd.f32 %v1328, %v1579
    %1581 = vmatmul.bf16.gmra.mxu0 %v1014
    %v1582 = vpop.f32.mrf.mxu0
    %v1583 = vadd.f32 %v1331, %v1582
    %v1584 = vpop.f32.mrf.mxu0
    %1585 = vdwg.mxu0
    %v1587 = vperm.slane %v1011, 0
    %v1588 = vperm.slane %v1011, 1
    %v1589 = vperm.slane %v1011, 2
    %v1590 = vperm.slane %v1011, 3
    %v1595 = vadd.f32 %v1504, %v1587
    %v1596 = vadd.f32 %v1527, %v1588
    %v1597 = vadd.f32 %v1550, %v1589
    %v1598 = vadd.f32 %v1573, %v1590
    %v1599 = vadd.f32 %v1506, %v1587
    %v1600 = vadd.f32 %v1529, %v1588
    %v1601 = vadd.f32 %v1552, %v1589
    %v1602 = vadd.f32 %v1575, %v1590
    %v1603 = vadd.f32 %v1509, %v1587
    %v1604 = vadd.f32 %v1532, %v1588
    %v1605 = vadd.f32 %v1555, %v1589
    %v1606 = vadd.f32 %v1578, %v1590
    %v1607 = vadd.f32 %v1511, %v1587
    %v1608 = vadd.f32 %v1534, %v1588
    %v1609 = vadd.f32 %v1557, %v1589
    %v1610 = vadd.f32 %v1580, %v1590
    %v1611 = vadd.f32 %v1514, %v1587
    %v1612 = vadd.f32 %v1537, %v1588
    %v1613 = vadd.f32 %v1560, %v1589
    %v1614 = vadd.f32 %v1583, %v1590
    %v1615 = vxor.u32 %v1597, 2147483648
    %v1616 = vxor.u32 %v1598, 2147483648
    %v1617 = vxor.u32 %v1601, 2147483648
    %v1618 = vxor.u32 %v1602, 2147483648
    %v1619 = vxor.u32 %v1605, 2147483648
    %v1620 = vxor.u32 %v1606, 2147483648
    %v1621 = vxor.u32 %v1609, 2147483648
    %v1622 = vxor.u32 %v1610, 2147483648
    %v1623 = vxor.u32 %v1613, 2147483648
    %v1624 = vxor.u32 %v1614, 2147483648
    %v1625 = vmul.f32 %v1615, 1.442695
    %v1626 = vpow.pop %v1625
    %v1627 = vmul.f32 %v1616, 1.442695
    %v1628 = vpow.pop %v1627
    %v1629 = vmul.f32 %v1617, 1.442695
    %v1630 = vpow.pop %v1629
    %v1631 = vmul.f32 %v1618, 1.442695
    %v1632 = vpow.pop %v1631
    %v1633 = vmul.f32 %v1619, 1.442695
    %v1634 = vpow.pop %v1633
    %v1635 = vmul.f32 %v1620, 1.442695
    %v1636 = vpow.pop %v1635
    %v1637 = vmul.f32 %v1621, 1.442695
    %v1638 = vpow.pop %v1637
    %v1639 = vmul.f32 %v1622, 1.442695
    %v1640 = vpow.pop %v1639
    %v1641 = vmul.f32 %v1623, 1.442695
    %v1642 = vpow.pop %v1641
    %v1643 = vmul.f32 %v1624, 1.442695
    %v1644 = vpow.pop %v1643
    %v1645 = vadd.f32 %v1626, 1.0
    %v1646 = vadd.f32 %v1628, 1.0
    %v1647 = vadd.f32 %v1630, 1.0
    %v1648 = vadd.f32 %v1632, 1.0
    %v1649 = vadd.f32 %v1634, 1.0
    %v1650 = vadd.f32 %v1636, 1.0
    %v1651 = vadd.f32 %v1638, 1.0
    %v1652 = vadd.f32 %v1640, 1.0
    %v1653 = vadd.f32 %v1642, 1.0
    %v1654 = vadd.f32 %v1644, 1.0
    %v1655 = vrcp.pop %v1645
    %v1656 = vmul.f32 %v1645, %v1655
    %v1657 = vsub.f32 1.0, %v1656
    %v1658 = vmul.f32 %v1655, %v1657
    %v1659 = vadd.f32 %v1655, %v1658
    %vm1660 = vweird.f32 %v1645
    %vm1661 = vweird.f32 %v1655
    %vm1662 = vmor %vm1660, %vm1661
    %v1663 = vsel %vm1662, %v1655, %v1659
    %v1664 = vand.u32 2147483647, %v1645
    %vm1665 = vcmp.eq.f32.partialorder %v1664, 8.507059e+37
    %v1666 = vand.u32 %v1645, 2147483648
    %v1667 = vor.u32 1.1754944e-38, %v1666
    %v1668 = vsel %vm1665, %v1667, %v1663
    %v1669 = vmul.f32 1.0, %v1668
    %v1670 = vrcp.pop %v1646
    %v1671 = vmul.f32 %v1646, %v1670
    %v1672 = vsub.f32 1.0, %v1671
    %v1673 = vmul.f32 %v1670, %v1672
    %v1674 = vadd.f32 %v1670, %v1673
    %vm1675 = vweird.f32 %v1646
    %vm1676 = vweird.f32 %v1670
    %vm1677 = vmor %vm1675, %vm1676
    %v1678 = vsel %vm1677, %v1670, %v1674
    %v1679 = vand.u32 2147483647, %v1646
    %vm1680 = vcmp.eq.f32.partialorder %v1679, 8.507059e+37
    %v1681 = vand.u32 %v1646, 2147483648
    %v1682 = vor.u32 1.1754944e-38, %v1681
    %v1683 = vsel %vm1680, %v1682, %v1678
    %v1684 = vmul.f32 1.0, %v1683
    %v1685 = vrcp.pop %v1647
    %v1686 = vmul.f32 %v1647, %v1685
    %v1687 = vsub.f32 1.0, %v1686
    %v1688 = vmul.f32 %v1685, %v1687
    %v1689 = vadd.f32 %v1685, %v1688
    %vm1690 = vweird.f32 %v1647
    %vm1691 = vweird.f32 %v1685
    %vm1692 = vmor %vm1690, %vm1691
    %v1693 = vsel %vm1692, %v1685, %v1689
    %v1694 = vand.u32 2147483647, %v1647
    %vm1695 = vcmp.eq.f32.partialorder %v1694, 8.507059e+37
    %v1696 = vand.u32 %v1647, 2147483648
    %v1697 = vor.u32 1.1754944e-38, %v1696
    %v1698 = vsel %vm1695, %v1697, %v1693
    %v1699 = vmul.f32 1.0, %v1698
    %v1700 = vrcp.pop %v1648
    %v1701 = vmul.f32 %v1648, %v1700
    %v1702 = vsub.f32 1.0, %v1701
    %v1703 = vmul.f32 %v1700, %v1702
    %v1704 = vadd.f32 %v1700, %v1703
    %vm1705 = vweird.f32 %v1648
    %vm1706 = vweird.f32 %v1700
    %vm1707 = vmor %vm1705, %vm1706
    %v1708 = vsel %vm1707, %v1700, %v1704
    %v1709 = vand.u32 2147483647, %v1648
    %vm1710 = vcmp.eq.f32.partialorder %v1709, 8.507059e+37
    %v1711 = vand.u32 %v1648, 2147483648
    %v1712 = vor.u32 1.1754944e-38, %v1711
    %v1713 = vsel %vm1710, %v1712, %v1708
    %v1714 = vmul.f32 1.0, %v1713
    %v1715 = vrcp.pop %v1649
    %v1716 = vmul.f32 %v1649, %v1715
    %v1717 = vsub.f32 1.0, %v1716
    %v1718 = vmul.f32 %v1715, %v1717
    %v1719 = vadd.f32 %v1715, %v1718
    %vm1720 = vweird.f32 %v1649
    %vm1721 = vweird.f32 %v1715
    %vm1722 = vmor %vm1720, %vm1721
    %v1723 = vsel %vm1722, %v1715, %v1719
    %v1724 = vand.u32 2147483647, %v1649
    %vm1725 = vcmp.eq.f32.partialorder %v1724, 8.507059e+37
    %v1726 = vand.u32 %v1649, 2147483648
    %v1727 = vor.u32 1.1754944e-38, %v1726
    %v1728 = vsel %vm1725, %v1727, %v1723
    %v1729 = vmul.f32 1.0, %v1728
    %v1730 = vrcp.pop %v1650
    %v1731 = vmul.f32 %v1650, %v1730
    %v1732 = vsub.f32 1.0, %v1731
    %v1733 = vmul.f32 %v1730, %v1732
    %v1734 = vadd.f32 %v1730, %v1733
    %vm1735 = vweird.f32 %v1650
    %vm1736 = vweird.f32 %v1730
    %vm1737 = vmor %vm1735, %vm1736
    %v1738 = vsel %vm1737, %v1730, %v1734
    %v1739 = vand.u32 2147483647, %v1650
    %vm1740 = vcmp.eq.f32.partialorder %v1739, 8.507059e+37
    %v1741 = vand.u32 %v1650, 2147483648
    %v1742 = vor.u32 1.1754944e-38, %v1741
    %v1743 = vsel %vm1740, %v1742, %v1738
    %v1744 = vmul.f32 1.0, %v1743
    %v1745 = vrcp.pop %v1651
    %v1746 = vmul.f32 %v1651, %v1745
    %v1747 = vsub.f32 1.0, %v1746
    %v1748 = vmul.f32 %v1745, %v1747
    %v1749 = vadd.f32 %v1745, %v1748
    %vm1750 = vweird.f32 %v1651
    %vm1751 = vweird.f32 %v1745
    %vm1752 = vmor %vm1750, %vm1751
    %v1753 = vsel %vm1752, %v1745, %v1749
    %v1754 = vand.u32 2147483647, %v1651
    %vm1755 = vcmp.eq.f32.partialorder %v1754, 8.507059e+37
    %v1756 = vand.u32 %v1651, 2147483648
    %v1757 = vor.u32 1.1754944e-38, %v1756
    %v1758 = vsel %vm1755, %v1757, %v1753
    %v1759 = vmul.f32 1.0, %v1758
    %v1760 = vrcp.pop %v1652
    %v1761 = vmul.f32 %v1652, %v1760
    %v1762 = vsub.f32 1.0, %v1761
    %v1763 = vmul.f32 %v1760, %v1762
    %v1764 = vadd.f32 %v1760, %v1763
    %vm1765 = vweird.f32 %v1652
    %vm1766 = vweird.f32 %v1760
    %vm1767 = vmor %vm1765, %vm1766
    %v1768 = vsel %vm1767, %v1760, %v1764
    %v1769 = vand.u32 2147483647, %v1652
    %vm1770 = vcmp.eq.f32.partialorder %v1769, 8.507059e+37
    %v1771 = vand.u32 %v1652, 2147483648
    %v1772 = vor.u32 1.1754944e-38, %v1771
    %v1773 = vsel %vm1770, %v1772, %v1768
    %v1774 = vmul.f32 1.0, %v1773
    %v1775 = vrcp.pop %v1653
    %v1776 = vmul.f32 %v1653, %v1775
    %v1777 = vsub.f32 1.0, %v1776
    %v1778 = vmul.f32 %v1775, %v1777
    %v1779 = vadd.f32 %v1775, %v1778
    %vm1780 = vweird.f32 %v1653
    %vm1781 = vweird.f32 %v1775
    %vm1782 = vmor %vm1780, %vm1781
    %v1783 = vsel %vm1782, %v1775, %v1779
    %v1784 = vand.u32 2147483647, %v1653
    %vm1785 = vcmp.eq.f32.partialorder %v1784, 8.507059e+37
    %v1786 = vand.u32 %v1653, 2147483648
    %v1787 = vor.u32 1.1754944e-38, %v1786
    %v1788 = vsel %vm1785, %v1787, %v1783
    %v1789 = vmul.f32 1.0, %v1788
    %v1790 = vrcp.pop %v1654
    %v1791 = vmul.f32 %v1654, %v1790
    %v1792 = vsub.f32 1.0, %v1791
    %v1793 = vmul.f32 %v1790, %v1792
    %v1794 = vadd.f32 %v1790, %v1793
    %vm1795 = vweird.f32 %v1654
    %vm1796 = vweird.f32 %v1790
    %vm1797 = vmor %vm1795, %vm1796
    %v1798 = vsel %vm1797, %v1790, %v1794
    %v1799 = vand.u32 2147483647, %v1654
    %vm1800 = vcmp.eq.f32.partialorder %v1799, 8.507059e+37
    %v1801 = vand.u32 %v1654, 2147483648
    %v1802 = vor.u32 1.1754944e-38, %v1801
    %v1803 = vsel %vm1800, %v1802, %v1798
    %v1804 = vmul.f32 1.0, %v1803
    %v1805 = vmul.f32 %v1595, %v1669
    %v1806 = vmul.f32 %v1596, %v1684
    %v1807 = vmul.f32 %v1599, %v1699
    %v1808 = vmul.f32 %v1600, %v1714
    %v1809 = vmul.f32 %v1603, %v1729
    %v1810 = vmul.f32 %v1604, %v1744
    %v1811 = vmul.f32 %v1607, %v1759
    %v1812 = vmul.f32 %v1608, %v1774
    %v1813 = vmul.f32 %v1611, %v1789
    %v1814 = vmul.f32 %v1612, %v1804
    %s1815 = scalar_lea.vmem [#allocation7], 6
    %v1816 = vld [vmem:[%s1815] ss:$8 sm:$0x3]
    %v1817 = vpack.c.bf16 %v1807, %v1805
    %v1818 = vpack.c.bf16 %v1808, %v1806
    %v1819 = vpack.c.bf16 %v1811, %v1809
    %v1820 = vpack.c.bf16 %v1812, %v1810
    %v1821 = vpack.c.bf16 %v1813, %v1813
    %v1822 = vpack.c.bf16 %v1814, %v1814
    %v1823 = vld [vmem:[#allocation4 + $0x100] sm:$0xff]
    %v1824 = vld [vmem:[#allocation4 + $0x108] sm:$0xff]
    %v1825 = vld [vmem:[#allocation4 + $0x110] sm:$0xff]
    %v1826 = vld [vmem:[#allocation4 + $0x118] sm:$0xff]
    %v1827 = vld [vmem:[#allocation4 + $0x120] sm:$0xff]
    %v1828 = vld [vmem:[#allocation4 + $0x128] sm:$0xff]
    %v1829 = vld [vmem:[#allocation4 + $0x130] sm:$0xff]
    %v1830 = vld [vmem:[#allocation4 + $0x138] sm:$0xff]
    %v1831 = vld [vmem:[#allocation4 + $0x140] sm:$0xff]
    %v1832 = vld [vmem:[#allocation4 + $0x148] sm:$0xff]
    %v1833 = vld [vmem:[#allocation4 + $0x150] sm:$0xff]
    %v1834 = vld [vmem:[#allocation4 + $0x158] sm:$0xff]
    %v1835 = vld [vmem:[#allocation4 + $0x160] sm:$0xff]
    %v1836 = vld [vmem:[#allocation4 + $0x168] sm:$0xff]
    %v1837 = vld [vmem:[#allocation4 + $0x170] sm:$0xff]
    %v1838 = vld [vmem:[#allocation4 + $0x178] sm:$0xff]
    %v1839 = vld [vmem:[#allocation4 + $0x180] sm:$0xff]
    %v1840 = vld [vmem:[#allocation4 + $0x188] sm:$0xff]
    %v1841 = vld [vmem:[#allocation4 + $0x190] sm:$0xff]
    %v1842 = vld [vmem:[#allocation4 + $0x198] sm:$0xff]
    %v1843 = vld [vmem:[#allocation4 + $0x1a0] sm:$0xff]
    %v1844 = vld [vmem:[#allocation4 + $0x1a8] sm:$0xff]
    %v1845 = vld [vmem:[#allocation4 + $0x1b0] sm:$0xff]
    %v1846 = vld [vmem:[#allocation4 + $0x1b8] sm:$0xff]
    %v1847 = vld [vmem:[#allocation4 + $0x1c0] sm:$0xff]
    %v1848 = vld [vmem:[#allocation4 + $0x1c8] sm:$0xff]
    %v1849 = vld [vmem:[#allocation4 + $0x1d0] sm:$0xff]
    %v1850 = vld [vmem:[#allocation4 + $0x1d8] sm:$0xff]
    %v1851 = vld [vmem:[#allocation4 + $0x1e0] sm:$0xff]
    %v1852 = vld [vmem:[#allocation4 + $0x1e8] sm:$0xff]
    %v1853 = vld [vmem:[#allocation4 + $0x1f0] sm:$0xff]
    %v1854 = vld [vmem:[#allocation4 + $0x1f8] sm:$0xff]
    %v1856 = vperm.slane %v1816, 0
    %v1857 = vperm.slane %v1816, 1
    %v1892 = vunpack.c.l.b16 %v1823
    %v1893 = vunpack.c.h.b16 %v1823
    %v1894 = vunpack.c.l.b16 %v1824
    %v1895 = vunpack.c.h.b16 %v1824
    %v1896 = vunpack.c.l.b16 %v1825
    %v1897 = vunpack.c.h.b16 %v1825
    %v1898 = vunpack.c.l.b16 %v1826
    %v1899 = vunpack.c.h.b16 %v1826
    %v1900 = vunpack.c.l.b16 %v1827
    %v1901 = vunpack.c.h.b16 %v1827
    %v1902 = vunpack.c.l.b16 %v1828
    %v1903 = vunpack.c.h.b16 %v1828
    %v1904 = vunpack.c.l.b16 %v1829
    %v1905 = vunpack.c.h.b16 %v1829
    %v1906 = vunpack.c.l.b16 %v1830
    %v1907 = vunpack.c.h.b16 %v1830
    %v1908 = vunpack.c.l.b16 %v1831
    %v1909 = vunpack.c.h.b16 %v1831
    %v1910 = vunpack.c.l.b16 %v1832
    %v1911 = vunpack.c.h.b16 %v1832
    %v1912 = vunpack.c.l.b16 %v1833
    %v1913 = vunpack.c.h.b16 %v1833
    %v1914 = vunpack.c.l.b16 %v1834
    %v1915 = vunpack.c.h.b16 %v1834
    %v1916 = vunpack.c.l.b16 %v1835
    %v1917 = vunpack.c.h.b16 %v1835
    %v1918 = vunpack.c.l.b16 %v1836
    %v1919 = vunpack.c.h.b16 %v1836
    %v1920 = vunpack.c.l.b16 %v1837
    %v1921 = vunpack.c.h.b16 %v1837
    %v1922 = vunpack.c.l.b16 %v1838
    %v1923 = vunpack.c.h.b16 %v1838
    %v1924 = vunpack.c.l.b16 %v1839
    %v1925 = vunpack.c.h.b16 %v1839
    %v1926 = vunpack.c.l.b16 %v1840
    %v1927 = vunpack.c.h.b16 %v1840
    %v1928 = vunpack.c.l.b16 %v1841
    %v1929 = vunpack.c.h.b16 %v1841
    %v1930 = vunpack.c.l.b16 %v1842
    %v1931 = vunpack.c.h.b16 %v1842
    %v1932 = vunpack.c.l.b16 %v1843
    %v1933 = vunpack.c.h.b16 %v1843
    %v1934 = vunpack.c.l.b16 %v1844
    %v1935 = vunpack.c.h.b16 %v1844
    %v1936 = vunpack.c.l.b16 %v1845
    %v1937 = vunpack.c.h.b16 %v1845
    %v1938 = vunpack.c.l.b16 %v1846
    %v1939 = vunpack.c.h.b16 %v1846
    %v1940 = vunpack.c.l.b16 %v1847
    %v1941 = vunpack.c.h.b16 %v1847
    %v1942 = vunpack.c.l.b16 %v1848
    %v1943 = vunpack.c.h.b16 %v1848
    %v1944 = vunpack.c.l.b16 %v1849
    %v1945 = vunpack.c.h.b16 %v1849
    %v1946 = vunpack.c.l.b16 %v1850
    %v1947 = vunpack.c.h.b16 %v1850
    %v1948 = vunpack.c.l.b16 %v1851
    %v1949 = vunpack.c.h.b16 %v1851
    %v1950 = vunpack.c.l.b16 %v1852
    %v1951 = vunpack.c.h.b16 %v1852
    %v1952 = vunpack.c.l.b16 %v1853
    %v1953 = vunpack.c.h.b16 %v1853
    %v1954 = vunpack.c.l.b16 %v1854
    %v1955 = vunpack.c.h.b16 %v1854
    %v1956 = vpack.c.b16 %v1894, %v1892
    %v1957 = vpack.c.b16 %v1895, %v1893
    %v1958 = vpack.c.b16 %v1898, %v1896
    %v1959 = vpack.c.b16 %v1899, %v1897
    %v1960 = vpack.c.b16 %v1902, %v1900
    %v1961 = vpack.c.b16 %v1903, %v1901
    %v1962 = vpack.c.b16 %v1906, %v1904
    %v1963 = vpack.c.b16 %v1907, %v1905
    %v1964 = vpack.c.b16 %v1910, %v1908
    %v1965 = vpack.c.b16 %v1911, %v1909
    %v1966 = vpack.c.b16 %v1914, %v1912
    %v1967 = vpack.c.b16 %v1915, %v1913
    %v1968 = vpack.c.b16 %v1918, %v1916
    %v1969 = vpack.c.b16 %v1919, %v1917
    %v1970 = vpack.c.b16 %v1922, %v1920
    %v1971 = vpack.c.b16 %v1923, %v1921
    %v1972 = vpack.c.b16 %v1926, %v1924
    %v1973 = vpack.c.b16 %v1927, %v1925
    %v1974 = vpack.c.b16 %v1930, %v1928
    %v1975 = vpack.c.b16 %v1931, %v1929
    %v1976 = vpack.c.b16 %v1934, %v1932
    %v1977 = vpack.c.b16 %v1935, %v1933
    %v1978 = vpack.c.b16 %v1938, %v1936
    %v1979 = vpack.c.b16 %v1939, %v1937
    %v1980 = vpack.c.b16 %v1942, %v1940
    %v1981 = vpack.c.b16 %v1943, %v1941
    %v1982 = vpack.c.b16 %v1946, %v1944
    %v1983 = vpack.c.b16 %v1947, %v1945
    %v1984 = vpack.c.b16 %v1950, %v1948
    %v1985 = vpack.c.b16 %v1951, %v1949
    %v1986 = vpack.c.b16 %v1954, %v1952
    %v1987 = vpack.c.b16 %v1955, %v1953
    %2020 = vmatpush.bf16.msra.mxu0 %v1970
    %2021 = vmatpush.bf16.msra.mxu0 %v1968
    %2022 = vmatpush.bf16.msra.mxu0 %v1966
    %2023 = vmatpush.bf16.msra.mxu0 %v1964
    %2024 = vmatpush.bf16.msra.mxu0 %v1962
    %2025 = vmatpush.bf16.msra.mxu0 %v1960
    %2026 = vmatpush.bf16.msra.mxu0 %v1958
    %2027 = vmatpush.bf16.msra.mxu0 %v1956
    %2028 = vmatmul.bf16.gmra.mxu0 %v1817
    %v2029 = vpop.f32.mrf.mxu0
    %v2030 = vadd.f32 %v1856, %v2029
    %v2031 = vpop.f32.mrf.mxu0
    %v2032 = vadd.f32 %v1856, %v2031
    %2033 = vmatmul.bf16.gmra.mxu0 %v1819
    %v2034 = vpop.f32.mrf.mxu0
    %v2035 = vadd.f32 %v1856, %v2034
    %v2036 = vpop.f32.mrf.mxu0
    %v2037 = vadd.f32 %v1856, %v2036
    %2038 = vmatmul.bf16.gmra.mxu0 %v1821
    %v2039 = vpop.f32.mrf.mxu0
    %v2040 = vadd.f32 %v1856, %v2039
    %v2041 = vpop.f32.mrf.mxu0
    %2042 = vdwg.mxu0
    %2043 = vmatpush.bf16.msra.mxu0 %v1986
    %2044 = vmatpush.bf16.msra.mxu0 %v1984
    %2045 = vmatpush.bf16.msra.mxu0 %v1982
    %2046 = vmatpush.bf16.msra.mxu0 %v1980
    %2047 = vmatpush.bf16.msra.mxu0 %v1978
    %2048 = vmatpush.bf16.msra.mxu0 %v1976
    %2049 = vmatpush.bf16.msra.mxu0 %v1974
    %2050 = vmatpush.bf16.msra.mxu0 %v1972
    %2051 = vmatmul.bf16.gmra.mxu0 %v1818
    %v2052 = vpop.f32.mrf.mxu0
    %v2053 = vadd.f32 %v2030, %v2052
    %v2054 = vpop.f32.mrf.mxu0
    %v2055 = vadd.f32 %v2032, %v2054
    %2056 = vmatmul.bf16.gmra.mxu0 %v1820
    %v2057 = vpop.f32.mrf.mxu0
    %v2058 = vadd.f32 %v2035, %v2057
    %v2059 = vpop.f32.mrf.mxu0
    %v2060 = vadd.f32 %v2037, %v2059
    %2061 = vmatmul.bf16.gmra.mxu0 %v1822
    %v2062 = vpop.f32.mrf.mxu0
    %v2063 = vadd.f32 %v2040, %v2062
    %v2064 = vpop.f32.mrf.mxu0
    %2065 = vdwg.mxu0
    %2066 = vmatpush.bf16.msra.mxu0 %v1971
    %2067 = vmatpush.bf16.msra.mxu0 %v1969
    %2068 = vmatpush.bf16.msra.mxu0 %v1967
    %2069 = vmatpush.bf16.msra.mxu0 %v1965
    %2070 = vmatpush.bf16.msra.mxu0 %v1963
    %2071 = vmatpush.bf16.msra.mxu0 %v1961
    %2072 = vmatpush.bf16.msra.mxu0 %v1959
    %2073 = vmatpush.bf16.msra.mxu0 %v1957
    %2074 = vmatmul.bf16.gmra.mxu0 %v1817
    %v2075 = vpop.f32.mrf.mxu0
    %v2076 = vadd.f32 %v1857, %v2075
    %v2077 = vpop.f32.mrf.mxu0
    %v2078 = vadd.f32 %v1857, %v2077
    %2079 = vmatmul.bf16.gmra.mxu0 %v1819
    %v2080 = vpop.f32.mrf.mxu0
    %v2081 = vadd.f32 %v1857, %v2080
    %v2082 = vpop.f32.mrf.mxu0
    %v2083 = vadd.f32 %v1857, %v2082
    %2084 = vmatmul.bf16.gmra.mxu0 %v1821
    %v2085 = vpop.f32.mrf.mxu0
    %v2086 = vadd.f32 %v1857, %v2085
    %v2087 = vpop.f32.mrf.mxu0
    %2088 = vdwg.mxu0
    %2089 = vmatpush.bf16.msra.mxu0 %v1987
    %2090 = vmatpush.bf16.msra.mxu0 %v1985
    %2091 = vmatpush.bf16.msra.mxu0 %v1983
    %2092 = vmatpush.bf16.msra.mxu0 %v1981
    %2093 = vmatpush.bf16.msra.mxu0 %v1979
    %2094 = vmatpush.bf16.msra.mxu0 %v1977
    %2095 = vmatpush.bf16.msra.mxu0 %v1975
    %2096 = vmatpush.bf16.msra.mxu0 %v1973
    %2097 = vmatmul.bf16.gmra.mxu0 %v1818
    %v2098 = vpop.f32.mrf.mxu0
    %v2099 = vadd.f32 %v2076, %v2098
    %v2100 = vpop.f32.mrf.mxu0
    %v2101 = vadd.f32 %v2078, %v2100
    %2102 = vmatmul.bf16.gmra.mxu0 %v1820
    %v2103 = vpop.f32.mrf.mxu0
    %v2104 = vadd.f32 %v2081, %v2103
    %v2105 = vpop.f32.mrf.mxu0
    %v2106 = vadd.f32 %v2083, %v2105
    %2107 = vmatmul.bf16.gmra.mxu0 %v1822
    %v2108 = vpop.f32.mrf.mxu0
    %v2109 = vadd.f32 %v2086, %v2108
    %v2110 = vpop.f32.mrf.mxu0
    %2111 = vdwg.mxu0
    %v2112 = vmax.f32 %v2053, 0.0
    %v2113 = vmax.f32 %v2099, 0.0
    %v2114 = vmax.f32 %v2055, 0.0
    %v2115 = vmax.f32 %v2101, 0.0
    %v2116 = vmax.f32 %v2058, 0.0
    %v2117 = vmax.f32 %v2104, 0.0
    %v2118 = vmax.f32 %v2060, 0.0
    %v2119 = vmax.f32 %v2106, 0.0
    %v2120 = vmax.f32 %v2063, 0.0
    %v2121 = vmax.f32 %v2109, 0.0
    %s2122 = scalar_lea.vmem [#allocation7], 7
    %v2123 = vld [vmem:[%s2122] ss:$8 sm:$0x3]
    %v2124 = vpack.c.bf16 %v2114, %v2112
    %v2125 = vpack.c.bf16 %v2115, %v2113
    %v2126 = vpack.c.bf16 %v2118, %v2116
    %v2127 = vpack.c.bf16 %v2119, %v2117
    %v2128 = vld [vmem:[#allocation4 + $0x200] sm:$0xff]
    %v2129 = vld [vmem:[#allocation4 + $0x208] sm:$0xff]
    %v2130 = vld [vmem:[#allocation4 + $0x210] sm:$0xff]
    %v2131 = vld [vmem:[#allocation4 + $0x218] sm:$0xff]
    %v2132 = vld [vmem:[#allocation4 + $0x220] sm:$0xff]
    %v2133 = vld [vmem:[#allocation4 + $0x228] sm:$0xff]
    %v2134 = vld [vmem:[#allocation4 + $0x230] sm:$0xff]
    %v2135 = vld [vmem:[#allocation4 + $0x238] sm:$0xff]
    %v2136 = vld [vmem:[#allocation4 + $0x240] sm:$0xff]
    %v2137 = vld [vmem:[#allocation4 + $0x248] sm:$0xff]
    %v2138 = vld [vmem:[#allocation4 + $0x250] sm:$0xff]
    %v2139 = vld [vmem:[#allocation4 + $0x258] sm:$0xff]
    %v2140 = vld [vmem:[#allocation4 + $0x260] sm:$0xff]
    %v2141 = vld [vmem:[#allocation4 + $0x268] sm:$0xff]
    %v2142 = vld [vmem:[#allocation4 + $0x270] sm:$0xff]
    %v2143 = vld [vmem:[#allocation4 + $0x278] sm:$0xff]
    %v2144 = vld [vmem:[#allocation4 + $0x280] sm:$0xff]
    %v2145 = vld [vmem:[#allocation4 + $0x288] sm:$0xff]
    %v2146 = vld [vmem:[#allocation4 + $0x290] sm:$0xff]
    %v2147 = vld [vmem:[#allocation4 + $0x298] sm:$0xff]
    %v2148 = vld [vmem:[#allocation4 + $0x2a0] sm:$0xff]
    %v2149 = vld [vmem:[#allocation4 + $0x2a8] sm:$0xff]
    %v2150 = vld [vmem:[#allocation4 + $0x2b0] sm:$0xff]
    %v2151 = vld [vmem:[#allocation4 + $0x2b8] sm:$0xff]
    %v2152 = vld [vmem:[#allocation4 + $0x2c0] sm:$0xff]
    %v2153 = vld [vmem:[#allocation4 + $0x2c8] sm:$0xff]
    %v2154 = vld [vmem:[#allocation4 + $0x2d0] sm:$0xff]
    %v2155 = vld [vmem:[#allocation4 + $0x2d8] sm:$0xff]
    %v2156 = vld [vmem:[#allocation4 + $0x2e0] sm:$0xff]
    %v2157 = vld [vmem:[#allocation4 + $0x2e8] sm:$0xff]
    %v2158 = vld [vmem:[#allocation4 + $0x2f0] sm:$0xff]
    %v2159 = vld [vmem:[#allocation4 + $0x2f8] sm:$0xff]
    %v2160 = vpack.c.bf16 %v2116, %v2114
    %v2161 = vpack.c.bf16 %v2117, %v2115
    %v2162 = vpack.c.bf16 %v2120, %v2118
    %v2163 = vpack.c.bf16 %v2121, %v2119
    %v2164 = vld [vmem:[#allocation4 + $0x300] sm:$0xff]
    %v2165 = vld [vmem:[#allocation4 + $0x308] sm:$0xff]
    %v2166 = vld [vmem:[#allocation4 + $0x310] sm:$0xff]
    %v2167 = vld [vmem:[#allocation4 + $0x318] sm:$0xff]
    %v2168 = vld [vmem:[#allocation4 + $0x320] sm:$0xff]
    %v2169 = vld [vmem:[#allocation4 + $0x328] sm:$0xff]
    %v2170 = vld [vmem:[#allocation4 + $0x330] sm:$0xff]
    %v2171 = vld [vmem:[#allocation4 + $0x338] sm:$0xff]
    %v2172 = vld [vmem:[#allocation4 + $0x340] sm:$0xff]
    %v2173 = vld [vmem:[#allocation4 + $0x348] sm:$0xff]
    %v2174 = vld [vmem:[#allocation4 + $0x350] sm:$0xff]
    %v2175 = vld [vmem:[#allocation4 + $0x358] sm:$0xff]
    %v2176 = vld [vmem:[#allocation4 + $0x360] sm:$0xff]
    %v2177 = vld [vmem:[#allocation4 + $0x368] sm:$0xff]
    %v2178 = vld [vmem:[#allocation4 + $0x370] sm:$0xff]
    %v2179 = vld [vmem:[#allocation4 + $0x378] sm:$0xff]
    %v2180 = vld [vmem:[#allocation4 + $0x380] sm:$0xff]
    %v2181 = vld [vmem:[#allocation4 + $0x388] sm:$0xff]
    %v2182 = vld [vmem:[#allocation4 + $0x390] sm:$0xff]
    %v2183 = vld [vmem:[#allocation4 + $0x398] sm:$0xff]
    %v2184 = vld [vmem:[#allocation4 + $0x3a0] sm:$0xff]
    %v2185 = vld [vmem:[#allocation4 + $0x3a8] sm:$0xff]
    %v2186 = vld [vmem:[#allocation4 + $0x3b0] sm:$0xff]
    %v2187 = vld [vmem:[#allocation4 + $0x3b8] sm:$0xff]
    %v2188 = vld [vmem:[#allocation4 + $0x3c0] sm:$0xff]
    %v2189 = vld [vmem:[#allocation4 + $0x3c8] sm:$0xff]
    %v2190 = vld [vmem:[#allocation4 + $0x3d0] sm:$0xff]
    %v2191 = vld [vmem:[#allocation4 + $0x3d8] sm:$0xff]
    %v2192 = vld [vmem:[#allocation4 + $0x3e0] sm:$0xff]
    %v2193 = vld [vmem:[#allocation4 + $0x3e8] sm:$0xff]
    %v2194 = vld [vmem:[#allocation4 + $0x3f0] sm:$0xff]
    %v2195 = vld [vmem:[#allocation4 + $0x3f8] sm:$0xff]
    %v2228 = vunpack.c.l.b16 %v2164
    %v2229 = vunpack.c.h.b16 %v2164
    %v2230 = vunpack.c.l.b16 %v2165
    %v2231 = vunpack.c.h.b16 %v2165
    %v2232 = vunpack.c.l.b16 %v2166
    %v2233 = vunpack.c.h.b16 %v2166
    %v2234 = vunpack.c.l.b16 %v2167
    %v2235 = vunpack.c.h.b16 %v2167
    %v2236 = vunpack.c.l.b16 %v2168
    %v2237 = vunpack.c.h.b16 %v2168
    %v2238 = vunpack.c.l.b16 %v2169
    %v2239 = vunpack.c.h.b16 %v2169
    %v2240 = vunpack.c.l.b16 %v2170
    %v2241 = vunpack.c.h.b16 %v2170
    %v2242 = vunpack.c.l.b16 %v2171
    %v2243 = vunpack.c.h.b16 %v2171
    %v2244 = vunpack.c.l.b16 %v2172
    %v2245 = vunpack.c.h.b16 %v2172
    %v2246 = vunpack.c.l.b16 %v2173
    %v2247 = vunpack.c.h.b16 %v2173
    %v2248 = vunpack.c.l.b16 %v2174
    %v2249 = vunpack.c.h.b16 %v2174
    %v2250 = vunpack.c.l.b16 %v2175
    %v2251 = vunpack.c.h.b16 %v2175
    %v2252 = vunpack.c.l.b16 %v2176
    %v2253 = vunpack.c.h.b16 %v2176
    %v2254 = vunpack.c.l.b16 %v2177
    %v2255 = vunpack.c.h.b16 %v2177
    %v2256 = vunpack.c.l.b16 %v2178
    %v2257 = vunpack.c.h.b16 %v2178
    %v2258 = vunpack.c.l.b16 %v2179
    %v2259 = vunpack.c.h.b16 %v2179
    %v2260 = vunpack.c.l.b16 %v2180
    %v2261 = vunpack.c.h.b16 %v2180
    %v2262 = vunpack.c.l.b16 %v2181
    %v2263 = vunpack.c.h.b16 %v2181
    %v2264 = vunpack.c.l.b16 %v2182
    %v2265 = vunpack.c.h.b16 %v2182
    %v2266 = vunpack.c.l.b16 %v2183
    %v2267 = vunpack.c.h.b16 %v2183
    %v2268 = vunpack.c.l.b16 %v2184
    %v2269 = vunpack.c.h.b16 %v2184
    %v2270 = vunpack.c.l.b16 %v2185
    %v2271 = vunpack.c.h.b16 %v2185
    %v2272 = vunpack.c.l.b16 %v2186
    %v2273 = vunpack.c.h.b16 %v2186
    %v2274 = vunpack.c.l.b16 %v2187
    %v2275 = vunpack.c.h.b16 %v2187
    %v2276 = vunpack.c.l.b16 %v2188
    %v2277 = vunpack.c.h.b16 %v2188
    %v2278 = vunpack.c.l.b16 %v2189
    %v2279 = vunpack.c.h.b16 %v2189
    %v2280 = vunpack.c.l.b16 %v2190
    %v2281 = vunpack.c.h.b16 %v2190
    %v2282 = vunpack.c.l.b16 %v2191
    %v2283 = vunpack.c.h.b16 %v2191
    %v2284 = vunpack.c.l.b16 %v2192
    %v2285 = vunpack.c.h.b16 %v2192
    %v2286 = vunpack.c.l.b16 %v2193
    %v2287 = vunpack.c.h.b16 %v2193
    %v2288 = vunpack.c.l.b16 %v2194
    %v2289 = vunpack.c.h.b16 %v2194
    %v2290 = vunpack.c.l.b16 %v2195
    %v2291 = vunpack.c.h.b16 %v2195
    %v2292 = vpack.c.b16 %v2230, %v2228
    %v2293 = vpack.c.b16 %v2231, %v2229
    %v2294 = vpack.c.b16 %v2234, %v2232
    %v2295 = vpack.c.b16 %v2235, %v2233
    %v2296 = vpack.c.b16 %v2238, %v2236
    %v2297 = vpack.c.b16 %v2239, %v2237
    %v2298 = vpack.c.b16 %v2242, %v2240
    %v2299 = vpack.c.b16 %v2243, %v2241
    %v2300 = vpack.c.b16 %v2246, %v2244
    %v2301 = vpack.c.b16 %v2247, %v2245
    %v2302 = vpack.c.b16 %v2250, %v2248
    %v2303 = vpack.c.b16 %v2251, %v2249
    %v2304 = vpack.c.b16 %v2254, %v2252
    %v2305 = vpack.c.b16 %v2255, %v2253
    %v2306 = vpack.c.b16 %v2258, %v2256
    %v2307 = vpack.c.b16 %v2259, %v2257
    %v2308 = vpack.c.b16 %v2262, %v2260
    %v2309 = vpack.c.b16 %v2263, %v2261
    %v2310 = vpack.c.b16 %v2266, %v2264
    %v2311 = vpack.c.b16 %v2267, %v2265
    %v2312 = vpack.c.b16 %v2270, %v2268
    %v2313 = vpack.c.b16 %v2271, %v2269
    %v2314 = vpack.c.b16 %v2274, %v2272
    %v2315 = vpack.c.b16 %v2275, %v2273
    %v2316 = vpack.c.b16 %v2278, %v2276
    %v2317 = vpack.c.b16 %v2279, %v2277
    %v2318 = vpack.c.b16 %v2282, %v2280
    %v2319 = vpack.c.b16 %v2283, %v2281
    %v2320 = vpack.c.b16 %v2286, %v2284
    %v2321 = vpack.c.b16 %v2287, %v2285
    %v2322 = vpack.c.b16 %v2290, %v2288
    %v2323 = vpack.c.b16 %v2291, %v2289
    %2356 = vmatpush.bf16.msra.mxu0 %v2306
    %2357 = vmatpush.bf16.msra.mxu0 %v2304
    %2358 = vmatpush.bf16.msra.mxu0 %v2302
    %2359 = vmatpush.bf16.msra.mxu0 %v2300
    %2360 = vmatpush.bf16.msra.mxu0 %v2298
    %2361 = vmatpush.bf16.msra.mxu0 %v2296
    %2362 = vmatpush.bf16.msra.mxu0 %v2294
    %2363 = vmatpush.bf16.msra.mxu0 %v2292
    %2364 = vmatmul.bf16.gmra.mxu0 %v2160
    %v2365 = vpop.f32.mrf.mxu0
    %v2366 = vadd.f32 0.0, %v2365
    %v2367 = vpop.f32.mrf.mxu0
    %v2368 = vadd.f32 0.0, %v2367
    %2369 = vmatmul.bf16.gmra.mxu0 %v2162
    %v2370 = vpop.f32.mrf.mxu0
    %v2371 = vadd.f32 0.0, %v2370
    %v2372 = vpop.f32.mrf.mxu0
    %v2373 = vadd.f32 0.0, %v2372
    %2374 = vdwg.mxu0
    %2375 = vmatpush.bf16.msra.mxu0 %v2322
    %2376 = vmatpush.bf16.msra.mxu0 %v2320
    %2377 = vmatpush.bf16.msra.mxu0 %v2318
    %2378 = vmatpush.bf16.msra.mxu0 %v2316
    %2379 = vmatpush.bf16.msra.mxu0 %v2314
    %2380 = vmatpush.bf16.msra.mxu0 %v2312
    %2381 = vmatpush.bf16.msra.mxu0 %v2310
    %2382 = vmatpush.bf16.msra.mxu0 %v2308
    %2383 = vmatmul.bf16.gmra.mxu0 %v2161
    %v2384 = vpop.f32.mrf.mxu0
    %v2385 = vadd.f32 %v2366, %v2384
    %v2386 = vpop.f32.mrf.mxu0
    %v2387 = vadd.f32 %v2368, %v2386
    %2388 = vmatmul.bf16.gmra.mxu0 %v2163
    %v2389 = vpop.f32.mrf.mxu0
    %v2390 = vadd.f32 %v2371, %v2389
    %v2391 = vpop.f32.mrf.mxu0
    %v2392 = vadd.f32 %v2373, %v2391
    %2393 = vdwg.mxu0
    %2394 = vmatpush.bf16.msra.mxu0 %v2307
    %2395 = vmatpush.bf16.msra.mxu0 %v2305
    %2396 = vmatpush.bf16.msra.mxu0 %v2303
    %2397 = vmatpush.bf16.msra.mxu0 %v2301
    %2398 = vmatpush.bf16.msra.mxu0 %v2299
    %2399 = vmatpush.bf16.msra.mxu0 %v2297
    %2400 = vmatpush.bf16.msra.mxu0 %v2295
    %2401 = vmatpush.bf16.msra.mxu0 %v2293
    %2402 = vmatmul.bf16.gmra.mxu0 %v2160
    %v2403 = vpop.f32.mrf.mxu0
    %v2404 = vadd.f32 0.0, %v2403
    %v2405 = vpop.f32.mrf.mxu0
    %v2406 = vadd.f32 0.0, %v2405
    %2407 = vmatmul.bf16.gmra.mxu0 %v2162
    %v2408 = vpop.f32.mrf.mxu0
    %v2409 = vadd.f32 0.0, %v2408
    %v2410 = vpop.f32.mrf.mxu0
    %v2411 = vadd.f32 0.0, %v2410
    %2412 = vdwg.mxu0
    %2413 = vmatpush.bf16.msra.mxu0 %v2323
    %2414 = vmatpush.bf16.msra.mxu0 %v2321
    %2415 = vmatpush.bf16.msra.mxu0 %v2319
    %2416 = vmatpush.bf16.msra.mxu0 %v2317
    %2417 = vmatpush.bf16.msra.mxu0 %v2315
    %2418 = vmatpush.bf16.msra.mxu0 %v2313
    %2419 = vmatpush.bf16.msra.mxu0 %v2311
    %2420 = vmatpush.bf16.msra.mxu0 %v2309
    %2421 = vmatmul.bf16.gmra.mxu0 %v2161
    %v2422 = vpop.f32.mrf.mxu0
    %v2423 = vadd.f32 %v2404, %v2422
    %v2424 = vpop.f32.mrf.mxu0
    %v2425 = vadd.f32 %v2406, %v2424
    %2426 = vmatmul.bf16.gmra.mxu0 %v2163
    %v2427 = vpop.f32.mrf.mxu0
    %v2428 = vadd.f32 %v2409, %v2427
    %v2429 = vpop.f32.mrf.mxu0
    %v2430 = vadd.f32 %v2411, %v2429
    %2431 = vdwg.mxu0
    %v2464 = vunpack.c.l.b16 %v2128
    %v2465 = vunpack.c.h.b16 %v2128
    %v2466 = vunpack.c.l.b16 %v2129
    %v2467 = vunpack.c.h.b16 %v2129
    %v2468 = vunpack.c.l.b16 %v2130
    %v2469 = vunpack.c.h.b16 %v2130
    %v2470 = vunpack.c.l.b16 %v2131
    %v2471 = vunpack.c.h.b16 %v2131
    %v2472 = vunpack.c.l.b16 %v2132
    %v2473 = vunpack.c.h.b16 %v2132
    %v2474 = vunpack.c.l.b16 %v2133
    %v2475 = vunpack.c.h.b16 %v2133
    %v2476 = vunpack.c.l.b16 %v2134
    %v2477 = vunpack.c.h.b16 %v2134
    %v2478 = vunpack.c.l.b16 %v2135
    %v2479 = vunpack.c.h.b16 %v2135
    %v2480 = vunpack.c.l.b16 %v2136
    %v2481 = vunpack.c.h.b16 %v2136
    %v2482 = vunpack.c.l.b16 %v2137
    %v2483 = vunpack.c.h.b16 %v2137
    %v2484 = vunpack.c.l.b16 %v2138
    %v2485 = vunpack.c.h.b16 %v2138
    %v2486 = vunpack.c.l.b16 %v2139
    %v2487 = vunpack.c.h.b16 %v2139
    %v2488 = vunpack.c.l.b16 %v2140
    %v2489 = vunpack.c.h.b16 %v2140
    %v2490 = vunpack.c.l.b16 %v2141
    %v2491 = vunpack.c.h.b16 %v2141
    %v2492 = vunpack.c.l.b16 %v2142
    %v2493 = vunpack.c.h.b16 %v2142
    %v2494 = vunpack.c.l.b16 %v2143
    %v2495 = vunpack.c.h.b16 %v2143
    %v2496 = vunpack.c.l.b16 %v2144
    %v2497 = vunpack.c.h.b16 %v2144
    %v2498 = vunpack.c.l.b16 %v2145
    %v2499 = vunpack.c.h.b16 %v2145
    %v2500 = vunpack.c.l.b16 %v2146
    %v2501 = vunpack.c.h.b16 %v2146
    %v2502 = vunpack.c.l.b16 %v2147
    %v2503 = vunpack.c.h.b16 %v2147
    %v2504 = vunpack.c.l.b16 %v2148
    %v2505 = vunpack.c.h.b16 %v2148
    %v2506 = vunpack.c.l.b16 %v2149
    %v2507 = vunpack.c.h.b16 %v2149
    %v2508 = vunpack.c.l.b16 %v2150
    %v2509 = vunpack.c.h.b16 %v2150
    %v2510 = vunpack.c.l.b16 %v2151
    %v2511 = vunpack.c.h.b16 %v2151
    %v2512 = vunpack.c.l.b16 %v2152
    %v2513 = vunpack.c.h.b16 %v2152
    %v2514 = vunpack.c.l.b16 %v2153
    %v2515 = vunpack.c.h.b16 %v2153
    %v2516 = vunpack.c.l.b16 %v2154
    %v2517 = vunpack.c.h.b16 %v2154
    %v2518 = vunpack.c.l.b16 %v2155
    %v2519 = vunpack.c.h.b16 %v2155
    %v2520 = vunpack.c.l.b16 %v2156
    %v2521 = vunpack.c.h.b16 %v2156
    %v2522 = vunpack.c.l.b16 %v2157
    %v2523 = vunpack.c.h.b16 %v2157
    %v2524 = vunpack.c.l.b16 %v2158
    %v2525 = vunpack.c.h.b16 %v2158
    %v2526 = vunpack.c.l.b16 %v2159
    %v2527 = vunpack.c.h.b16 %v2159
    %v2528 = vpack.c.b16 %v2466, %v2464
    %v2529 = vpack.c.b16 %v2467, %v2465
    %v2530 = vpack.c.b16 %v2470, %v2468
    %v2531 = vpack.c.b16 %v2471, %v2469
    %v2532 = vpack.c.b16 %v2474, %v2472
    %v2533 = vpack.c.b16 %v2475, %v2473
    %v2534 = vpack.c.b16 %v2478, %v2476
    %v2535 = vpack.c.b16 %v2479, %v2477
    %v2536 = vpack.c.b16 %v2482, %v2480
    %v2537 = vpack.c.b16 %v2483, %v2481
    %v2538 = vpack.c.b16 %v2486, %v2484
    %v2539 = vpack.c.b16 %v2487, %v2485
    %v2540 = vpack.c.b16 %v2490, %v2488
    %v2541 = vpack.c.b16 %v2491, %v2489
    %v2542 = vpack.c.b16 %v2494, %v2492
    %v2543 = vpack.c.b16 %v2495, %v2493
    %v2544 = vpack.c.b16 %v2498, %v2496
    %v2545 = vpack.c.b16 %v2499, %v2497
    %v2546 = vpack.c.b16 %v2502, %v2500
    %v2547 = vpack.c.b16 %v2503, %v2501
    %v2548 = vpack.c.b16 %v2506, %v2504
    %v2549 = vpack.c.b16 %v2507, %v2505
    %v2550 = vpack.c.b16 %v2510, %v2508
    %v2551 = vpack.c.b16 %v2511, %v2509
    %v2552 = vpack.c.b16 %v2514, %v2512
    %v2553 = vpack.c.b16 %v2515, %v2513
    %v2554 = vpack.c.b16 %v2518, %v2516
    %v2555 = vpack.c.b16 %v2519, %v2517
    %v2556 = vpack.c.b16 %v2522, %v2520
    %v2557 = vpack.c.b16 %v2523, %v2521
    %v2558 = vpack.c.b16 %v2526, %v2524
    %v2559 = vpack.c.b16 %v2527, %v2525
    %2592 = vmatpush.bf16.msra.mxu0 %v2542
    %2593 = vmatpush.bf16.msra.mxu0 %v2540
    %2594 = vmatpush.bf16.msra.mxu0 %v2538
    %2595 = vmatpush.bf16.msra.mxu0 %v2536
    %2596 = vmatpush.bf16.msra.mxu0 %v2534
    %2597 = vmatpush.bf16.msra.mxu0 %v2532
    %2598 = vmatpush.bf16.msra.mxu0 %v2530
    %2599 = vmatpush.bf16.msra.mxu0 %v2528
    %2600 = vmatmul.bf16.gmra.mxu0 %v2124
    %v2601 = vpop.f32.mrf.mxu0
    %v2602 = vadd.f32 %v2385, %v2601
    %v2603 = vpop.f32.mrf.mxu0
    %v2604 = vadd.f32 %v2387, %v2603
    %2605 = vmatmul.bf16.gmra.mxu0 %v2126
    %v2606 = vpop.f32.mrf.mxu0
    %v2607 = vadd.f32 %v2390, %v2606
    %v2608 = vpop.f32.mrf.mxu0
    %v2609 = vadd.f32 %v2392, %v2608
    %2610 = vdwg.mxu0
    %2611 = vmatpush.bf16.msra.mxu0 %v2558
    %2612 = vmatpush.bf16.msra.mxu0 %v2556
    %2613 = vmatpush.bf16.msra.mxu0 %v2554
    %2614 = vmatpush.bf16.msra.mxu0 %v2552
    %2615 = vmatpush.bf16.msra.mxu0 %v2550
    %2616 = vmatpush.bf16.msra.mxu0 %v2548
    %2617 = vmatpush.bf16.msra.mxu0 %v2546
    %2618 = vmatpush.bf16.msra.mxu0 %v2544
    %2619 = vmatmul.bf16.gmra.mxu0 %v2125
    %v2620 = vpop.f32.mrf.mxu0
    %v2621 = vadd.f32 %v2602, %v2620
    %v2622 = vpop.f32.mrf.mxu0
    %v2623 = vadd.f32 %v2604, %v2622
    %2624 = vmatmul.bf16.gmra.mxu0 %v2127
    %v2625 = vpop.f32.mrf.mxu0
    %v2626 = vadd.f32 %v2607, %v2625
    %v2627 = vpop.f32.mrf.mxu0
    %v2628 = vadd.f32 %v2609, %v2627
    %2629 = vdwg.mxu0
    %2630 = vmatpush.bf16.msra.mxu0 %v2543
    %2631 = vmatpush.bf16.msra.mxu0 %v2541
    %2632 = vmatpush.bf16.msra.mxu0 %v2539
    %2633 = vmatpush.bf16.msra.mxu0 %v2537
    %2634 = vmatpush.bf16.msra.mxu0 %v2535
    %2635 = vmatpush.bf16.msra.mxu0 %v2533
    %2636 = vmatpush.bf16.msra.mxu0 %v2531
    %2637 = vmatpush.bf16.msra.mxu0 %v2529
    %2638 = vmatmul.bf16.gmra.mxu0 %v2124
    %v2639 = vpop.f32.mrf.mxu0
    %v2640 = vadd.f32 %v2423, %v2639
    %v2641 = vpop.f32.mrf.mxu0
    %v2642 = vadd.f32 %v2425, %v2641
    %2643 = vmatmul.bf16.gmra.mxu0 %v2126
    %v2644 = vpop.f32.mrf.mxu0
    %v2645 = vadd.f32 %v2428, %v2644
    %v2646 = vpop.f32.mrf.mxu0
    %v2647 = vadd.f32 %v2430, %v2646
    %2648 = vdwg.mxu0
    %2649 = vmatpush.bf16.msra.mxu0 %v2559
    %2650 = vmatpush.bf16.msra.mxu0 %v2557
    %2651 = vmatpush.bf16.msra.mxu0 %v2555
    %2652 = vmatpush.bf16.msra.mxu0 %v2553
    %2653 = vmatpush.bf16.msra.mxu0 %v2551
    %2654 = vmatpush.bf16.msra.mxu0 %v2549
    %2655 = vmatpush.bf16.msra.mxu0 %v2547
    %2656 = vmatpush.bf16.msra.mxu0 %v2545
    %2657 = vmatmul.bf16.gmra.mxu0 %v2125
    %v2658 = vpop.f32.mrf.mxu0
    %v2659 = vadd.f32 %v2640, %v2658
    %v2660 = vpop.f32.mrf.mxu0
    %v2661 = vadd.f32 %v2642, %v2660
    %2662 = vmatmul.bf16.gmra.mxu0 %v2127
    %v2663 = vpop.f32.mrf.mxu0
    %v2664 = vadd.f32 %v2645, %v2663
    %v2665 = vpop.f32.mrf.mxu0
    %v2666 = vadd.f32 %v2647, %v2665
    %2667 = vdwg.mxu0
    %v2669 = vperm.slane %v2123, 0
    %v2670 = vperm.slane %v2123, 1
    %v2673 = vadd.f32 %v2621, %v2669
    %v2674 = vadd.f32 %v2659, %v2670
    %v2675 = vadd.f32 %v2623, %v2669
    %v2676 = vadd.f32 %v2661, %v2670
    %v2677 = vadd.f32 %v2626, %v2669
    %v2678 = vadd.f32 %v2664, %v2670
    %v2679 = vadd.f32 %v2628, %v2669
    %v2680 = vadd.f32 %v2666, %v2670
    %v2681 = vmax.f32 %v2673, 0.0
    %v2682 = vmax.f32 %v2674, 0.0
    %v2683 = vmax.f32 %v2675, 0.0
    %v2684 = vmax.f32 %v2676, 0.0
    %v2685 = vmax.f32 %v2677, 0.0
    %v2686 = vmax.f32 %v2678, 0.0
    %v2687 = vmax.f32 %v2679, 0.0
    %v2688 = vmax.f32 %v2680, 0.0
    %s2689 = scalar_lea.vmem [#allocation7], 32
    %v2690 = vld [vmem:[%s2689] ss:$8 sm:$0x3]
    %s2691 = scalar_lea.vmem [#allocation7], 33
    %v2692 = vld [vmem:[%s2691] ss:$8 sm:$0x3]
    %v2693 = vadd.f32 %v2681, %v2682
    %2694 = vadd.xlane.f32.xlu0 %v2693
    %v2695 = vpop.xlane.xlu0 %2694
    %v2696 = vadd.f32 %v2683, %v2684
    %2697 = vadd.xlane.f32.xlu0 %v2696
    %v2698 = vpop.xlane.xlu0 %2697
    %v2699 = vadd.f32 %v2685, %v2686
    %2700 = vadd.xlane.f32.xlu0 %v2699
    %v2701 = vpop.xlane.xlu0 %2700
    %v2702 = vadd.f32 %v2687, %v2688
    %2703 = vadd.xlane.f32.xlu0 %v2702
    %v2704 = vpop.xlane.xlu0 %2703
    %v2705 = vrcp.pop 256.0
    %v2706 = vmul.f32 256.0, %v2705
    %v2707 = vsub.f32 1.0, %v2706
    %v2708 = vmul.f32 %v2705, %v2707
    %v2709 = vadd.f32 %v2705, %v2708
    %vm2710 = vweird.f32 %v2705
    %v2711 = vsel %vm2710, %v2705, %v2709
    %v2712 = vmul.f32 %v2695, %v2711
    %v2713 = vmul.f32 %v2698, %v2711
    %v2714 = vmul.f32 %v2701, %v2711
    %v2715 = vmul.f32 %v2704, %v2711
    %v2716 = vsub.f32 %v2681, %v2712
    %v2717 = vsub.f32 %v2682, %v2712
    %v2718 = vsub.f32 %v2683, %v2713
    %v2719 = vsub.f32 %v2684, %v2713
    %v2720 = vsub.f32 %v2685, %v2714
    %v2721 = vsub.f32 %v2686, %v2714
    %v2722 = vsub.f32 %v2687, %v2715
    %v2723 = vsub.f32 %v2688, %v2715
    %v2724 = vmul.f32 %v2716, %v2716
    %v2725 = vmul.f32 %v2717, %v2717
    %v2726 = vmul.f32 %v2718, %v2718
    %v2727 = vmul.f32 %v2719, %v2719
    %v2728 = vmul.f32 %v2720, %v2720
    %v2729 = vmul.f32 %v2721, %v2721
    %v2730 = vmul.f32 %v2722, %v2722
    %v2731 = vmul.f32 %v2723, %v2723
    %v2732 = vadd.f32 %v2724, %v2725
    %2733 = vadd.xlane.f32.xlu0 %v2732
    %v2734 = vpop.xlane.xlu0 %2733
    %v2735 = vadd.f32 %v2726, %v2727
    %2736 = vadd.xlane.f32.xlu0 %v2735
    %v2737 = vpop.xlane.xlu0 %2736
    %v2738 = vadd.f32 %v2728, %v2729
    %2739 = vadd.xlane.f32.xlu0 %v2738
    %v2740 = vpop.xlane.xlu0 %2739
    %v2741 = vadd.f32 %v2730, %v2731
    %2742 = vadd.xlane.f32.xlu0 %v2741
    %v2743 = vpop.xlane.xlu0 %2742
    %v2744 = vmul.f32 %v2734, %v2711
    %v2745 = vmul.f32 %v2737, %v2711
    %v2746 = vmul.f32 %v2740, %v2711
    %v2747 = vmul.f32 %v2743, %v2711
    %v2748 = vadd.f32 %v2744, 1e-05
    %v2749 = vadd.f32 %v2745, 1e-05
    %v2750 = vadd.f32 %v2746, 1e-05
    %v2751 = vadd.f32 %v2747, 1e-05
    %v2752 = vrsqrt.pop %v2748
    %v2753 = vmul.f32 %v2752, %v2748
    %v2754 = vmul.f32 %v2753, %v2752
    %v2755 = vmul.f32 0.5, %v2754
    %v2756 = vsub.f32 1.5, %v2755
    %v2757 = vmul.f32 %v2752, %v2756
    %vm2758 = vweird.f32 %v2748
    %vm2759 = vweird.f32 %v2752
    %vm2760 = vmor %vm2758, %vm2759
    %v2761 = vsel %vm2760, %v2752, %v2757
    %v2762 = vrsqrt.pop %v2749
    %v2763 = vmul.f32 %v2762, %v2749
    %v2764 = vmul.f32 %v2763, %v2762
    %v2765 = vmul.f32 0.5, %v2764
    %v2766 = vsub.f32 1.5, %v2765
    %v2767 = vmul.f32 %v2762, %v2766
    %vm2768 = vweird.f32 %v2749
    %vm2769 = vweird.f32 %v2762
    %vm2770 = vmor %vm2768, %vm2769
    %v2771 = vsel %vm2770, %v2762, %v2767
    %v2772 = vrsqrt.pop %v2750
    %v2773 = vmul.f32 %v2772, %v2750
    %v2774 = vmul.f32 %v2773, %v2772
    %v2775 = vmul.f32 0.5, %v2774
    %v2776 = vsub.f32 1.5, %v2775
    %v2777 = vmul.f32 %v2772, %v2776
    %vm2778 = vweird.f32 %v2750
    %vm2779 = vweird.f32 %v2772
    %vm2780 = vmor %vm2778, %vm2779
    %v2781 = vsel %vm2780, %v2772, %v2777
    %v2782 = vrsqrt.pop %v2751
    %v2783 = vmul.f32 %v2782, %v2751
    %v2784 = vmul.f32 %v2783, %v2782
    %v2785 = vmul.f32 0.5, %v2784
    %v2786 = vsub.f32 1.5, %v2785
    %v2787 = vmul.f32 %v2782, %v2786
    %vm2788 = vweird.f32 %v2751
    %vm2789 = vweird.f32 %v2782
    %vm2790 = vmor %vm2788, %vm2789
    %v2791 = vsel %vm2790, %v2782, %v2787
    %v2792 = vmul.f32 %v2716, %v2761
    %v2793 = vmul.f32 %v2717, %v2761
    %v2794 = vmul.f32 %v2718, %v2771
    %v2795 = vmul.f32 %v2719, %v2771
    %v2796 = vmul.f32 %v2720, %v2781
    %v2797 = vmul.f32 %v2721, %v2781
    %v2798 = vmul.f32 %v2722, %v2791
    %v2799 = vmul.f32 %v2723, %v2791
    %v2801 = vperm.slane %v2690, 0
    %v2802 = vperm.slane %v2690, 1
    %v2805 = vmul.f32 %v2792, %v2801
    %v2806 = vmul.f32 %v2793, %v2802
    %v2807 = vmul.f32 %v2794, %v2801
    %v2808 = vmul.f32 %v2795, %v2802
    %v2809 = vmul.f32 %v2796, %v2801
    %v2810 = vmul.f32 %v2797, %v2802
    %v2811 = vmul.f32 %v2798, %v2801
    %v2812 = vmul.f32 %v2799, %v2802
    %v2814 = vperm.slane %v2692, 0
    %v2815 = vperm.slane %v2692, 1
    %v2818 = vadd.f32 %v2805, %v2814
    %v2819 = vadd.f32 %v2806, %v2815
    %v2820 = vadd.f32 %v2807, %v2814
    %v2821 = vadd.f32 %v2808, %v2815
    %v2822 = vadd.f32 %v2809, %v2814
    %v2823 = vadd.f32 %v2810, %v2815
    %v2824 = vadd.f32 %v2811, %v2814
    %v2825 = vadd.f32 %v2812, %v2815
    %s2826 = scalar_lea.vmem [#allocation7], 34
    %v2827 = vld [vmem:[%s2826] ss:$8 sm:$0xf]
    %v2828 = vpack.c.bf16 %v2818, %v2818
    %v2829 = vpack.c.bf16 %v2819, %v2819
    %v2830 = vpack.c.bf16 %v2820, %v2820
    %v2831 = vpack.c.bf16 %v2821, %v2821
    %v2832 = vpack.c.bf16 %v2822, %v2822
    %v2833 = vpack.c.bf16 %v2823, %v2823
    %v2834 = vpack.c.bf16 %v2824, %v2824
    %v2835 = vpack.c.bf16 %v2825, %v2825
    %v2836 = vld [vmem:[#allocation6 + $0x200] sm:$0xff]
    %v2837 = vld [vmem:[#allocation6 + $0x208] sm:$0xff]
    %v2838 = vld [vmem:[#allocation6 + $0x210] sm:$0xff]
    %v2839 = vld [vmem:[#allocation6 + $0x218] sm:$0xff]
    %v2840 = vld [vmem:[#allocation6 + $0x220] sm:$0xff]
    %v2841 = vld [vmem:[#allocation6 + $0x228] sm:$0xff]
    %v2842 = vld [vmem:[#allocation6 + $0x230] sm:$0xff]
    %v2843 = vld [vmem:[#allocation6 + $0x238] sm:$0xff]
    %v2844 = vld [vmem:[#allocation6 + $0x240] sm:$0xff]
    %v2845 = vld [vmem:[#allocation6 + $0x248] sm:$0xff]
    %v2846 = vld [vmem:[#allocation6 + $0x250] sm:$0xff]
    %v2847 = vld [vmem:[#allocation6 + $0x258] sm:$0xff]
    %v2848 = vld [vmem:[#allocation6 + $0x260] sm:$0xff]
    %v2849 = vld [vmem:[#allocation6 + $0x268] sm:$0xff]
    %v2850 = vld [vmem:[#allocation6 + $0x270] sm:$0xff]
    %v2851 = vld [vmem:[#allocation6 + $0x278] sm:$0xff]
    %v2852 = vld [vmem:[#allocation6 + $0x280] sm:$0xff]
    %v2853 = vld [vmem:[#allocation6 + $0x288] sm:$0xff]
    %v2854 = vld [vmem:[#allocation6 + $0x290] sm:$0xff]
    %v2855 = vld [vmem:[#allocation6 + $0x298] sm:$0xff]
    %v2856 = vld [vmem:[#allocation6 + $0x2a0] sm:$0xff]
    %v2857 = vld [vmem:[#allocation6 + $0x2a8] sm:$0xff]
    %v2858 = vld [vmem:[#allocation6 + $0x2b0] sm:$0xff]
    %v2859 = vld [vmem:[#allocation6 + $0x2b8] sm:$0xff]
    %v2860 = vld [vmem:[#allocation6 + $0x2c0] sm:$0xff]
    %v2861 = vld [vmem:[#allocation6 + $0x2c8] sm:$0xff]
    %v2862 = vld [vmem:[#allocation6 + $0x2d0] sm:$0xff]
    %v2863 = vld [vmem:[#allocation6 + $0x2d8] sm:$0xff]
    %v2864 = vld [vmem:[#allocation6 + $0x2e0] sm:$0xff]
    %v2865 = vld [vmem:[#allocation6 + $0x2e8] sm:$0xff]
    %v2866 = vld [vmem:[#allocation6 + $0x2f0] sm:$0xff]
    %v2867 = vld [vmem:[#allocation6 + $0x2f8] sm:$0xff]
    %v2868 = vld [vmem:[#allocation6 + $0x300] sm:$0xff]
    %v2869 = vld [vmem:[#allocation6 + $0x308] sm:$0xff]
    %v2870 = vld [vmem:[#allocation6 + $0x310] sm:$0xff]
    %v2871 = vld [vmem:[#allocation6 + $0x318] sm:$0xff]
    %v2872 = vld [vmem:[#allocation6 + $0x320] sm:$0xff]
    %v2873 = vld [vmem:[#allocation6 + $0x328] sm:$0xff]
    %v2874 = vld [vmem:[#allocation6 + $0x330] sm:$0xff]
    %v2875 = vld [vmem:[#allocation6 + $0x338] sm:$0xff]
    %v2876 = vld [vmem:[#allocation6 + $0x340] sm:$0xff]
    %v2877 = vld [vmem:[#allocation6 + $0x348] sm:$0xff]
    %v2878 = vld [vmem:[#allocation6 + $0x350] sm:$0xff]
    %v2879 = vld [vmem:[#allocation6 + $0x358] sm:$0xff]
    %v2880 = vld [vmem:[#allocation6 + $0x360] sm:$0xff]
    %v2881 = vld [vmem:[#allocation6 + $0x368] sm:$0xff]
    %v2882 = vld [vmem:[#allocation6 + $0x370] sm:$0xff]
    %v2883 = vld [vmem:[#allocation6 + $0x378] sm:$0xff]
    %v2884 = vld [vmem:[#allocation6 + $0x380] sm:$0xff]
    %v2885 = vld [vmem:[#allocation6 + $0x388] sm:$0xff]
    %v2886 = vld [vmem:[#allocation6 + $0x390] sm:$0xff]
    %v2887 = vld [vmem:[#allocation6 + $0x398] sm:$0xff]
    %v2888 = vld [vmem:[#allocation6 + $0x3a0] sm:$0xff]
    %v2889 = vld [vmem:[#allocation6 + $0x3a8] sm:$0xff]
    %v2890 = vld [vmem:[#allocation6 + $0x3b0] sm:$0xff]
    %v2891 = vld [vmem:[#allocation6 + $0x3b8] sm:$0xff]
    %v2892 = vld [vmem:[#allocation6 + $0x3c0] sm:$0xff]
    %v2893 = vld [vmem:[#allocation6 + $0x3c8] sm:$0xff]
    %v2894 = vld [vmem:[#allocation6 + $0x3d0] sm:$0xff]
    %v2895 = vld [vmem:[#allocation6 + $0x3d8] sm:$0xff]
    %v2896 = vld [vmem:[#allocation6 + $0x3e0] sm:$0xff]
    %v2897 = vld [vmem:[#allocation6 + $0x3e8] sm:$0xff]
    %v2898 = vld [vmem:[#allocation6 + $0x3f0] sm:$0xff]
    %v2899 = vld [vmem:[#allocation6 + $0x3f8] sm:$0xff]
    %v2900 = vld [vmem:[#allocation6 + $0x400] sm:$0xff]
    %v2901 = vld [vmem:[#allocation6 + $0x408] sm:$0xff]
    %v2902 = vld [vmem:[#allocation6 + $0x410] sm:$0xff]
    %v2903 = vld [vmem:[#allocation6 + $0x418] sm:$0xff]
    %v2904 = vld [vmem:[#allocation6 + $0x420] sm:$0xff]
    %v2905 = vld [vmem:[#allocation6 + $0x428] sm:$0xff]
    %v2906 = vld [vmem:[#allocation6 + $0x430] sm:$0xff]
    %v2907 = vld [vmem:[#allocation6 + $0x438] sm:$0xff]
    %v2908 = vld [vmem:[#allocation6 + $0x440] sm:$0xff]
    %v2909 = vld [vmem:[#allocation6 + $0x448] sm:$0xff]
    %v2910 = vld [vmem:[#allocation6 + $0x450] sm:$0xff]
    %v2911 = vld [vmem:[#allocation6 + $0x458] sm:$0xff]
    %v2912 = vld [vmem:[#allocation6 + $0x460] sm:$0xff]
    %v2913 = vld [vmem:[#allocation6 + $0x468] sm:$0xff]
    %v2914 = vld [vmem:[#allocation6 + $0x470] sm:$0xff]
    %v2915 = vld [vmem:[#allocation6 + $0x478] sm:$0xff]
    %v2916 = vld [vmem:[#allocation6 + $0x480] sm:$0xff]
    %v2917 = vld [vmem:[#allocation6 + $0x488] sm:$0xff]
    %v2918 = vld [vmem:[#allocation6 + $0x490] sm:$0xff]
    %v2919 = vld [vmem:[#allocation6 + $0x498] sm:$0xff]
    %v2920 = vld [vmem:[#allocation6 + $0x4a0] sm:$0xff]
    %v2921 = vld [vmem:[#allocation6 + $0x4a8] sm:$0xff]
    %v2922 = vld [vmem:[#allocation6 + $0x4b0] sm:$0xff]
    %v2923 = vld [vmem:[#allocation6 + $0x4b8] sm:$0xff]
    %v2924 = vld [vmem:[#allocation6 + $0x4c0] sm:$0xff]
    %v2925 = vld [vmem:[#allocation6 + $0x4c8] sm:$0xff]
    %v2926 = vld [vmem:[#allocation6 + $0x4d0] sm:$0xff]
    %v2927 = vld [vmem:[#allocation6 + $0x4d8] sm:$0xff]
    %v2928 = vld [vmem:[#allocation6 + $0x4e0] sm:$0xff]
    %v2929 = vld [vmem:[#allocation6 + $0x4e8] sm:$0xff]
    %v2930 = vld [vmem:[#allocation6 + $0x4f0] sm:$0xff]
    %v2931 = vld [vmem:[#allocation6 + $0x4f8] sm:$0xff]
    %v2932 = vld [vmem:[#allocation6 + $0x500] sm:$0xff]
    %v2933 = vld [vmem:[#allocation6 + $0x508] sm:$0xff]
    %v2934 = vld [vmem:[#allocation6 + $0x510] sm:$0xff]
    %v2935 = vld [vmem:[#allocation6 + $0x518] sm:$0xff]
    %v2936 = vld [vmem:[#allocation6 + $0x520] sm:$0xff]
    %v2937 = vld [vmem:[#allocation6 + $0x528] sm:$0xff]
    %v2938 = vld [vmem:[#allocation6 + $0x530] sm:$0xff]
    %v2939 = vld [vmem:[#allocation6 + $0x538] sm:$0xff]
    %v2940 = vld [vmem:[#allocation6 + $0x540] sm:$0xff]
    %v2941 = vld [vmem:[#allocation6 + $0x548] sm:$0xff]
    %v2942 = vld [vmem:[#allocation6 + $0x550] sm:$0xff]
    %v2943 = vld [vmem:[#allocation6 + $0x558] sm:$0xff]
    %v2944 = vld [vmem:[#allocation6 + $0x560] sm:$0xff]
    %v2945 = vld [vmem:[#allocation6 + $0x568] sm:$0xff]
    %v2946 = vld [vmem:[#allocation6 + $0x570] sm:$0xff]
    %v2947 = vld [vmem:[#allocation6 + $0x578] sm:$0xff]
    %v2948 = vld [vmem:[#allocation6 + $0x580] sm:$0xff]
    %v2949 = vld [vmem:[#allocation6 + $0x588] sm:$0xff]
    %v2950 = vld [vmem:[#allocation6 + $0x590] sm:$0xff]
    %v2951 = vld [vmem:[#allocation6 + $0x598] sm:$0xff]
    %v2952 = vld [vmem:[#allocation6 + $0x5a0] sm:$0xff]
    %v2953 = vld [vmem:[#allocation6 + $0x5a8] sm:$0xff]
    %v2954 = vld [vmem:[#allocation6 + $0x5b0] sm:$0xff]
    %v2955 = vld [vmem:[#allocation6 + $0x5b8] sm:$0xff]
    %v2956 = vld [vmem:[#allocation6 + $0x5c0] sm:$0xff]
    %v2957 = vld [vmem:[#allocation6 + $0x5c8] sm:$0xff]
    %v2958 = vld [vmem:[#allocation6 + $0x5d0] sm:$0xff]
    %v2959 = vld [vmem:[#allocation6 + $0x5d8] sm:$0xff]
    %v2960 = vld [vmem:[#allocation6 + $0x5e0] sm:$0xff]
    %v2961 = vld [vmem:[#allocation6 + $0x5e8] sm:$0xff]
    %v2962 = vld [vmem:[#allocation6 + $0x5f0] sm:$0xff]
    %v2963 = vld [vmem:[#allocation6 + $0x5f8] sm:$0xff]
    %v2964 = vld [vmem:[#allocation6 + $0x600] sm:$0xff]
    %v2965 = vld [vmem:[#allocation6 + $0x608] sm:$0xff]
    %v2966 = vld [vmem:[#allocation6 + $0x610] sm:$0xff]
    %v2967 = vld [vmem:[#allocation6 + $0x618] sm:$0xff]
    %v2968 = vld [vmem:[#allocation6 + $0x620] sm:$0xff]
    %v2969 = vld [vmem:[#allocation6 + $0x628] sm:$0xff]
    %v2970 = vld [vmem:[#allocation6 + $0x630] sm:$0xff]
    %v2971 = vld [vmem:[#allocation6 + $0x638] sm:$0xff]
    %v2972 = vld [vmem:[#allocation6 + $0x640] sm:$0xff]
    %v2973 = vld [vmem:[#allocation6 + $0x648] sm:$0xff]
    %v2974 = vld [vmem:[#allocation6 + $0x650] sm:$0xff]
    %v2975 = vld [vmem:[#allocation6 + $0x658] sm:$0xff]
    %v2976 = vld [vmem:[#allocation6 + $0x660] sm:$0xff]
    %v2977 = vld [vmem:[#allocation6 + $0x668] sm:$0xff]
    %v2978 = vld [vmem:[#allocation6 + $0x670] sm:$0xff]
    %v2979 = vld [vmem:[#allocation6 + $0x678] sm:$0xff]
    %v2980 = vld [vmem:[#allocation6 + $0x680] sm:$0xff]
    %v2981 = vld [vmem:[#allocation6 + $0x688] sm:$0xff]
    %v2982 = vld [vmem:[#allocation6 + $0x690] sm:$0xff]
    %v2983 = vld [vmem:[#allocation6 + $0x698] sm:$0xff]
    %v2984 = vld [vmem:[#allocation6 + $0x6a0] sm:$0xff]
    %v2985 = vld [vmem:[#allocation6 + $0x6a8] sm:$0xff]
    %v2986 = vld [vmem:[#allocation6 + $0x6b0] sm:$0xff]
    %v2987 = vld [vmem:[#allocation6 + $0x6b8] sm:$0xff]
    %v2988 = vld [vmem:[#allocation6 + $0x6c0] sm:$0xff]
    %v2989 = vld [vmem:[#allocation6 + $0x6c8] sm:$0xff]
    %v2990 = vld [vmem:[#allocation6 + $0x6d0] sm:$0xff]
    %v2991 = vld [vmem:[#allocation6 + $0x6d8] sm:$0xff]
    %v2992 = vld [vmem:[#allocation6 + $0x6e0] sm:$0xff]
    %v2993 = vld [vmem:[#allocation6 + $0x6e8] sm:$0xff]
    %v2994 = vld [vmem:[#allocation6 + $0x6f0] sm:$0xff]
    %v2995 = vld [vmem:[#allocation6 + $0x6f8] sm:$0xff]
    %v2996 = vld [vmem:[#allocation6 + $0x700] sm:$0xff]
    %v2997 = vld [vmem:[#allocation6 + $0x708] sm:$0xff]
    %v2998 = vld [vmem:[#allocation6 + $0x710] sm:$0xff]
    %v2999 = vld [vmem:[#allocation6 + $0x718] sm:$0xff]
    %v3000 = vld [vmem:[#allocation6 + $0x720] sm:$0xff]
    %v3001 = vld [vmem:[#allocation6 + $0x728] sm:$0xff]
    %v3002 = vld [vmem:[#allocation6 + $0x730] sm:$0xff]
    %v3003 = vld [vmem:[#allocation6 + $0x738] sm:$0xff]
    %v3004 = vld [vmem:[#allocation6 + $0x740] sm:$0xff]
    %v3005 = vld [vmem:[#allocation6 + $0x748] sm:$0xff]
    %v3006 = vld [vmem:[#allocation6 + $0x750] sm:$0xff]
    %v3007 = vld [vmem:[#allocation6 + $0x758] sm:$0xff]
    %v3008 = vld [vmem:[#allocation6 + $0x760] sm:$0xff]
    %v3009 = vld [vmem:[#allocation6 + $0x768] sm:$0xff]
    %v3010 = vld [vmem:[#allocation6 + $0x770] sm:$0xff]
    %v3011 = vld [vmem:[#allocation6 + $0x778] sm:$0xff]
    %v3012 = vld [vmem:[#allocation6 + $0x780] sm:$0xff]
    %v3013 = vld [vmem:[#allocation6 + $0x788] sm:$0xff]
    %v3014 = vld [vmem:[#allocation6 + $0x790] sm:$0xff]
    %v3015 = vld [vmem:[#allocation6 + $0x798] sm:$0xff]
    %v3016 = vld [vmem:[#allocation6 + $0x7a0] sm:$0xff]
    %v3017 = vld [vmem:[#allocation6 + $0x7a8] sm:$0xff]
    %v3018 = vld [vmem:[#allocation6 + $0x7b0] sm:$0xff]
    %v3019 = vld [vmem:[#allocation6 + $0x7b8] sm:$0xff]
    %v3020 = vld [vmem:[#allocation6 + $0x7c0] sm:$0xff]
    %v3021 = vld [vmem:[#allocation6 + $0x7c8] sm:$0xff]
    %v3022 = vld [vmem:[#allocation6 + $0x7d0] sm:$0xff]
    %v3023 = vld [vmem:[#allocation6 + $0x7d8] sm:$0xff]
    %v3024 = vld [vmem:[#allocation6 + $0x7e0] sm:$0xff]
    %v3025 = vld [vmem:[#allocation6 + $0x7e8] sm:$0xff]
    %v3026 = vld [vmem:[#allocation6 + $0x7f0] sm:$0xff]
    %v3027 = vld [vmem:[#allocation6 + $0x7f8] sm:$0xff]
    %v3028 = vld [vmem:[#allocation6 + $0x800] sm:$0xff]
    %v3029 = vld [vmem:[#allocation6 + $0x808] sm:$0xff]
    %v3030 = vld [vmem:[#allocation6 + $0x810] sm:$0xff]
    %v3031 = vld [vmem:[#allocation6 + $0x818] sm:$0xff]
    %v3032 = vld [vmem:[#allocation6 + $0x820] sm:$0xff]
    %v3033 = vld [vmem:[#allocation6 + $0x828] sm:$0xff]
    %v3034 = vld [vmem:[#allocation6 + $0x830] sm:$0xff]
    %v3035 = vld [vmem:[#allocation6 + $0x838] sm:$0xff]
    %v3036 = vld [vmem:[#allocation6 + $0x840] sm:$0xff]
    %v3037 = vld [vmem:[#allocation6 + $0x848] sm:$0xff]
    %v3038 = vld [vmem:[#allocation6 + $0x850] sm:$0xff]
    %v3039 = vld [vmem:[#allocation6 + $0x858] sm:$0xff]
    %v3040 = vld [vmem:[#allocation6 + $0x860] sm:$0xff]
    %v3041 = vld [vmem:[#allocation6 + $0x868] sm:$0xff]
    %v3042 = vld [vmem:[#allocation6 + $0x870] sm:$0xff]
    %v3043 = vld [vmem:[#allocation6 + $0x878] sm:$0xff]
    %v3044 = vld [vmem:[#allocation6 + $0x880] sm:$0xff]
    %v3045 = vld [vmem:[#allocation6 + $0x888] sm:$0xff]
    %v3046 = vld [vmem:[#allocation6 + $0x890] sm:$0xff]
    %v3047 = vld [vmem:[#allocation6 + $0x898] sm:$0xff]
    %v3048 = vld [vmem:[#allocation6 + $0x8a0] sm:$0xff]
    %v3049 = vld [vmem:[#allocation6 + $0x8a8] sm:$0xff]
    %v3050 = vld [vmem:[#allocation6 + $0x8b0] sm:$0xff]
    %v3051 = vld [vmem:[#allocation6 + $0x8b8] sm:$0xff]
    %v3052 = vld [vmem:[#allocation6 + $0x8c0] sm:$0xff]
    %v3053 = vld [vmem:[#allocation6 + $0x8c8] sm:$0xff]
    %v3054 = vld [vmem:[#allocation6 + $0x8d0] sm:$0xff]
    %v3055 = vld [vmem:[#allocation6 + $0x8d8] sm:$0xff]
    %v3056 = vld [vmem:[#allocation6 + $0x8e0] sm:$0xff]
    %v3057 = vld [vmem:[#allocation6 + $0x8e8] sm:$0xff]
    %v3058 = vld [vmem:[#allocation6 + $0x8f0] sm:$0xff]
    %v3059 = vld [vmem:[#allocation6 + $0x8f8] sm:$0xff]
    %v3060 = vld [vmem:[#allocation6 + $0x900] sm:$0xff]
    %v3061 = vld [vmem:[#allocation6 + $0x908] sm:$0xff]
    %v3062 = vld [vmem:[#allocation6 + $0x910] sm:$0xff]
    %v3063 = vld [vmem:[#allocation6 + $0x918] sm:$0xff]
    %v3064 = vld [vmem:[#allocation6 + $0x920] sm:$0xff]
    %v3065 = vld [vmem:[#allocation6 + $0x928] sm:$0xff]
    %v3066 = vld [vmem:[#allocation6 + $0x930] sm:$0xff]
    %v3067 = vld [vmem:[#allocation6 + $0x938] sm:$0xff]
    %v3068 = vld [vmem:[#allocation6 + $0x940] sm:$0xff]
    %v3069 = vld [vmem:[#allocation6 + $0x948] sm:$0xff]
    %v3070 = vld [vmem:[#allocation6 + $0x950] sm:$0xff]
    %v3071 = vld [vmem:[#allocation6 + $0x958] sm:$0xff]
    %v3072 = vld [vmem:[#allocation6 + $0x960] sm:$0xff]
    %v3073 = vld [vmem:[#allocation6 + $0x968] sm:$0xff]
    %v3074 = vld [vmem:[#allocation6 + $0x970] sm:$0xff]
    %v3075 = vld [vmem:[#allocation6 + $0x978] sm:$0xff]
    %v3076 = vld [vmem:[#allocation6 + $0x980] sm:$0xff]
    %v3077 = vld [vmem:[#allocation6 + $0x988] sm:$0xff]
    %v3078 = vld [vmem:[#allocation6 + $0x990] sm:$0xff]
    %v3079 = vld [vmem:[#allocation6 + $0x998] sm:$0xff]
    %v3080 = vld [vmem:[#allocation6 + $0x9a0] sm:$0xff]
    %v3081 = vld [vmem:[#allocation6 + $0x9a8] sm:$0xff]
    %v3082 = vld [vmem:[#allocation6 + $0x9b0] sm:$0xff]
    %v3083 = vld [vmem:[#allocation6 + $0x9b8] sm:$0xff]
    %v3084 = vld [vmem:[#allocation6 + $0x9c0] sm:$0xff]
    %v3085 = vld [vmem:[#allocation6 + $0x9c8] sm:$0xff]
    %v3086 = vld [vmem:[#allocation6 + $0x9d0] sm:$0xff]
    %v3087 = vld [vmem:[#allocation6 + $0x9d8] sm:$0xff]
    %v3088 = vld [vmem:[#allocation6 + $0x9e0] sm:$0xff]
    %v3089 = vld [vmem:[#allocation6 + $0x9e8] sm:$0xff]
    %v3090 = vld [vmem:[#allocation6 + $0x9f0] sm:$0xff]
    %v3091 = vld [vmem:[#allocation6 + $0x9f8] sm:$0xff]
    %v3093 = vperm.slane %v2827, 0
    %v3094 = vperm.slane %v2827, 1
    %v3095 = vperm.slane %v2827, 2
    %v3096 = vperm.slane %v2827, 3
    %v3357 = vunpack.c.l.b16 %v2836
    %v3358 = vunpack.c.h.b16 %v2836
    %v3359 = vunpack.c.l.b16 %v2837
    %v3360 = vunpack.c.h.b16 %v2837
    %v3361 = vunpack.c.l.b16 %v2838
    %v3362 = vunpack.c.h.b16 %v2838
    %v3363 = vunpack.c.l.b16 %v2839
    %v3364 = vunpack.c.h.b16 %v2839
    %v3365 = vunpack.c.l.b16 %v2840
    %v3366 = vunpack.c.h.b16 %v2840
    %v3367 = vunpack.c.l.b16 %v2841
    %v3368 = vunpack.c.h.b16 %v2841
    %v3369 = vunpack.c.l.b16 %v2842
    %v3370 = vunpack.c.h.b16 %v2842
    %v3371 = vunpack.c.l.b16 %v2843
    %v3372 = vunpack.c.h.b16 %v2843
    %v3373 = vunpack.c.l.b16 %v2844
    %v3374 = vunpack.c.h.b16 %v2844
    %v3375 = vunpack.c.l.b16 %v2845
    %v3376 = vunpack.c.h.b16 %v2845
    %v3377 = vunpack.c.l.b16 %v2846
    %v3378 = vunpack.c.h.b16 %v2846
    %v3379 = vunpack.c.l.b16 %v2847
    %v3380 = vunpack.c.h.b16 %v2847
    %v3381 = vunpack.c.l.b16 %v2848
    %v3382 = vunpack.c.h.b16 %v2848
    %v3383 = vunpack.c.l.b16 %v2849
    %v3384 = vunpack.c.h.b16 %v2849
    %v3385 = vunpack.c.l.b16 %v2850
    %v3386 = vunpack.c.h.b16 %v2850
    %v3387 = vunpack.c.l.b16 %v2851
    %v3388 = vunpack.c.h.b16 %v2851
    %v3389 = vunpack.c.l.b16 %v2852
    %v3390 = vunpack.c.h.b16 %v2852
    %v3391 = vunpack.c.l.b16 %v2853
    %v3392 = vunpack.c.h.b16 %v2853
    %v3393 = vunpack.c.l.b16 %v2854
    %v3394 = vunpack.c.h.b16 %v2854
    %v3395 = vunpack.c.l.b16 %v2855
    %v3396 = vunpack.c.h.b16 %v2855
    %v3397 = vunpack.c.l.b16 %v2856
    %v3398 = vunpack.c.h.b16 %v2856
    %v3399 = vunpack.c.l.b16 %v2857
    %v3400 = vunpack.c.h.b16 %v2857
    %v3401 = vunpack.c.l.b16 %v2858
    %v3402 = vunpack.c.h.b16 %v2858
    %v3403 = vunpack.c.l.b16 %v2859
    %v3404 = vunpack.c.h.b16 %v2859
    %v3405 = vunpack.c.l.b16 %v2860
    %v3406 = vunpack.c.h.b16 %v2860
    %v3407 = vunpack.c.l.b16 %v2861
    %v3408 = vunpack.c.h.b16 %v2861
    %v3409 = vunpack.c.l.b16 %v2862
    %v3410 = vunpack.c.h.b16 %v2862
    %v3411 = vunpack.c.l.b16 %v2863
    %v3412 = vunpack.c.h.b16 %v2863
    %v3413 = vunpack.c.l.b16 %v2864
    %v3414 = vunpack.c.h.b16 %v2864
    %v3415 = vunpack.c.l.b16 %v2865
    %v3416 = vunpack.c.h.b16 %v2865
    %v3417 = vunpack.c.l.b16 %v2866
    %v3418 = vunpack.c.h.b16 %v2866
    %v3419 = vunpack.c.l.b16 %v2867
    %v3420 = vunpack.c.h.b16 %v2867
    %v3421 = vunpack.c.l.b16 %v2868
    %v3422 = vunpack.c.h.b16 %v2868
    %v3423 = vunpack.c.l.b16 %v2869
    %v3424 = vunpack.c.h.b16 %v2869
    %v3425 = vunpack.c.l.b16 %v2870
    %v3426 = vunpack.c.h.b16 %v2870
    %v3427 = vunpack.c.l.b16 %v2871
    %v3428 = vunpack.c.h.b16 %v2871
    %v3429 = vunpack.c.l.b16 %v2872
    %v3430 = vunpack.c.h.b16 %v2872
    %v3431 = vunpack.c.l.b16 %v2873
    %v3432 = vunpack.c.h.b16 %v2873
    %v3433 = vunpack.c.l.b16 %v2874
    %v3434 = vunpack.c.h.b16 %v2874
    %v3435 = vunpack.c.l.b16 %v2875
    %v3436 = vunpack.c.h.b16 %v2875
    %v3437 = vunpack.c.l.b16 %v2876
    %v3438 = vunpack.c.h.b16 %v2876
    %v3439 = vunpack.c.l.b16 %v2877
    %v3440 = vunpack.c.h.b16 %v2877
    %v3441 = vunpack.c.l.b16 %v2878
    %v3442 = vunpack.c.h.b16 %v2878
    %v3443 = vunpack.c.l.b16 %v2879
    %v3444 = vunpack.c.h.b16 %v2879
    %v3445 = vunpack.c.l.b16 %v2880
    %v3446 = vunpack.c.h.b16 %v2880
    %v3447 = vunpack.c.l.b16 %v2881
    %v3448 = vunpack.c.h.b16 %v2881
    %v3449 = vunpack.c.l.b16 %v2882
    %v3450 = vunpack.c.h.b16 %v2882
    %v3451 = vunpack.c.l.b16 %v2883
    %v3452 = vunpack.c.h.b16 %v2883
    %v3453 = vunpack.c.l.b16 %v2884
    %v3454 = vunpack.c.h.b16 %v2884
    %v3455 = vunpack.c.l.b16 %v2885
    %v3456 = vunpack.c.h.b16 %v2885
    %v3457 = vunpack.c.l.b16 %v2886
    %v3458 = vunpack.c.h.b16 %v2886
    %v3459 = vunpack.c.l.b16 %v2887
    %v3460 = vunpack.c.h.b16 %v2887
    %v3461 = vunpack.c.l.b16 %v2888
    %v3462 = vunpack.c.h.b16 %v2888
    %v3463 = vunpack.c.l.b16 %v2889
    %v3464 = vunpack.c.h.b16 %v2889
    %v3465 = vunpack.c.l.b16 %v2890
    %v3466 = vunpack.c.h.b16 %v2890
    %v3467 = vunpack.c.l.b16 %v2891
    %v3468 = vunpack.c.h.b16 %v2891
    %v3469 = vunpack.c.l.b16 %v2892
    %v3470 = vunpack.c.h.b16 %v2892
    %v3471 = vunpack.c.l.b16 %v2893
    %v3472 = vunpack.c.h.b16 %v2893
    %v3473 = vunpack.c.l.b16 %v2894
    %v3474 = vunpack.c.h.b16 %v2894
    %v3475 = vunpack.c.l.b16 %v2895
    %v3476 = vunpack.c.h.b16 %v2895
    %v3477 = vunpack.c.l.b16 %v2896
    %v3478 = vunpack.c.h.b16 %v2896
    %v3479 = vunpack.c.l.b16 %v2897
    %v3480 = vunpack.c.h.b16 %v2897
    %v3481 = vunpack.c.l.b16 %v2898
    %v3482 = vunpack.c.h.b16 %v2898
    %v3483 = vunpack.c.l.b16 %v2899
    %v3484 = vunpack.c.h.b16 %v2899
    %v3485 = vunpack.c.l.b16 %v2900
    %v3486 = vunpack.c.h.b16 %v2900
    %v3487 = vunpack.c.l.b16 %v2901
    %v3488 = vunpack.c.h.b16 %v2901
    %v3489 = vunpack.c.l.b16 %v2902
    %v3490 = vunpack.c.h.b16 %v2902
    %v3491 = vunpack.c.l.b16 %v2903
    %v3492 = vunpack.c.h.b16 %v2903
    %v3493 = vunpack.c.l.b16 %v2904
    %v3494 = vunpack.c.h.b16 %v2904
    %v3495 = vunpack.c.l.b16 %v2905
    %v3496 = vunpack.c.h.b16 %v2905
    %v3497 = vunpack.c.l.b16 %v2906
    %v3498 = vunpack.c.h.b16 %v2906
    %v3499 = vunpack.c.l.b16 %v2907
    %v3500 = vunpack.c.h.b16 %v2907
    %v3501 = vunpack.c.l.b16 %v2908
    %v3502 = vunpack.c.h.b16 %v2908
    %v3503 = vunpack.c.l.b16 %v2909
    %v3504 = vunpack.c.h.b16 %v2909
    %v3505 = vunpack.c.l.b16 %v2910
    %v3506 = vunpack.c.h.b16 %v2910
    %v3507 = vunpack.c.l.b16 %v2911
    %v3508 = vunpack.c.h.b16 %v2911
    %v3509 = vunpack.c.l.b16 %v2912
    %v3510 = vunpack.c.h.b16 %v2912
    %v3511 = vunpack.c.l.b16 %v2913
    %v3512 = vunpack.c.h.b16 %v2913
    %v3513 = vunpack.c.l.b16 %v2914
    %v3514 = vunpack.c.h.b16 %v2914
    %v3515 = vunpack.c.l.b16 %v2915
    %v3516 = vunpack.c.h.b16 %v2915
    %v3517 = vunpack.c.l.b16 %v2916
    %v3518 = vunpack.c.h.b16 %v2916
    %v3519 = vunpack.c.l.b16 %v2917
    %v3520 = vunpack.c.h.b16 %v2917
    %v3521 = vunpack.c.l.b16 %v2918
    %v3522 = vunpack.c.h.b16 %v2918
    %v3523 = vunpack.c.l.b16 %v2919
    %v3524 = vunpack.c.h.b16 %v2919
    %v3525 = vunpack.c.l.b16 %v2920
    %v3526 = vunpack.c.h.b16 %v2920
    %v3527 = vunpack.c.l.b16 %v2921
    %v3528 = vunpack.c.h.b16 %v2921
    %v3529 = vunpack.c.l.b16 %v2922
    %v3530 = vunpack.c.h.b16 %v2922
    %v3531 = vunpack.c.l.b16 %v2923
    %v3532 = vunpack.c.h.b16 %v2923
    %v3533 = vunpack.c.l.b16 %v2924
    %v3534 = vunpack.c.h.b16 %v2924
    %v3535 = vunpack.c.l.b16 %v2925
    %v3536 = vunpack.c.h.b16 %v2925
    %v3537 = vunpack.c.l.b16 %v2926
    %v3538 = vunpack.c.h.b16 %v2926
    %v3539 = vunpack.c.l.b16 %v2927
    %v3540 = vunpack.c.h.b16 %v2927
    %v3541 = vunpack.c.l.b16 %v2928
    %v3542 = vunpack.c.h.b16 %v2928
    %v3543 = vunpack.c.l.b16 %v2929
    %v3544 = vunpack.c.h.b16 %v2929
    %v3545 = vunpack.c.l.b16 %v2930
    %v3546 = vunpack.c.h.b16 %v2930
    %v3547 = vunpack.c.l.b16 %v2931
    %v3548 = vunpack.c.h.b16 %v2931
    %v3549 = vunpack.c.l.b16 %v2932
    %v3550 = vunpack.c.h.b16 %v2932
    %v3551 = vunpack.c.l.b16 %v2933
    %v3552 = vunpack.c.h.b16 %v2933
    %v3553 = vunpack.c.l.b16 %v2934
    %v3554 = vunpack.c.h.b16 %v2934
    %v3555 = vunpack.c.l.b16 %v2935
    %v3556 = vunpack.c.h.b16 %v2935
    %v3557 = vunpack.c.l.b16 %v2936
    %v3558 = vunpack.c.h.b16 %v2936
    %v3559 = vunpack.c.l.b16 %v2937
    %v3560 = vunpack.c.h.b16 %v2937
    %v3561 = vunpack.c.l.b16 %v2938
    %v3562 = vunpack.c.h.b16 %v2938
    %v3563 = vunpack.c.l.b16 %v2939
    %v3564 = vunpack.c.h.b16 %v2939
    %v3565 = vunpack.c.l.b16 %v2940
    %v3566 = vunpack.c.h.b16 %v2940
    %v3567 = vunpack.c.l.b16 %v2941
    %v3568 = vunpack.c.h.b16 %v2941
    %v3569 = vunpack.c.l.b16 %v2942
    %v3570 = vunpack.c.h.b16 %v2942
    %v3571 = vunpack.c.l.b16 %v2943
    %v3572 = vunpack.c.h.b16 %v2943
    %v3573 = vunpack.c.l.b16 %v2944
    %v3574 = vunpack.c.h.b16 %v2944
    %v3575 = vunpack.c.l.b16 %v2945
    %v3576 = vunpack.c.h.b16 %v2945
    %v3577 = vunpack.c.l.b16 %v2946
    %v3578 = vunpack.c.h.b16 %v2946
    %v3579 = vunpack.c.l.b16 %v2947
    %v3580 = vunpack.c.h.b16 %v2947
    %v3581 = vunpack.c.l.b16 %v2948
    %v3582 = vunpack.c.h.b16 %v2948
    %v3583 = vunpack.c.l.b16 %v2949
    %v3584 = vunpack.c.h.b16 %v2949
    %v3585 = vunpack.c.l.b16 %v2950
    %v3586 = vunpack.c.h.b16 %v2950
    %v3587 = vunpack.c.l.b16 %v2951
    %v3588 = vunpack.c.h.b16 %v2951
    %v3589 = vunpack.c.l.b16 %v2952
    %v3590 = vunpack.c.h.b16 %v2952
    %v3591 = vunpack.c.l.b16 %v2953
    %v3592 = vunpack.c.h.b16 %v2953
    %v3593 = vunpack.c.l.b16 %v2954
    %v3594 = vunpack.c.h.b16 %v2954
    %v3595 = vunpack.c.l.b16 %v2955
    %v3596 = vunpack.c.h.b16 %v2955
    %v3597 = vunpack.c.l.b16 %v2956
    %v3598 = vunpack.c.h.b16 %v2956
    %v3599 = vunpack.c.l.b16 %v2957
    %v3600 = vunpack.c.h.b16 %v2957
    %v3601 = vunpack.c.l.b16 %v2958
    %v3602 = vunpack.c.h.b16 %v2958
    %v3603 = vunpack.c.l.b16 %v2959
    %v3604 = vunpack.c.h.b16 %v2959
    %v3605 = vunpack.c.l.b16 %v2960
    %v3606 = vunpack.c.h.b16 %v2960
    %v3607 = vunpack.c.l.b16 %v2961
    %v3608 = vunpack.c.h.b16 %v2961
    %v3609 = vunpack.c.l.b16 %v2962
    %v3610 = vunpack.c.h.b16 %v2962
    %v3611 = vunpack.c.l.b16 %v2963
    %v3612 = vunpack.c.h.b16 %v2963
    %v3613 = vunpack.c.l.b16 %v2964
    %v3614 = vunpack.c.h.b16 %v2964
    %v3615 = vunpack.c.l.b16 %v2965
    %v3616 = vunpack.c.h.b16 %v2965
    %v3617 = vunpack.c.l.b16 %v2966
    %v3618 = vunpack.c.h.b16 %v2966
    %v3619 = vunpack.c.l.b16 %v2967
    %v3620 = vunpack.c.h.b16 %v2967
    %v3621 = vunpack.c.l.b16 %v2968
    %v3622 = vunpack.c.h.b16 %v2968
    %v3623 = vunpack.c.l.b16 %v2969
    %v3624 = vunpack.c.h.b16 %v2969
    %v3625 = vunpack.c.l.b16 %v2970
    %v3626 = vunpack.c.h.b16 %v2970
    %v3627 = vunpack.c.l.b16 %v2971
    %v3628 = vunpack.c.h.b16 %v2971
    %v3629 = vunpack.c.l.b16 %v2972
    %v3630 = vunpack.c.h.b16 %v2972
    %v3631 = vunpack.c.l.b16 %v2973
    %v3632 = vunpack.c.h.b16 %v2973
    %v3633 = vunpack.c.l.b16 %v2974
    %v3634 = vunpack.c.h.b16 %v2974
    %v3635 = vunpack.c.l.b16 %v2975
    %v3636 = vunpack.c.h.b16 %v2975
    %v3637 = vunpack.c.l.b16 %v2976
    %v3638 = vunpack.c.h.b16 %v2976
    %v3639 = vunpack.c.l.b16 %v2977
    %v3640 = vunpack.c.h.b16 %v2977
    %v3641 = vunpack.c.l.b16 %v2978
    %v3642 = vunpack.c.h.b16 %v2978
    %v3643 = vunpack.c.l.b16 %v2979
    %v3644 = vunpack.c.h.b16 %v2979
    %v3645 = vunpack.c.l.b16 %v2980
    %v3646 = vunpack.c.h.b16 %v2980
    %v3647 = vunpack.c.l.b16 %v2981
    %v3648 = vunpack.c.h.b16 %v2981
    %v3649 = vunpack.c.l.b16 %v2982
    %v3650 = vunpack.c.h.b16 %v2982
    %v3651 = vunpack.c.l.b16 %v2983
    %v3652 = vunpack.c.h.b16 %v2983
    %v3653 = vunpack.c.l.b16 %v2984
    %v3654 = vunpack.c.h.b16 %v2984
    %v3655 = vunpack.c.l.b16 %v2985
    %v3656 = vunpack.c.h.b16 %v2985
    %v3657 = vunpack.c.l.b16 %v2986
    %v3658 = vunpack.c.h.b16 %v2986
    %v3659 = vunpack.c.l.b16 %v2987
    %v3660 = vunpack.c.h.b16 %v2987
    %v3661 = vunpack.c.l.b16 %v2988
    %v3662 = vunpack.c.h.b16 %v2988
    %v3663 = vunpack.c.l.b16 %v2989
    %v3664 = vunpack.c.h.b16 %v2989
    %v3665 = vunpack.c.l.b16 %v2990
    %v3666 = vunpack.c.h.b16 %v2990
    %v3667 = vunpack.c.l.b16 %v2991
    %v3668 = vunpack.c.h.b16 %v2991
    %v3669 = vunpack.c.l.b16 %v2992
    %v3670 = vunpack.c.h.b16 %v2992
    %v3671 = vunpack.c.l.b16 %v2993
    %v3672 = vunpack.c.h.b16 %v2993
    %v3673 = vunpack.c.l.b16 %v2994
    %v3674 = vunpack.c.h.b16 %v2994
    %v3675 = vunpack.c.l.b16 %v2995
    %v3676 = vunpack.c.h.b16 %v2995
    %v3677 = vunpack.c.l.b16 %v2996
    %v3678 = vunpack.c.h.b16 %v2996
    %v3679 = vunpack.c.l.b16 %v2997
    %v3680 = vunpack.c.h.b16 %v2997
    %v3681 = vunpack.c.l.b16 %v2998
    %v3682 = vunpack.c.h.b16 %v2998
    %v3683 = vunpack.c.l.b16 %v2999
    %v3684 = vunpack.c.h.b16 %v2999
    %v3685 = vunpack.c.l.b16 %v3000
    %v3686 = vunpack.c.h.b16 %v3000
    %v3687 = vunpack.c.l.b16 %v3001
    %v3688 = vunpack.c.h.b16 %v3001
    %v3689 = vunpack.c.l.b16 %v3002
    %v3690 = vunpack.c.h.b16 %v3002
    %v3691 = vunpack.c.l.b16 %v3003
    %v3692 = vunpack.c.h.b16 %v3003
    %v3693 = vunpack.c.l.b16 %v3004
    %v3694 = vunpack.c.h.b16 %v3004
    %v3695 = vunpack.c.l.b16 %v3005
    %v3696 = vunpack.c.h.b16 %v3005
    %v3697 = vunpack.c.l.b16 %v3006
    %v3698 = vunpack.c.h.b16 %v3006
    %v3699 = vunpack.c.l.b16 %v3007
    %v3700 = vunpack.c.h.b16 %v3007
    %v3701 = vunpack.c.l.b16 %v3008
    %v3702 = vunpack.c.h.b16 %v3008
    %v3703 = vunpack.c.l.b16 %v3009
    %v3704 = vunpack.c.h.b16 %v3009
    %v3705 = vunpack.c.l.b16 %v3010
    %v3706 = vunpack.c.h.b16 %v3010
    %v3707 = vunpack.c.l.b16 %v3011
    %v3708 = vunpack.c.h.b16 %v3011
    %v3709 = vunpack.c.l.b16 %v3012
    %v3710 = vunpack.c.h.b16 %v3012
    %v3711 = vunpack.c.l.b16 %v3013
    %v3712 = vunpack.c.h.b16 %v3013
    %v3713 = vunpack.c.l.b16 %v3014
    %v3714 = vunpack.c.h.b16 %v3014
    %v3715 = vunpack.c.l.b16 %v3015
    %v3716 = vunpack.c.h.b16 %v3015
    %v3717 = vunpack.c.l.b16 %v3016
    %v3718 = vunpack.c.h.b16 %v3016
    %v3719 = vunpack.c.l.b16 %v3017
    %v3720 = vunpack.c.h.b16 %v3017
    %v3721 = vunpack.c.l.b16 %v3018
    %v3722 = vunpack.c.h.b16 %v3018
    %v3723 = vunpack.c.l.b16 %v3019
    %v3724 = vunpack.c.h.b16 %v3019
    %v3725 = vunpack.c.l.b16 %v3020
    %v3726 = vunpack.c.h.b16 %v3020
    %v3727 = vunpack.c.l.b16 %v3021
    %v3728 = vunpack.c.h.b16 %v3021
    %v3729 = vunpack.c.l.b16 %v3022
    %v3730 = vunpack.c.h.b16 %v3022
    %v3731 = vunpack.c.l.b16 %v3023
    %v3732 = vunpack.c.h.b16 %v3023
    %v3733 = vunpack.c.l.b16 %v3024
    %v3734 = vunpack.c.h.b16 %v3024
    %v3735 = vunpack.c.l.b16 %v3025
    %v3736 = vunpack.c.h.b16 %v3025
    %v3737 = vunpack.c.l.b16 %v3026
    %v3738 = vunpack.c.h.b16 %v3026
    %v3739 = vunpack.c.l.b16 %v3027
    %v3740 = vunpack.c.h.b16 %v3027
    %v3741 = vunpack.c.l.b16 %v3028
    %v3742 = vunpack.c.h.b16 %v3028
    %v3743 = vunpack.c.l.b16 %v3029
    %v3744 = vunpack.c.h.b16 %v3029
    %v3745 = vunpack.c.l.b16 %v3030
    %v3746 = vunpack.c.h.b16 %v3030
    %v3747 = vunpack.c.l.b16 %v3031
    %v3748 = vunpack.c.h.b16 %v3031
    %v3749 = vunpack.c.l.b16 %v3032
    %v3750 = vunpack.c.h.b16 %v3032
    %v3751 = vunpack.c.l.b16 %v3033
    %v3752 = vunpack.c.h.b16 %v3033
    %v3753 = vunpack.c.l.b16 %v3034
    %v3754 = vunpack.c.h.b16 %v3034
    %v3755 = vunpack.c.l.b16 %v3035
    %v3756 = vunpack.c.h.b16 %v3035
    %v3757 = vunpack.c.l.b16 %v3036
    %v3758 = vunpack.c.h.b16 %v3036
    %v3759 = vunpack.c.l.b16 %v3037
    %v3760 = vunpack.c.h.b16 %v3037
    %v3761 = vunpack.c.l.b16 %v3038
    %v3762 = vunpack.c.h.b16 %v3038
    %v3763 = vunpack.c.l.b16 %v3039
    %v3764 = vunpack.c.h.b16 %v3039
    %v3765 = vunpack.c.l.b16 %v3040
    %v3766 = vunpack.c.h.b16 %v3040
    %v3767 = vunpack.c.l.b16 %v3041
    %v3768 = vunpack.c.h.b16 %v3041
    %v3769 = vunpack.c.l.b16 %v3042
    %v3770 = vunpack.c.h.b16 %v3042
    %v3771 = vunpack.c.l.b16 %v3043
    %v3772 = vunpack.c.h.b16 %v3043
    %v3773 = vunpack.c.l.b16 %v3044
    %v3774 = vunpack.c.h.b16 %v3044
    %v3775 = vunpack.c.l.b16 %v3045
    %v3776 = vunpack.c.h.b16 %v3045
    %v3777 = vunpack.c.l.b16 %v3046
    %v3778 = vunpack.c.h.b16 %v3046
    %v3779 = vunpack.c.l.b16 %v3047
    %v3780 = vunpack.c.h.b16 %v3047
    %v3781 = vunpack.c.l.b16 %v3048
    %v3782 = vunpack.c.h.b16 %v3048
    %v3783 = vunpack.c.l.b16 %v3049
    %v3784 = vunpack.c.h.b16 %v3049
    %v3785 = vunpack.c.l.b16 %v3050
    %v3786 = vunpack.c.h.b16 %v3050
    %v3787 = vunpack.c.l.b16 %v3051
    %v3788 = vunpack.c.h.b16 %v3051
    %v3789 = vunpack.c.l.b16 %v3052
    %v3790 = vunpack.c.h.b16 %v3052
    %v3791 = vunpack.c.l.b16 %v3053
    %v3792 = vunpack.c.h.b16 %v3053
    %v3793 = vunpack.c.l.b16 %v3054
    %v3794 = vunpack.c.h.b16 %v3054
    %v3795 = vunpack.c.l.b16 %v3055
    %v3796 = vunpack.c.h.b16 %v3055
    %v3797 = vunpack.c.l.b16 %v3056
    %v3798 = vunpack.c.h.b16 %v3056
    %v3799 = vunpack.c.l.b16 %v3057
    %v3800 = vunpack.c.h.b16 %v3057
    %v3801 = vunpack.c.l.b16 %v3058
    %v3802 = vunpack.c.h.b16 %v3058
    %v3803 = vunpack.c.l.b16 %v3059
    %v3804 = vunpack.c.h.b16 %v3059
    %v3805 = vunpack.c.l.b16 %v3060
    %v3806 = vunpack.c.h.b16 %v3060
    %v3807 = vunpack.c.l.b16 %v3061
    %v3808 = vunpack.c.h.b16 %v3061
    %v3809 = vunpack.c.l.b16 %v3062
    %v3810 = vunpack.c.h.b16 %v3062
    %v3811 = vunpack.c.l.b16 %v3063
    %v3812 = vunpack.c.h.b16 %v3063
    %v3813 = vunpack.c.l.b16 %v3064
    %v3814 = vunpack.c.h.b16 %v3064
    %v3815 = vunpack.c.l.b16 %v3065
    %v3816 = vunpack.c.h.b16 %v3065
    %v3817 = vunpack.c.l.b16 %v3066
    %v3818 = vunpack.c.h.b16 %v3066
    %v3819 = vunpack.c.l.b16 %v3067
    %v3820 = vunpack.c.h.b16 %v3067
    %v3821 = vunpack.c.l.b16 %v3068
    %v3822 = vunpack.c.h.b16 %v3068
    %v3823 = vunpack.c.l.b16 %v3069
    %v3824 = vunpack.c.h.b16 %v3069
    %v3825 = vunpack.c.l.b16 %v3070
    %v3826 = vunpack.c.h.b16 %v3070
    %v3827 = vunpack.c.l.b16 %v3071
    %v3828 = vunpack.c.h.b16 %v3071
    %v3829 = vunpack.c.l.b16 %v3072
    %v3830 = vunpack.c.h.b16 %v3072
    %v3831 = vunpack.c.l.b16 %v3073
    %v3832 = vunpack.c.h.b16 %v3073
    %v3833 = vunpack.c.l.b16 %v3074
    %v3834 = vunpack.c.h.b16 %v3074
    %v3835 = vunpack.c.l.b16 %v3075
    %v3836 = vunpack.c.h.b16 %v3075
    %v3837 = vunpack.c.l.b16 %v3076
    %v3838 = vunpack.c.h.b16 %v3076
    %v3839 = vunpack.c.l.b16 %v3077
    %v3840 = vunpack.c.h.b16 %v3077
    %v3841 = vunpack.c.l.b16 %v3078
    %v3842 = vunpack.c.h.b16 %v3078
    %v3843 = vunpack.c.l.b16 %v3079
    %v3844 = vunpack.c.h.b16 %v3079
    %v3845 = vunpack.c.l.b16 %v3080
    %v3846 = vunpack.c.h.b16 %v3080
    %v3847 = vunpack.c.l.b16 %v3081
    %v3848 = vunpack.c.h.b16 %v3081
    %v3849 = vunpack.c.l.b16 %v3082
    %v3850 = vunpack.c.h.b16 %v3082
    %v3851 = vunpack.c.l.b16 %v3083
    %v3852 = vunpack.c.h.b16 %v3083
    %v3853 = vunpack.c.l.b16 %v3084
    %v3854 = vunpack.c.h.b16 %v3084
    %v3855 = vunpack.c.l.b16 %v3085
    %v3856 = vunpack.c.h.b16 %v3085
    %v3857 = vunpack.c.l.b16 %v3086
    %v3858 = vunpack.c.h.b16 %v3086
    %v3859 = vunpack.c.l.b16 %v3087
    %v3860 = vunpack.c.h.b16 %v3087
    %v3861 = vunpack.c.l.b16 %v3088
    %v3862 = vunpack.c.h.b16 %v3088
    %v3863 = vunpack.c.l.b16 %v3089
    %v3864 = vunpack.c.h.b16 %v3089
    %v3865 = vunpack.c.l.b16 %v3090
    %v3866 = vunpack.c.h.b16 %v3090
    %v3867 = vunpack.c.l.b16 %v3091
    %v3868 = vunpack.c.h.b16 %v3091
    %v3869 = vpack.c.b16 %v3361, %v3357
    %v3870 = vpack.c.b16 %v3362, %v3358
    %v3871 = vpack.c.b16 %v3363, %v3359
    %v3872 = vpack.c.b16 %v3364, %v3360
    %v3873 = vpack.c.b16 %v3369, %v3365
    %v3874 = vpack.c.b16 %v3370, %v3366
    %v3875 = vpack.c.b16 %v3371, %v3367
    %v3876 = vpack.c.b16 %v3372, %v3368
    %v3877 = vpack.c.b16 %v3377, %v3373
    %v3878 = vpack.c.b16 %v3378, %v3374
    %v3879 = vpack.c.b16 %v3379, %v3375
    %v3880 = vpack.c.b16 %v3380, %v3376
    %v3881 = vpack.c.b16 %v3385, %v3381
    %v3882 = vpack.c.b16 %v3386, %v3382
    %v3883 = vpack.c.b16 %v3387, %v3383
    %v3884 = vpack.c.b16 %v3388, %v3384
    %v3885 = vpack.c.b16 %v3393, %v3389
    %v3886 = vpack.c.b16 %v3394, %v3390
    %v3887 = vpack.c.b16 %v3395, %v3391
    %v3888 = vpack.c.b16 %v3396, %v3392
    %v3889 = vpack.c.b16 %v3401, %v3397
    %v3890 = vpack.c.b16 %v3402, %v3398
    %v3891 = vpack.c.b16 %v3403, %v3399
    %v3892 = vpack.c.b16 %v3404, %v3400
    %v3893 = vpack.c.b16 %v3409, %v3405
    %v3894 = vpack.c.b16 %v3410, %v3406
    %v3895 = vpack.c.b16 %v3411, %v3407
    %v3896 = vpack.c.b16 %v3412, %v3408
    %v3897 = vpack.c.b16 %v3417, %v3413
    %v3898 = vpack.c.b16 %v3418, %v3414
    %v3899 = vpack.c.b16 %v3419, %v3415
    %v3900 = vpack.c.b16 %v3420, %v3416
    %v3901 = vpack.c.b16 %v3425, %v3421
    %v3902 = vpack.c.b16 %v3426, %v3422
    %v3903 = vpack.c.b16 %v3427, %v3423
    %v3904 = vpack.c.b16 %v3428, %v3424
    %v3905 = vpack.c.b16 %v3433, %v3429
    %v3906 = vpack.c.b16 %v3434, %v3430
    %v3907 = vpack.c.b16 %v3435, %v3431
    %v3908 = vpack.c.b16 %v3436, %v3432
    %v3909 = vpack.c.b16 %v3441, %v3437
    %v3910 = vpack.c.b16 %v3442, %v3438
    %v3911 = vpack.c.b16 %v3443, %v3439
    %v3912 = vpack.c.b16 %v3444, %v3440
    %v3913 = vpack.c.b16 %v3449, %v3445
    %v3914 = vpack.c.b16 %v3450, %v3446
    %v3915 = vpack.c.b16 %v3451, %v3447
    %v3916 = vpack.c.b16 %v3452, %v3448
    %v3917 = vpack.c.b16 %v3457, %v3453
    %v3918 = vpack.c.b16 %v3458, %v3454
    %v3919 = vpack.c.b16 %v3459, %v3455
    %v3920 = vpack.c.b16 %v3460, %v3456
    %v3921 = vpack.c.b16 %v3465, %v3461
    %v3922 = vpack.c.b16 %v3466, %v3462
    %v3923 = vpack.c.b16 %v3467, %v3463
    %v3924 = vpack.c.b16 %v3468, %v3464
    %v3925 = vpack.c.b16 %v3473, %v3469
    %v3926 = vpack.c.b16 %v3474, %v3470
    %v3927 = vpack.c.b16 %v3475, %v3471
    %v3928 = vpack.c.b16 %v3476, %v3472
    %v3929 = vpack.c.b16 %v3481, %v3477
    %v3930 = vpack.c.b16 %v3482, %v3478
    %v3931 = vpack.c.b16 %v3483, %v3479
    %v3932 = vpack.c.b16 %v3484, %v3480
    %v3933 = vpack.c.b16 %v3489, %v3485
    %v3934 = vpack.c.b16 %v3490, %v3486
    %v3935 = vpack.c.b16 %v3491, %v3487
    %v3936 = vpack.c.b16 %v3492, %v3488
    %v3937 = vpack.c.b16 %v3497, %v3493
    %v3938 = vpack.c.b16 %v3498, %v3494
    %v3939 = vpack.c.b16 %v3499, %v3495
    %v3940 = vpack.c.b16 %v3500, %v3496
    %v3941 = vpack.c.b16 %v3505, %v3501
    %v3942 = vpack.c.b16 %v3506, %v3502
    %v3943 = vpack.c.b16 %v3507, %v3503
    %v3944 = vpack.c.b16 %v3508, %v3504
    %v3945 = vpack.c.b16 %v3513, %v3509
    %v3946 = vpack.c.b16 %v3514, %v3510
    %v3947 = vpack.c.b16 %v3515, %v3511
    %v3948 = vpack.c.b16 %v3516, %v3512
    %v3949 = vpack.c.b16 %v3521, %v3517
    %v3950 = vpack.c.b16 %v3522, %v3518
    %v3951 = vpack.c.b16 %v3523, %v3519
    %v3952 = vpack.c.b16 %v3524, %v3520
    %v3953 = vpack.c.b16 %v3529, %v3525
    %v3954 = vpack.c.b16 %v3530, %v3526
    %v3955 = vpack.c.b16 %v3531, %v3527
    %v3956 = vpack.c.b16 %v3532, %v3528
    %v3957 = vpack.c.b16 %v3537, %v3533
    %v3958 = vpack.c.b16 %v3538, %v3534
    %v3959 = vpack.c.b16 %v3539, %v3535
    %v3960 = vpack.c.b16 %v3540, %v3536
    %v3961 = vpack.c.b16 %v3545, %v3541
    %v3962 = vpack.c.b16 %v3546, %v3542
    %v3963 = vpack.c.b16 %v3547, %v3543
    %v3964 = vpack.c.b16 %v3548, %v3544
    %v3965 = vpack.c.b16 %v3553, %v3549
    %v3966 = vpack.c.b16 %v3554, %v3550
    %v3967 = vpack.c.b16 %v3555, %v3551
    %v3968 = vpack.c.b16 %v3556, %v3552
    %v3969 = vpack.c.b16 %v3561, %v3557
    %v3970 = vpack.c.b16 %v3562, %v3558
    %v3971 = vpack.c.b16 %v3563, %v3559
    %v3972 = vpack.c.b16 %v3564, %v3560
    %v3973 = vpack.c.b16 %v3569, %v3565
    %v3974 = vpack.c.b16 %v3570, %v3566
    %v3975 = vpack.c.b16 %v3571, %v3567
    %v3976 = vpack.c.b16 %v3572, %v3568
    %v3977 = vpack.c.b16 %v3577, %v3573
    %v3978 = vpack.c.b16 %v3578, %v3574
    %v3979 = vpack.c.b16 %v3579, %v3575
    %v3980 = vpack.c.b16 %v3580, %v3576
    %v3981 = vpack.c.b16 %v3585, %v3581
    %v3982 = vpack.c.b16 %v3586, %v3582
    %v3983 = vpack.c.b16 %v3587, %v3583
    %v3984 = vpack.c.b16 %v3588, %v3584
    %v3985 = vpack.c.b16 %v3593, %v3589
    %v3986 = vpack.c.b16 %v3594, %v3590
    %v3987 = vpack.c.b16 %v3595, %v3591
    %v3988 = vpack.c.b16 %v3596, %v3592
    %v3989 = vpack.c.b16 %v3601, %v3597
    %v3990 = vpack.c.b16 %v3602, %v3598
    %v3991 = vpack.c.b16 %v3603, %v3599
    %v3992 = vpack.c.b16 %v3604, %v3600
    %v3993 = vpack.c.b16 %v3609, %v3605
    %v3994 = vpack.c.b16 %v3610, %v3606
    %v3995 = vpack.c.b16 %v3611, %v3607
    %v3996 = vpack.c.b16 %v3612, %v3608
    %v3997 = vpack.c.b16 %v3617, %v3613
    %v3998 = vpack.c.b16 %v3618, %v3614
    %v3999 = vpack.c.b16 %v3619, %v3615
    %v4000 = vpack.c.b16 %v3620, %v3616
    %v4001 = vpack.c.b16 %v3625, %v3621
    %v4002 = vpack.c.b16 %v3626, %v3622
    %v4003 = vpack.c.b16 %v3627, %v3623
    %v4004 = vpack.c.b16 %v3628, %v3624
    %v4005 = vpack.c.b16 %v3633, %v3629
    %v4006 = vpack.c.b16 %v3634, %v3630
    %v4007 = vpack.c.b16 %v3635, %v3631
    %v4008 = vpack.c.b16 %v3636, %v3632
    %v4009 = vpack.c.b16 %v3641, %v3637
    %v4010 = vpack.c.b16 %v3642, %v3638
    %v4011 = vpack.c.b16 %v3643, %v3639
    %v4012 = vpack.c.b16 %v3644, %v3640
    %v4013 = vpack.c.b16 %v3649, %v3645
    %v4014 = vpack.c.b16 %v3650, %v3646
    %v4015 = vpack.c.b16 %v3651, %v3647
    %v4016 = vpack.c.b16 %v3652, %v3648
    %v4017 = vpack.c.b16 %v3657, %v3653
    %v4018 = vpack.c.b16 %v3658, %v3654
    %v4019 = vpack.c.b16 %v3659, %v3655
    %v4020 = vpack.c.b16 %v3660, %v3656
    %v4021 = vpack.c.b16 %v3665, %v3661
    %v4022 = vpack.c.b16 %v3666, %v3662
    %v4023 = vpack.c.b16 %v3667, %v3663
    %v4024 = vpack.c.b16 %v3668, %v3664
    %v4025 = vpack.c.b16 %v3673, %v3669
    %v4026 = vpack.c.b16 %v3674, %v3670
    %v4027 = vpack.c.b16 %v3675, %v3671
    %v4028 = vpack.c.b16 %v3676, %v3672
    %v4029 = vpack.c.b16 %v3681, %v3677
    %v4030 = vpack.c.b16 %v3682, %v3678
    %v4031 = vpack.c.b16 %v3683, %v3679
    %v4032 = vpack.c.b16 %v3684, %v3680
    %v4033 = vpack.c.b16 %v3689, %v3685
    %v4034 = vpack.c.b16 %v3690, %v3686
    %v4035 = vpack.c.b16 %v3691, %v3687
    %v4036 = vpack.c.b16 %v3692, %v3688
    %v4037 = vpack.c.b16 %v3697, %v3693
    %v4038 = vpack.c.b16 %v3698, %v3694
    %v4039 = vpack.c.b16 %v3699, %v3695
    %v4040 = vpack.c.b16 %v3700, %v3696
    %v4041 = vpack.c.b16 %v3705, %v3701
    %v4042 = vpack.c.b16 %v3706, %v3702
    %v4043 = vpack.c.b16 %v3707, %v3703
    %v4044 = vpack.c.b16 %v3708, %v3704
    %v4045 = vpack.c.b16 %v3713, %v3709
    %v4046 = vpack.c.b16 %v3714, %v3710
    %v4047 = vpack.c.b16 %v3715, %v3711
    %v4048 = vpack.c.b16 %v3716, %v3712
    %v4049 = vpack.c.b16 %v3721, %v3717
    %v4050 = vpack.c.b16 %v3722, %v3718
    %v4051 = vpack.c.b16 %v3723, %v3719
    %v4052 = vpack.c.b16 %v3724, %v3720
    %v4053 = vpack.c.b16 %v3729, %v3725
    %v4054 = vpack.c.b16 %v3730, %v3726
    %v4055 = vpack.c.b16 %v3731, %v3727
    %v4056 = vpack.c.b16 %v3732, %v3728
    %v4057 = vpack.c.b16 %v3737, %v3733
    %v4058 = vpack.c.b16 %v3738, %v3734
    %v4059 = vpack.c.b16 %v3739, %v3735
    %v4060 = vpack.c.b16 %v3740, %v3736
    %v4061 = vpack.c.b16 %v3745, %v3741
    %v4062 = vpack.c.b16 %v3746, %v3742
    %v4063 = vpack.c.b16 %v3747, %v3743
    %v4064 = vpack.c.b16 %v3748, %v3744
    %v4065 = vpack.c.b16 %v3753, %v3749
    %v4066 = vpack.c.b16 %v3754, %v3750
    %v4067 = vpack.c.b16 %v3755, %v3751
    %v4068 = vpack.c.b16 %v3756, %v3752
    %v4069 = vpack.c.b16 %v3761, %v3757
    %v4070 = vpack.c.b16 %v3762, %v3758
    %v4071 = vpack.c.b16 %v3763, %v3759
    %v4072 = vpack.c.b16 %v3764, %v3760
    %v4073 = vpack.c.b16 %v3769, %v3765
    %v4074 = vpack.c.b16 %v3770, %v3766
    %v4075 = vpack.c.b16 %v3771, %v3767
    %v4076 = vpack.c.b16 %v3772, %v3768
    %v4077 = vpack.c.b16 %v3777, %v3773
    %v4078 = vpack.c.b16 %v3778, %v3774
    %v4079 = vpack.c.b16 %v3779, %v3775
    %v4080 = vpack.c.b16 %v3780, %v3776
    %v4081 = vpack.c.b16 %v3785, %v3781
    %v4082 = vpack.c.b16 %v3786, %v3782
    %v4083 = vpack.c.b16 %v3787, %v3783
    %v4084 = vpack.c.b16 %v3788, %v3784
    %v4085 = vpack.c.b16 %v3793, %v3789
    %v4086 = vpack.c.b16 %v3794, %v3790
    %v4087 = vpack.c.b16 %v3795, %v3791
    %v4088 = vpack.c.b16 %v3796, %v3792
    %v4089 = vpack.c.b16 %v3801, %v3797
    %v4090 = vpack.c.b16 %v3802, %v3798
    %v4091 = vpack.c.b16 %v3803, %v3799
    %v4092 = vpack.c.b16 %v3804, %v3800
    %v4093 = vpack.c.b16 %v3809, %v3805
    %v4094 = vpack.c.b16 %v3810, %v3806
    %v4095 = vpack.c.b16 %v3811, %v3807
    %v4096 = vpack.c.b16 %v3812, %v3808
    %v4097 = vpack.c.b16 %v3817, %v3813
    %v4098 = vpack.c.b16 %v3818, %v3814
    %v4099 = vpack.c.b16 %v3819, %v3815
    %v4100 = vpack.c.b16 %v3820, %v3816
    %v4101 = vpack.c.b16 %v3825, %v3821
    %v4102 = vpack.c.b16 %v3826, %v3822
    %v4103 = vpack.c.b16 %v3827, %v3823
    %v4104 = vpack.c.b16 %v3828, %v3824
    %v4105 = vpack.c.b16 %v3833, %v3829
    %v4106 = vpack.c.b16 %v3834, %v3830
    %v4107 = vpack.c.b16 %v3835, %v3831
    %v4108 = vpack.c.b16 %v3836, %v3832
    %v4109 = vpack.c.b16 %v3841, %v3837
    %v4110 = vpack.c.b16 %v3842, %v3838
    %v4111 = vpack.c.b16 %v3843, %v3839
    %v4112 = vpack.c.b16 %v3844, %v3840
    %v4113 = vpack.c.b16 %v3849, %v3845
    %v4114 = vpack.c.b16 %v3850, %v3846
    %v4115 = vpack.c.b16 %v3851, %v3847
    %v4116 = vpack.c.b16 %v3852, %v3848
    %v4117 = vpack.c.b16 %v3857, %v3853
    %v4118 = vpack.c.b16 %v3858, %v3854
    %v4119 = vpack.c.b16 %v3859, %v3855
    %v4120 = vpack.c.b16 %v3860, %v3856
    %v4121 = vpack.c.b16 %v3865, %v3861
    %v4122 = vpack.c.b16 %v3866, %v3862
    %v4123 = vpack.c.b16 %v3867, %v3863
    %v4124 = vpack.c.b16 %v3868, %v3864
    %4381 = vmatpush.bf16.msra.mxu0 %v3897
    %4382 = vmatpush.bf16.msra.mxu0 %v3893
    %4383 = vmatpush.bf16.msra.mxu0 %v3889
    %4384 = vmatpush.bf16.msra.mxu0 %v3885
    %4385 = vmatpush.bf16.msra.mxu0 %v3881
    %4386 = vmatpush.bf16.msra.mxu0 %v3877
    %4387 = vmatpush.bf16.msra.mxu0 %v3873
    %4388 = vmatpush.bf16.msra.mxu0 %v3869
    %4389 = vmatmul.bf16.gmra.mxu0 %v2828
    %v4390 = vpop.f32.mrf.mxu0
    %v4391 = vadd.f32 %v3093, %v4390
    %v4392 = vpop.f32.mrf.mxu0
    %4393 = vdwg.mxu0
    %4394 = vmatpush.bf16.msra.mxu0 %v3929
    %4395 = vmatpush.bf16.msra.mxu0 %v3925
    %4396 = vmatpush.bf16.msra.mxu0 %v3921
    %4397 = vmatpush.bf16.msra.mxu0 %v3917
    %4398 = vmatpush.bf16.msra.mxu0 %v3913
    %4399 = vmatpush.bf16.msra.mxu0 %v3909
    %4400 = vmatpush.bf16.msra.mxu0 %v3905
    %4401 = vmatpush.bf16.msra.mxu0 %v3901
    %4402 = vmatmul.bf16.gmra.mxu0 %v2829
    %v4403 = vpop.f32.mrf.mxu0
    %v4404 = vadd.f32 %v4391, %v4403
    %v4405 = vpop.f32.mrf.mxu0
    %4406 = vdwg.mxu0
    %4407 = vmatpush.bf16.msra.mxu0 %v3961
    %4408 = vmatpush.bf16.msra.mxu0 %v3957
    %4409 = vmatpush.bf16.msra.mxu0 %v3953
    %4410 = vmatpush.bf16.msra.mxu0 %v3949
    %4411 = vmatpush.bf16.msra.mxu0 %v3945
    %4412 = vmatpush.bf16.msra.mxu0 %v3941
    %4413 = vmatpush.bf16.msra.mxu0 %v3937
    %4414 = vmatpush.bf16.msra.mxu0 %v3933
    %4415 = vmatmul.bf16.gmra.mxu0 %v2830
    %v4416 = vpop.f32.mrf.mxu0
    %v4417 = vadd.f32 %v4404, %v4416
    %v4418 = vpop.f32.mrf.mxu0
    %4419 = vdwg.mxu0
    %4420 = vmatpush.bf16.msra.mxu0 %v3993
    %4421 = vmatpush.bf16.msra.mxu0 %v3989
    %4422 = vmatpush.bf16.msra.mxu0 %v3985
    %4423 = vmatpush.bf16.msra.mxu0 %v3981
    %4424 = vmatpush.bf16.msra.mxu0 %v3977
    %4425 = vmatpush.bf16.msra.mxu0 %v3973
    %4426 = vmatpush.bf16.msra.mxu0 %v3969
    %4427 = vmatpush.bf16.msra.mxu0 %v3965
    %4428 = vmatmul.bf16.gmra.mxu0 %v2831
    %v4429 = vpop.f32.mrf.mxu0
    %v4430 = vadd.f32 %v4417, %v4429
    %v4431 = vpop.f32.mrf.mxu0
    %4432 = vdwg.mxu0
    %4433 = vmatpush.bf16.msra.mxu0 %v4025
    %4434 = vmatpush.bf16.msra.mxu0 %v4021
    %4435 = vmatpush.bf16.msra.mxu0 %v4017
    %4436 = vmatpush.bf16.msra.mxu0 %v4013
    %4437 = vmatpush.bf16.msra.mxu0 %v4009
    %4438 = vmatpush.bf16.msra.mxu0 %v4005
    %4439 = vmatpush.bf16.msra.mxu0 %v4001
    %4440 = vmatpush.bf16.msra.mxu0 %v3997
    %4441 = vmatmul.bf16.gmra.mxu0 %v2832
    %v4442 = vpop.f32.mrf.mxu0
    %v4443 = vadd.f32 %v4430, %v4442
    %v4444 = vpop.f32.mrf.mxu0
    %4445 = vdwg.mxu0
    %4446 = vmatpush.bf16.msra.mxu0 %v4057
    %4447 = vmatpush.bf16.msra.mxu0 %v4053
    %4448 = vmatpush.bf16.msra.mxu0 %v4049
    %4449 = vmatpush.bf16.msra.mxu0 %v4045
    %4450 = vmatpush.bf16.msra.mxu0 %v4041
    %4451 = vmatpush.bf16.msra.mxu0 %v4037
    %4452 = vmatpush.bf16.msra.mxu0 %v4033
    %4453 = vmatpush.bf16.msra.mxu0 %v4029
    %4454 = vmatmul.bf16.gmra.mxu0 %v2833
    %v4455 = vpop.f32.mrf.mxu0
    %v4456 = vadd.f32 %v4443, %v4455
    %v4457 = vpop.f32.mrf.mxu0
    %4458 = vdwg.mxu0
    %4459 = vmatpush.bf16.msra.mxu0 %v4089
    %4460 = vmatpush.bf16.msra.mxu0 %v4085
    %4461 = vmatpush.bf16.msra.mxu0 %v4081
    %4462 = vmatpush.bf16.msra.mxu0 %v4077
    %4463 = vmatpush.bf16.msra.mxu0 %v4073
    %4464 = vmatpush.bf16.msra.mxu0 %v4069
    %4465 = vmatpush.bf16.msra.mxu0 %v4065
    %4466 = vmatpush.bf16.msra.mxu0 %v4061
    %4467 = vmatmul.bf16.gmra.mxu0 %v2834
    %v4468 = vpop.f32.mrf.mxu0
    %v4469 = vadd.f32 %v4456, %v4468
    %v4470 = vpop.f32.mrf.mxu0
    %4471 = vdwg.mxu0
    %4472 = vmatpush.bf16.msra.mxu0 %v4121
    %4473 = vmatpush.bf16.msra.mxu0 %v4117
    %4474 = vmatpush.bf16.msra.mxu0 %v4113
    %4475 = vmatpush.bf16.msra.mxu0 %v4109
    %4476 = vmatpush.bf16.msra.mxu0 %v4105
    %4477 = vmatpush.bf16.msra.mxu0 %v4101
    %4478 = vmatpush.bf16.msra.mxu0 %v4097
    %4479 = vmatpush.bf16.msra.mxu0 %v4093
    %4480 = vmatmul.bf16.gmra.mxu0 %v2835
    %v4481 = vpop.f32.mrf.mxu0
    %v4482 = vadd.f32 %v4469, %v4481
    %v4483 = vpop.f32.mrf.mxu0
    %4484 = vdwg.mxu0
    %4485 = vmatpush.bf16.msra.mxu0 %v3898
    %4486 = vmatpush.bf16.msra.mxu0 %v3894
    %4487 = vmatpush.bf16.msra.mxu0 %v3890
    %4488 = vmatpush.bf16.msra.mxu0 %v3886
    %4489 = vmatpush.bf16.msra.mxu0 %v3882
    %4490 = vmatpush.bf16.msra.mxu0 %v3878
    %4491 = vmatpush.bf16.msra.mxu0 %v3874
    %4492 = vmatpush.bf16.msra.mxu0 %v3870
    %4493 = vmatmul.bf16.gmra.mxu0 %v2828
    %v4494 = vpop.f32.mrf.mxu0
    %v4495 = vadd.f32 %v3094, %v4494
    %v4496 = vpop.f32.mrf.mxu0
    %4497 = vdwg.mxu0
    %4498 = vmatpush.bf16.msra.mxu0 %v3930
    %4499 = vmatpush.bf16.msra.mxu0 %v3926
    %4500 = vmatpush.bf16.msra.mxu0 %v3922
    %4501 = vmatpush.bf16.msra.mxu0 %v3918
    %4502 = vmatpush.bf16.msra.mxu0 %v3914
    %4503 = vmatpush.bf16.msra.mxu0 %v3910
    %4504 = vmatpush.bf16.msra.mxu0 %v3906
    %4505 = vmatpush.bf16.msra.mxu0 %v3902
    %4506 = vmatmul.bf16.gmra.mxu0 %v2829
    %v4507 = vpop.f32.mrf.mxu0
    %v4508 = vadd.f32 %v4495, %v4507
    %v4509 = vpop.f32.mrf.mxu0
    %4510 = vdwg.mxu0
    %4511 = vmatpush.bf16.msra.mxu0 %v3962
    %4512 = vmatpush.bf16.msra.mxu0 %v3958
    %4513 = vmatpush.bf16.msra.mxu0 %v3954
    %4514 = vmatpush.bf16.msra.mxu0 %v3950
    %4515 = vmatpush.bf16.msra.mxu0 %v3946
    %4516 = vmatpush.bf16.msra.mxu0 %v3942
    %4517 = vmatpush.bf16.msra.mxu0 %v3938
    %4518 = vmatpush.bf16.msra.mxu0 %v3934
    %4519 = vmatmul.bf16.gmra.mxu0 %v2830
    %v4520 = vpop.f32.mrf.mxu0
    %v4521 = vadd.f32 %v4508, %v4520
    %v4522 = vpop.f32.mrf.mxu0
    %4523 = vdwg.mxu0
    %4524 = vmatpush.bf16.msra.mxu0 %v3994
    %4525 = vmatpush.bf16.msra.mxu0 %v3990
    %4526 = vmatpush.bf16.msra.mxu0 %v3986
    %4527 = vmatpush.bf16.msra.mxu0 %v3982
    %4528 = vmatpush.bf16.msra.mxu0 %v3978
    %4529 = vmatpush.bf16.msra.mxu0 %v3974
    %4530 = vmatpush.bf16.msra.mxu0 %v3970
    %4531 = vmatpush.bf16.msra.mxu0 %v3966
    %4532 = vmatmul.bf16.gmra.mxu0 %v2831
    %v4533 = vpop.f32.mrf.mxu0
    %v4534 = vadd.f32 %v4521, %v4533
    %v4535 = vpop.f32.mrf.mxu0
    %4536 = vdwg.mxu0
    %4537 = vmatpush.bf16.msra.mxu0 %v4026
    %4538 = vmatpush.bf16.msra.mxu0 %v4022
    %4539 = vmatpush.bf16.msra.mxu0 %v4018
    %4540 = vmatpush.bf16.msra.mxu0 %v4014
    %4541 = vmatpush.bf16.msra.mxu0 %v4010
    %4542 = vmatpush.bf16.msra.mxu0 %v4006
    %4543 = vmatpush.bf16.msra.mxu0 %v4002
    %4544 = vmatpush.bf16.msra.mxu0 %v3998
    %4545 = vmatmul.bf16.gmra.mxu0 %v2832
    %v4546 = vpop.f32.mrf.mxu0
    %v4547 = vadd.f32 %v4534, %v4546
    %v4548 = vpop.f32.mrf.mxu0
    %4549 = vdwg.mxu0
    %4550 = vmatpush.bf16.msra.mxu0 %v4058
    %4551 = vmatpush.bf16.msra.mxu0 %v4054
    %4552 = vmatpush.bf16.msra.mxu0 %v4050
    %4553 = vmatpush.bf16.msra.mxu0 %v4046
    %4554 = vmatpush.bf16.msra.mxu0 %v4042
    %4555 = vmatpush.bf16.msra.mxu0 %v4038
    %4556 = vmatpush.bf16.msra.mxu0 %v4034
    %4557 = vmatpush.bf16.msra.mxu0 %v4030
    %4558 = vmatmul.bf16.gmra.mxu0 %v2833
    %v4559 = vpop.f32.mrf.mxu0
    %v4560 = vadd.f32 %v4547, %v4559
    %v4561 = vpop.f32.mrf.mxu0
    %4562 = vdwg.mxu0
    %4563 = vmatpush.bf16.msra.mxu0 %v4090
    %4564 = vmatpush.bf16.msra.mxu0 %v4086
    %4565 = vmatpush.bf16.msra.mxu0 %v4082
    %4566 = vmatpush.bf16.msra.mxu0 %v4078
    %4567 = vmatpush.bf16.msra.mxu0 %v4074
    %4568 = vmatpush.bf16.msra.mxu0 %v4070
    %4569 = vmatpush.bf16.msra.mxu0 %v4066
    %4570 = vmatpush.bf16.msra.mxu0 %v4062
    %4571 = vmatmul.bf16.gmra.mxu0 %v2834
    %v4572 = vpop.f32.mrf.mxu0
    %v4573 = vadd.f32 %v4560, %v4572
    %v4574 = vpop.f32.mrf.mxu0
    %4575 = vdwg.mxu0
    %4576 = vmatpush.bf16.msra.mxu0 %v4122
    %4577 = vmatpush.bf16.msra.mxu0 %v4118
    %4578 = vmatpush.bf16.msra.mxu0 %v4114
    %4579 = vmatpush.bf16.msra.mxu0 %v4110
    %4580 = vmatpush.bf16.msra.mxu0 %v4106
    %4581 = vmatpush.bf16.msra.mxu0 %v4102
    %4582 = vmatpush.bf16.msra.mxu0 %v4098
    %4583 = vmatpush.bf16.msra.mxu0 %v4094
    %4584 = vmatmul.bf16.gmra.mxu0 %v2835
    %v4585 = vpop.f32.mrf.mxu0
    %v4586 = vadd.f32 %v4573, %v4585
    %v4587 = vpop.f32.mrf.mxu0
    %4588 = vdwg.mxu0
    %4589 = vmatpush.bf16.msra.mxu0 %v3899
    %4590 = vmatpush.bf16.msra.mxu0 %v3895
    %4591 = vmatpush.bf16.msra.mxu0 %v3891
    %4592 = vmatpush.bf16.msra.mxu0 %v3887
    %4593 = vmatpush.bf16.msra.mxu0 %v3883
    %4594 = vmatpush.bf16.msra.mxu0 %v3879
    %4595 = vmatpush.bf16.msra.mxu0 %v3875
    %4596 = vmatpush.bf16.msra.mxu0 %v3871
    %4597 = vmatmul.bf16.gmra.mxu0 %v2828
    %v4598 = vpop.f32.mrf.mxu0
    %v4599 = vadd.f32 %v3095, %v4598
    %v4600 = vpop.f32.mrf.mxu0
    %4601 = vdwg.mxu0
    %4602 = vmatpush.bf16.msra.mxu0 %v3931
    %4603 = vmatpush.bf16.msra.mxu0 %v3927
    %4604 = vmatpush.bf16.msra.mxu0 %v3923
    %4605 = vmatpush.bf16.msra.mxu0 %v3919
    %4606 = vmatpush.bf16.msra.mxu0 %v3915
    %4607 = vmatpush.bf16.msra.mxu0 %v3911
    %4608 = vmatpush.bf16.msra.mxu0 %v3907
    %4609 = vmatpush.bf16.msra.mxu0 %v3903
    %4610 = vmatmul.bf16.gmra.mxu0 %v2829
    %v4611 = vpop.f32.mrf.mxu0
    %v4612 = vadd.f32 %v4599, %v4611
    %v4613 = vpop.f32.mrf.mxu0
    %4614 = vdwg.mxu0
    %4615 = vmatpush.bf16.msra.mxu0 %v3963
    %4616 = vmatpush.bf16.msra.mxu0 %v3959
    %4617 = vmatpush.bf16.msra.mxu0 %v3955
    %4618 = vmatpush.bf16.msra.mxu0 %v3951
    %4619 = vmatpush.bf16.msra.mxu0 %v3947
    %4620 = vmatpush.bf16.msra.mxu0 %v3943
    %4621 = vmatpush.bf16.msra.mxu0 %v3939
    %4622 = vmatpush.bf16.msra.mxu0 %v3935
    %4623 = vmatmul.bf16.gmra.mxu0 %v2830
    %v4624 = vpop.f32.mrf.mxu0
    %v4625 = vadd.f32 %v4612, %v4624
    %v4626 = vpop.f32.mrf.mxu0
    %4627 = vdwg.mxu0
    %4628 = vmatpush.bf16.msra.mxu0 %v3995
    %4629 = vmatpush.bf16.msra.mxu0 %v3991
    %4630 = vmatpush.bf16.msra.mxu0 %v3987
    %4631 = vmatpush.bf16.msra.mxu0 %v3983
    %4632 = vmatpush.bf16.msra.mxu0 %v3979
    %4633 = vmatpush.bf16.msra.mxu0 %v3975
    %4634 = vmatpush.bf16.msra.mxu0 %v3971
    %4635 = vmatpush.bf16.msra.mxu0 %v3967
    %4636 = vmatmul.bf16.gmra.mxu0 %v2831
    %v4637 = vpop.f32.mrf.mxu0
    %v4638 = vadd.f32 %v4625, %v4637
    %v4639 = vpop.f32.mrf.mxu0
    %4640 = vdwg.mxu0
    %4641 = vmatpush.bf16.msra.mxu0 %v4027
    %4642 = vmatpush.bf16.msra.mxu0 %v4023
    %4643 = vmatpush.bf16.msra.mxu0 %v4019
    %4644 = vmatpush.bf16.msra.mxu0 %v4015
    %4645 = vmatpush.bf16.msra.mxu0 %v4011
    %4646 = vmatpush.bf16.msra.mxu0 %v4007
    %4647 = vmatpush.bf16.msra.mxu0 %v4003
    %4648 = vmatpush.bf16.msra.mxu0 %v3999
    %4649 = vmatmul.bf16.gmra.mxu0 %v2832
    %v4650 = vpop.f32.mrf.mxu0
    %v4651 = vadd.f32 %v4638, %v4650
    %v4652 = vpop.f32.mrf.mxu0
    %4653 = vdwg.mxu0
    %4654 = vmatpush.bf16.msra.mxu0 %v4059
    %4655 = vmatpush.bf16.msra.mxu0 %v4055
    %4656 = vmatpush.bf16.msra.mxu0 %v4051
    %4657 = vmatpush.bf16.msra.mxu0 %v4047
    %4658 = vmatpush.bf16.msra.mxu0 %v4043
    %4659 = vmatpush.bf16.msra.mxu0 %v4039
    %4660 = vmatpush.bf16.msra.mxu0 %v4035
    %4661 = vmatpush.bf16.msra.mxu0 %v4031
    %4662 = vmatmul.bf16.gmra.mxu0 %v2833
    %v4663 = vpop.f32.mrf.mxu0
    %v4664 = vadd.f32 %v4651, %v4663
    %v4665 = vpop.f32.mrf.mxu0
    %4666 = vdwg.mxu0
    %4667 = vmatpush.bf16.msra.mxu0 %v4091
    %4668 = vmatpush.bf16.msra.mxu0 %v4087
    %4669 = vmatpush.bf16.msra.mxu0 %v4083
    %4670 = vmatpush.bf16.msra.mxu0 %v4079
    %4671 = vmatpush.bf16.msra.mxu0 %v4075
    %4672 = vmatpush.bf16.msra.mxu0 %v4071
    %4673 = vmatpush.bf16.msra.mxu0 %v4067
    %4674 = vmatpush.bf16.msra.mxu0 %v4063
    %4675 = vmatmul.bf16.gmra.mxu0 %v2834
    %v4676 = vpop.f32.mrf.mxu0
    %v4677 = vadd.f32 %v4664, %v4676
    %v4678 = vpop.f32.mrf.mxu0
    %4679 = vdwg.mxu0
    %4680 = vmatpush.bf16.msra.mxu0 %v4123
    %4681 = vmatpush.bf16.msra.mxu0 %v4119
    %4682 = vmatpush.bf16.msra.mxu0 %v4115
    %4683 = vmatpush.bf16.msra.mxu0 %v4111
    %4684 = vmatpush.bf16.msra.mxu0 %v4107
    %4685 = vmatpush.bf16.msra.mxu0 %v4103
    %4686 = vmatpush.bf16.msra.mxu0 %v4099
    %4687 = vmatpush.bf16.msra.mxu0 %v4095
    %4688 = vmatmul.bf16.gmra.mxu0 %v2835
    %v4689 = vpop.f32.mrf.mxu0
    %v4690 = vadd.f32 %v4677, %v4689
    %v4691 = vpop.f32.mrf.mxu0
    %4692 = vdwg.mxu0
    %4693 = vmatpush.bf16.msra.mxu0 %v3900
    %4694 = vmatpush.bf16.msra.mxu0 %v3896
    %4695 = vmatpush.bf16.msra.mxu0 %v3892
    %4696 = vmatpush.bf16.msra.mxu0 %v3888
    %4697 = vmatpush.bf16.msra.mxu0 %v3884
    %4698 = vmatpush.bf16.msra.mxu0 %v3880
    %4699 = vmatpush.bf16.msra.mxu0 %v3876
    %4700 = vmatpush.bf16.msra.mxu0 %v3872
    %4701 = vmatmul.bf16.gmra.mxu0 %v2828
    %v4702 = vpop.f32.mrf.mxu0
    %v4703 = vadd.f32 %v3096, %v4702
    %v4704 = vpop.f32.mrf.mxu0
    %4705 = vdwg.mxu0
    %4706 = vmatpush.bf16.msra.mxu0 %v3932
    %4707 = vmatpush.bf16.msra.mxu0 %v3928
    %4708 = vmatpush.bf16.msra.mxu0 %v3924
    %4709 = vmatpush.bf16.msra.mxu0 %v3920
    %4710 = vmatpush.bf16.msra.mxu0 %v3916
    %4711 = vmatpush.bf16.msra.mxu0 %v3912
    %4712 = vmatpush.bf16.msra.mxu0 %v3908
    %4713 = vmatpush.bf16.msra.mxu0 %v3904
    %4714 = vmatmul.bf16.gmra.mxu0 %v2829
    %v4715 = vpop.f32.mrf.mxu0
    %v4716 = vadd.f32 %v4703, %v4715
    %v4717 = vpop.f32.mrf.mxu0
    %4718 = vdwg.mxu0
    %4719 = vmatpush.bf16.msra.mxu0 %v3964
    %4720 = vmatpush.bf16.msra.mxu0 %v3960
    %4721 = vmatpush.bf16.msra.mxu0 %v3956
    %4722 = vmatpush.bf16.msra.mxu0 %v3952
    %4723 = vmatpush.bf16.msra.mxu0 %v3948
    %4724 = vmatpush.bf16.msra.mxu0 %v3944
    %4725 = vmatpush.bf16.msra.mxu0 %v3940
    %4726 = vmatpush.bf16.msra.mxu0 %v3936
    %4727 = vmatmul.bf16.gmra.mxu0 %v2830
    %v4728 = vpop.f32.mrf.mxu0
    %v4729 = vadd.f32 %v4716, %v4728
    %v4730 = vpop.f32.mrf.mxu0
    %4731 = vdwg.mxu0
    %4732 = vmatpush.bf16.msra.mxu0 %v3996
    %4733 = vmatpush.bf16.msra.mxu0 %v3992
    %4734 = vmatpush.bf16.msra.mxu0 %v3988
    %4735 = vmatpush.bf16.msra.mxu0 %v3984
    %4736 = vmatpush.bf16.msra.mxu0 %v3980
    %4737 = vmatpush.bf16.msra.mxu0 %v3976
    %4738 = vmatpush.bf16.msra.mxu0 %v3972
    %4739 = vmatpush.bf16.msra.mxu0 %v3968
    %4740 = vmatmul.bf16.gmra.mxu0 %v2831
    %v4741 = vpop.f32.mrf.mxu0
    %v4742 = vadd.f32 %v4729, %v4741
    %v4743 = vpop.f32.mrf.mxu0
    %4744 = vdwg.mxu0
    %4745 = vmatpush.bf16.msra.mxu0 %v4028
    %4746 = vmatpush.bf16.msra.mxu0 %v4024
    %4747 = vmatpush.bf16.msra.mxu0 %v4020
    %4748 = vmatpush.bf16.msra.mxu0 %v4016
    %4749 = vmatpush.bf16.msra.mxu0 %v4012
    %4750 = vmatpush.bf16.msra.mxu0 %v4008
    %4751 = vmatpush.bf16.msra.mxu0 %v4004
    %4752 = vmatpush.bf16.msra.mxu0 %v4000
    %4753 = vmatmul.bf16.gmra.mxu0 %v2832
    %v4754 = vpop.f32.mrf.mxu0
    %v4755 = vadd.f32 %v4742, %v4754
    %v4756 = vpop.f32.mrf.mxu0
    %4757 = vdwg.mxu0
    %4758 = vmatpush.bf16.msra.mxu0 %v4060
    %4759 = vmatpush.bf16.msra.mxu0 %v4056
    %4760 = vmatpush.bf16.msra.mxu0 %v4052
    %4761 = vmatpush.bf16.msra.mxu0 %v4048
    %4762 = vmatpush.bf16.msra.mxu0 %v4044
    %4763 = vmatpush.bf16.msra.mxu0 %v4040
    %4764 = vmatpush.bf16.msra.mxu0 %v4036
    %4765 = vmatpush.bf16.msra.mxu0 %v4032
    %4766 = vmatmul.bf16.gmra.mxu0 %v2833
    %v4767 = vpop.f32.mrf.mxu0
    %v4768 = vadd.f32 %v4755, %v4767
    %v4769 = vpop.f32.mrf.mxu0
    %4770 = vdwg.mxu0
    %4771 = vmatpush.bf16.msra.mxu0 %v4092
    %4772 = vmatpush.bf16.msra.mxu0 %v4088
    %4773 = vmatpush.bf16.msra.mxu0 %v4084
    %4774 = vmatpush.bf16.msra.mxu0 %v4080
    %4775 = vmatpush.bf16.msra.mxu0 %v4076
    %4776 = vmatpush.bf16.msra.mxu0 %v4072
    %4777 = vmatpush.bf16.msra.mxu0 %v4068
    %4778 = vmatpush.bf16.msra.mxu0 %v4064
    %4779 = vmatmul.bf16.gmra.mxu0 %v2834
    %v4780 = vpop.f32.mrf.mxu0
    %v4781 = vadd.f32 %v4768, %v4780
    %v4782 = vpop.f32.mrf.mxu0
    %4783 = vdwg.mxu0
    %4784 = vmatpush.bf16.msra.mxu0 %v4124
    %4785 = vmatpush.bf16.msra.mxu0 %v4120
    %4786 = vmatpush.bf16.msra.mxu0 %v4116
    %4787 = vmatpush.bf16.msra.mxu0 %v4112
    %4788 = vmatpush.bf16.msra.mxu0 %v4108
    %4789 = vmatpush.bf16.msra.mxu0 %v4104
    %4790 = vmatpush.bf16.msra.mxu0 %v4100
    %4791 = vmatpush.bf16.msra.mxu0 %v4096
    %4792 = vmatmul.bf16.gmra.mxu0 %v2835
    %v4793 = vpop.f32.mrf.mxu0
    %v4794 = vadd.f32 %v4781, %v4793
    %v4795 = vpop.f32.mrf.mxu0
    %4796 = vdwg.mxu0
    %v4797 = vxor.u32 %v4690, 2147483648
    %v4798 = vxor.u32 %v4794, 2147483648
    %v4799 = vmul.f32 %v4797, 1.442695
    %v4800 = vpow.pop %v4799
    %v4801 = vmul.f32 %v4798, 1.442695
    %v4802 = vpow.pop %v4801
    %v4803 = vadd.f32 %v4800, 1.0
    %v4804 = vadd.f32 %v4802, 1.0
    %v4805 = vrcp.pop %v4803
    %v4806 = vmul.f32 %v4803, %v4805
    %v4807 = vsub.f32 1.0, %v4806
    %v4808 = vmul.f32 %v4805, %v4807
    %v4809 = vadd.f32 %v4805, %v4808
    %vm4810 = vweird.f32 %v4803
    %vm4811 = vweird.f32 %v4805
    %vm4812 = vmor %vm4810, %vm4811
    %v4813 = vsel %vm4812, %v4805, %v4809
    %v4814 = vand.u32 2147483647, %v4803
    %vm4815 = vcmp.eq.f32.partialorder %v4814, 8.507059e+37
    %v4816 = vand.u32 %v4803, 2147483648
    %v4817 = vor.u32 1.1754944e-38, %v4816
    %v4818 = vsel %vm4815, %v4817, %v4813
    %v4819 = vmul.f32 1.0, %v4818
    %v4820 = vrcp.pop %v4804
    %v4821 = vmul.f32 %v4804, %v4820
    %v4822 = vsub.f32 1.0, %v4821
    %v4823 = vmul.f32 %v4820, %v4822
    %v4824 = vadd.f32 %v4820, %v4823
    %vm4825 = vweird.f32 %v4804
    %vm4826 = vweird.f32 %v4820
    %vm4827 = vmor %vm4825, %vm4826
    %v4828 = vsel %vm4827, %v4820, %v4824
    %v4829 = vand.u32 2147483647, %v4804
    %vm4830 = vcmp.eq.f32.partialorder %v4829, 8.507059e+37
    %v4831 = vand.u32 %v4804, 2147483648
    %v4832 = vor.u32 1.1754944e-38, %v4831
    %v4833 = vsel %vm4830, %v4832, %v4828
    %v4834 = vmul.f32 1.0, %v4833
    %v4835 = vmul.f32 %v4482, %v4819
    %v4836 = vmul.f32 %v4586, %v4834
    %s4837 = scalar_lea.vmem [#allocation7], 35
    %v4838 = vld [vmem:[%s4837] ss:$8 sm:$0x3]
    %s4839 = scalar_lea.vmem [#allocation7], 36
    %v4840 = vld [vmem:[%s4839] ss:$8 sm:$0x3]
    %v4841 = vadd.f32 %v4835, %v4836
    %4842 = vadd.xlane.f32.xlu0 %v4841
    %v4843 = vpop.xlane.xlu0 %4842
    %v4844 = vmul.f32 %v4843, %v2711
    %v4845 = vsub.f32 %v4835, %v4844
    %v4846 = vsub.f32 %v4836, %v4844
    %v4847 = vmul.f32 %v4845, %v4845
    %v4848 = vmul.f32 %v4846, %v4846
    %v4849 = vadd.f32 %v4847, %v4848
    %4850 = vadd.xlane.f32.xlu0 %v4849
    %v4851 = vpop.xlane.xlu0 %4850
    %v4852 = vmul.f32 %v4851, %v2711
    %v4853 = vadd.f32 %v4852, 1e-05
    %v4854 = vrsqrt.pop %v4853
    %v4855 = vmul.f32 %v4854, %v4853
    %v4856 = vmul.f32 %v4855, %v4854
    %v4857 = vmul.f32 0.5, %v4856
    %v4858 = vsub.f32 1.5, %v4857
    %v4859 = vmul.f32 %v4854, %v4858
    %vm4860 = vweird.f32 %v4853
    %vm4861 = vweird.f32 %v4854
    %vm4862 = vmor %vm4860, %vm4861
    %v4863 = vsel %vm4862, %v4854, %v4859
    %v4864 = vmul.f32 %v4845, %v4863
    %v4865 = vmul.f32 %v4846, %v4863
    %v4867 = vperm.slane %v4838, 0
    %v4868 = vperm.slane %v4838, 1
    %v4871 = vmul.f32 %v4864, %v4867
    %v4872 = vmul.f32 %v4865, %v4868
    %v4874 = vperm.slane %v4840, 0
    %v4875 = vperm.slane %v4840, 1
    %v4878 = vadd.f32 %v4871, %v4874
    %v4879 = vadd.f32 %v4872, %v4875
    %s4880 = scalar_lea.vmem [#allocation7], 37
    %v4881 = vld [vmem:[%s4880] ss:$8 sm:$0x3]
    %v4882 = vpack.c.bf16 %v4878, %v4878
    %v4883 = vpack.c.bf16 %v4879, %v4879
    %v4884 = vld [vmem:[#allocation4 + $0x400] sm:$0xff]
    %v4885 = vld [vmem:[#allocation4 + $0x408] sm:$0xff]
    %v4886 = vld [vmem:[#allocation4 + $0x410] sm:$0xff]
    %v4887 = vld [vmem:[#allocation4 + $0x418] sm:$0xff]
    %v4888 = vld [vmem:[#allocation4 + $0x420] sm:$0xff]
    %v4889 = vld [vmem:[#allocation4 + $0x428] sm:$0xff]
    %v4890 = vld [vmem:[#allocation4 + $0x430] sm:$0xff]
    %v4891 = vld [vmem:[#allocation4 + $0x438] sm:$0xff]
    %v4892 = vld [vmem:[#allocation4 + $0x440] sm:$0xff]
    %v4893 = vld [vmem:[#allocation4 + $0x448] sm:$0xff]
    %v4894 = vld [vmem:[#allocation4 + $0x450] sm:$0xff]
    %v4895 = vld [vmem:[#allocation4 + $0x458] sm:$0xff]
    %v4896 = vld [vmem:[#allocation4 + $0x460] sm:$0xff]
    %v4897 = vld [vmem:[#allocation4 + $0x468] sm:$0xff]
    %v4898 = vld [vmem:[#allocation4 + $0x470] sm:$0xff]
    %v4899 = vld [vmem:[#allocation4 + $0x478] sm:$0xff]
    %v4900 = vld [vmem:[#allocation4 + $0x480] sm:$0xff]
    %v4901 = vld [vmem:[#allocation4 + $0x488] sm:$0xff]
    %v4902 = vld [vmem:[#allocation4 + $0x490] sm:$0xff]
    %v4903 = vld [vmem:[#allocation4 + $0x498] sm:$0xff]
    %v4904 = vld [vmem:[#allocation4 + $0x4a0] sm:$0xff]
    %v4905 = vld [vmem:[#allocation4 + $0x4a8] sm:$0xff]
    %v4906 = vld [vmem:[#allocation4 + $0x4b0] sm:$0xff]
    %v4907 = vld [vmem:[#allocation4 + $0x4b8] sm:$0xff]
    %v4908 = vld [vmem:[#allocation4 + $0x4c0] sm:$0xff]
    %v4909 = vld [vmem:[#allocation4 + $0x4c8] sm:$0xff]
    %v4910 = vld [vmem:[#allocation4 + $0x4d0] sm:$0xff]
    %v4911 = vld [vmem:[#allocation4 + $0x4d8] sm:$0xff]
    %v4912 = vld [vmem:[#allocation4 + $0x4e0] sm:$0xff]
    %v4913 = vld [vmem:[#allocation4 + $0x4e8] sm:$0xff]
    %v4914 = vld [vmem:[#allocation4 + $0x4f0] sm:$0xff]
    %v4915 = vld [vmem:[#allocation4 + $0x4f8] sm:$0xff]
    %v4917 = vperm.slane %v4881, 0
    %v4918 = vperm.slane %v4881, 1
    %v4953 = vunpack.c.l.b16 %v4884
    %v4954 = vunpack.c.h.b16 %v4884
    %v4955 = vunpack.c.l.b16 %v4885
    %v4956 = vunpack.c.h.b16 %v4885
    %v4957 = vunpack.c.l.b16 %v4886
    %v4958 = vunpack.c.h.b16 %v4886
    %v4959 = vunpack.c.l.b16 %v4887
    %v4960 = vunpack.c.h.b16 %v4887
    %v4961 = vunpack.c.l.b16 %v4888
    %v4962 = vunpack.c.h.b16 %v4888
    %v4963 = vunpack.c.l.b16 %v4889
    %v4964 = vunpack.c.h.b16 %v4889
    %v4965 = vunpack.c.l.b16 %v4890
    %v4966 = vunpack.c.h.b16 %v4890
    %v4967 = vunpack.c.l.b16 %v4891
    %v4968 = vunpack.c.h.b16 %v4891
    %v4969 = vunpack.c.l.b16 %v4892
    %v4970 = vunpack.c.h.b16 %v4892
    %v4971 = vunpack.c.l.b16 %v4893
    %v4972 = vunpack.c.h.b16 %v4893
    %v4973 = vunpack.c.l.b16 %v4894
    %v4974 = vunpack.c.h.b16 %v4894
    %v4975 = vunpack.c.l.b16 %v4895
    %v4976 = vunpack.c.h.b16 %v4895
    %v4977 = vunpack.c.l.b16 %v4896
    %v4978 = vunpack.c.h.b16 %v4896
    %v4979 = vunpack.c.l.b16 %v4897
    %v4980 = vunpack.c.h.b16 %v4897
    %v4981 = vunpack.c.l.b16 %v4898
    %v4982 = vunpack.c.h.b16 %v4898
    %v4983 = vunpack.c.l.b16 %v4899
    %v4984 = vunpack.c.h.b16 %v4899
    %v4985 = vunpack.c.l.b16 %v4900
    %v4986 = vunpack.c.h.b16 %v4900
    %v4987 = vunpack.c.l.b16 %v4901
    %v4988 = vunpack.c.h.b16 %v4901
    %v4989 = vunpack.c.l.b16 %v4902
    %v4990 = vunpack.c.h.b16 %v4902
    %v4991 = vunpack.c.l.b16 %v4903
    %v4992 = vunpack.c.h.b16 %v4903
    %v4993 = vunpack.c.l.b16 %v4904
    %v4994 = vunpack.c.h.b16 %v4904
    %v4995 = vunpack.c.l.b16 %v4905
    %v4996 = vunpack.c.h.b16 %v4905
    %v4997 = vunpack.c.l.b16 %v4906
    %v4998 = vunpack.c.h.b16 %v4906
    %v4999 = vunpack.c.l.b16 %v4907
    %v5000 = vunpack.c.h.b16 %v4907
    %v5001 = vunpack.c.l.b16 %v4908
    %v5002 = vunpack.c.h.b16 %v4908
    %v5003 = vunpack.c.l.b16 %v4909
    %v5004 = vunpack.c.h.b16 %v4909
    %v5005 = vunpack.c.l.b16 %v4910
    %v5006 = vunpack.c.h.b16 %v4910
    %v5007 = vunpack.c.l.b16 %v4911
    %v5008 = vunpack.c.h.b16 %v4911
    %v5009 = vunpack.c.l.b16 %v4912
    %v5010 = vunpack.c.h.b16 %v4912
    %v5011 = vunpack.c.l.b16 %v4913
    %v5012 = vunpack.c.h.b16 %v4913
    %v5013 = vunpack.c.l.b16 %v4914
    %v5014 = vunpack.c.h.b16 %v4914
    %v5015 = vunpack.c.l.b16 %v4915
    %v5016 = vunpack.c.h.b16 %v4915
    %v5017 = vpack.c.b16 %v4955, %v4953
    %v5018 = vpack.c.b16 %v4956, %v4954
    %v5019 = vpack.c.b16 %v4959, %v4957
    %v5020 = vpack.c.b16 %v4960, %v4958
    %v5021 = vpack.c.b16 %v4963, %v4961
    %v5022 = vpack.c.b16 %v4964, %v4962
    %v5023 = vpack.c.b16 %v4967, %v4965
    %v5024 = vpack.c.b16 %v4968, %v4966
    %v5025 = vpack.c.b16 %v4971, %v4969
    %v5026 = vpack.c.b16 %v4972, %v4970
    %v5027 = vpack.c.b16 %v4975, %v4973
    %v5028 = vpack.c.b16 %v4976, %v4974
    %v5029 = vpack.c.b16 %v4979, %v4977
    %v5030 = vpack.c.b16 %v4980, %v4978
    %v5031 = vpack.c.b16 %v4983, %v4981
    %v5032 = vpack.c.b16 %v4984, %v4982
    %v5033 = vpack.c.b16 %v4987, %v4985
    %v5034 = vpack.c.b16 %v4988, %v4986
    %v5035 = vpack.c.b16 %v4991, %v4989
    %v5036 = vpack.c.b16 %v4992, %v4990
    %v5037 = vpack.c.b16 %v4995, %v4993
    %v5038 = vpack.c.b16 %v4996, %v4994
    %v5039 = vpack.c.b16 %v4999, %v4997
    %v5040 = vpack.c.b16 %v5000, %v4998
    %v5041 = vpack.c.b16 %v5003, %v5001
    %v5042 = vpack.c.b16 %v5004, %v5002
    %v5043 = vpack.c.b16 %v5007, %v5005
    %v5044 = vpack.c.b16 %v5008, %v5006
    %v5045 = vpack.c.b16 %v5011, %v5009
    %v5046 = vpack.c.b16 %v5012, %v5010
    %v5047 = vpack.c.b16 %v5015, %v5013
    %v5048 = vpack.c.b16 %v5016, %v5014
    %5081 = vmatpush.bf16.msra.mxu0 %v5031
    %5082 = vmatpush.bf16.msra.mxu0 %v5029
    %5083 = vmatpush.bf16.msra.mxu0 %v5027
    %5084 = vmatpush.bf16.msra.mxu0 %v5025
    %5085 = vmatpush.bf16.msra.mxu0 %v5023
    %5086 = vmatpush.bf16.msra.mxu0 %v5021
    %5087 = vmatpush.bf16.msra.mxu0 %v5019
    %5088 = vmatpush.bf16.msra.mxu0 %v5017
    %5089 = vmatmul.bf16.gmra.mxu0 %v4882
    %v5090 = vpop.f32.mrf.mxu0
    %v5091 = vadd.f32 %v4917, %v5090
    %v5092 = vpop.f32.mrf.mxu0
    %5093 = vdwg.mxu0
    %5094 = vmatpush.bf16.msra.mxu0 %v5047
    %5095 = vmatpush.bf16.msra.mxu0 %v5045
    %5096 = vmatpush.bf16.msra.mxu0 %v5043
    %5097 = vmatpush.bf16.msra.mxu0 %v5041
    %5098 = vmatpush.bf16.msra.mxu0 %v5039
    %5099 = vmatpush.bf16.msra.mxu0 %v5037
    %5100 = vmatpush.bf16.msra.mxu0 %v5035
    %5101 = vmatpush.bf16.msra.mxu0 %v5033
    %5102 = vmatmul.bf16.gmra.mxu0 %v4883
    %v5103 = vpop.f32.mrf.mxu0
    %v5104 = vadd.f32 %v5091, %v5103
    %v5105 = vpop.f32.mrf.mxu0
    %5106 = vdwg.mxu0
    %5107 = vmatpush.bf16.msra.mxu0 %v5032
    %5108 = vmatpush.bf16.msra.mxu0 %v5030
    %5109 = vmatpush.bf16.msra.mxu0 %v5028
    %5110 = vmatpush.bf16.msra.mxu0 %v5026
    %5111 = vmatpush.bf16.msra.mxu0 %v5024
    %5112 = vmatpush.bf16.msra.mxu0 %v5022
    %5113 = vmatpush.bf16.msra.mxu0 %v5020
    %5114 = vmatpush.bf16.msra.mxu0 %v5018
    %5115 = vmatmul.bf16.gmra.mxu0 %v4882
    %v5116 = vpop.f32.mrf.mxu0
    %v5117 = vadd.f32 %v4918, %v5116
    %v5118 = vpop.f32.mrf.mxu0
    %5119 = vdwg.mxu0
    %5120 = vmatpush.bf16.msra.mxu0 %v5048
    %5121 = vmatpush.bf16.msra.mxu0 %v5046
    %5122 = vmatpush.bf16.msra.mxu0 %v5044
    %5123 = vmatpush.bf16.msra.mxu0 %v5042
    %5124 = vmatpush.bf16.msra.mxu0 %v5040
    %5125 = vmatpush.bf16.msra.mxu0 %v5038
    %5126 = vmatpush.bf16.msra.mxu0 %v5036
    %5127 = vmatpush.bf16.msra.mxu0 %v5034
    %5128 = vmatmul.bf16.gmra.mxu0 %v4883
    %v5129 = vpop.f32.mrf.mxu0
    %v5130 = vadd.f32 %v5117, %v5129
    %v5131 = vpop.f32.mrf.mxu0
    %5132 = vdwg.mxu0
    %v5133 = vxor.u32 %v5104, 2147483648
    %v5134 = vxor.u32 %v5130, 2147483648
    %v5135 = vmul.f32 %v5133, 1.442695
    %v5136 = vpow.pop %v5135
    %v5137 = vmul.f32 %v5134, 1.442695
    %v5138 = vpow.pop %v5137
    %v5139 = vadd.f32 %v5136, 1.0
    %v5140 = vadd.f32 %v5138, 1.0
    %v5141 = vrcp.pop %v5139
    %v5142 = vmul.f32 %v5139, %v5141
    %v5143 = vsub.f32 1.0, %v5142
    %v5144 = vmul.f32 %v5141, %v5143
    %v5145 = vadd.f32 %v5141, %v5144
    %vm5146 = vweird.f32 %v5139
    %vm5147 = vweird.f32 %v5141
    %vm5148 = vmor %vm5146, %vm5147
    %v5149 = vsel %vm5148, %v5141, %v5145
    %v5150 = vand.u32 2147483647, %v5139
    %vm5151 = vcmp.eq.f32.partialorder %v5150, 8.507059e+37
    %v5152 = vand.u32 %v5139, 2147483648
    %v5153 = vor.u32 1.1754944e-38, %v5152
    %v5154 = vsel %vm5151, %v5153, %v5149
    %v5155 = vmul.f32 1.0, %v5154
    %v5156 = vrcp.pop %v5140
    %v5157 = vmul.f32 %v5140, %v5156
    %v5158 = vsub.f32 1.0, %v5157
    %v5159 = vmul.f32 %v5156, %v5158
    %v5160 = vadd.f32 %v5156, %v5159
    %vm5161 = vweird.f32 %v5140
    %vm5162 = vweird.f32 %v5156
    %vm5163 = vmor %vm5161, %vm5162
    %v5164 = vsel %vm5163, %v5156, %v5160
    %v5165 = vand.u32 2147483647, %v5140
    %vm5166 = vcmp.eq.f32.partialorder %v5165, 8.507059e+37
    %v5167 = vand.u32 %v5140, 2147483648
    %v5168 = vor.u32 1.1754944e-38, %v5167
    %v5169 = vsel %vm5166, %v5168, %v5164
    %v5170 = vmul.f32 1.0, %v5169
    %v5171 = vld [vmem:[#allocation7 + $0x26] ss:$0 sm:$0xff]
    %v5172 = vpack.c.bf16 %v5155, %v5155
    %v5173 = vpack.c.bf16 %v5170, %v5170
    %v5174 = vld [vmem:[#allocation2 + $0xc0] sm:$0xf]
    %v5175 = vld [vmem:[#allocation2 + $0xc4] sm:$0xf]
    %v5176 = vld [vmem:[#allocation2 + $0xc8] sm:$0xf]
    %v5177 = vld [vmem:[#allocation2 + $0xcc] sm:$0xf]
    %v5178 = vld [vmem:[#allocation2 + $0xd0] sm:$0xf]
    %v5179 = vld [vmem:[#allocation2 + $0xd4] sm:$0xf]
    %v5180 = vld [vmem:[#allocation2 + $0xd8] sm:$0xf]
    %v5181 = vld [vmem:[#allocation2 + $0xdc] sm:$0xf]
    %v5182 = vld [vmem:[#allocation2 + $0xe0] sm:$0xf]
    %v5183 = vld [vmem:[#allocation2 + $0xe4] sm:$0xf]
    %v5184 = vld [vmem:[#allocation2 + $0xe8] sm:$0xf]
    %v5185 = vld [vmem:[#allocation2 + $0xec] sm:$0xf]
    %v5186 = vld [vmem:[#allocation2 + $0xf0] sm:$0xf]
    %v5187 = vld [vmem:[#allocation2 + $0xf4] sm:$0xf]
    %v5188 = vld [vmem:[#allocation2 + $0xf8] sm:$0xf]
    %v5189 = vld [vmem:[#allocation2 + $0xfc] sm:$0xf]
    %v5190 = vld [vmem:[#allocation2 + $0x100] sm:$0xf]
    %v5191 = vld [vmem:[#allocation2 + $0x104] sm:$0xf]
    %v5192 = vld [vmem:[#allocation2 + $0x108] sm:$0xf]
    %v5193 = vld [vmem:[#allocation2 + $0x10c] sm:$0xf]
    %v5194 = vld [vmem:[#allocation2 + $0x110] sm:$0xf]
    %v5195 = vld [vmem:[#allocation2 + $0x114] sm:$0xf]
    %v5196 = vld [vmem:[#allocation2 + $0x118] sm:$0xf]
    %v5197 = vld [vmem:[#allocation2 + $0x11c] sm:$0xf]
    %v5198 = vld [vmem:[#allocation2 + $0x120] sm:$0xf]
    %v5199 = vld [vmem:[#allocation2 + $0x124] sm:$0xf]
    %v5200 = vld [vmem:[#allocation2 + $0x128] sm:$0xf]
    %v5201 = vld [vmem:[#allocation2 + $0x12c] sm:$0xf]
    %v5202 = vld [vmem:[#allocation2 + $0x130] sm:$0xf]
    %v5203 = vld [vmem:[#allocation2 + $0x134] sm:$0xf]
    %v5204 = vld [vmem:[#allocation2 + $0x138] sm:$0xf]
    %v5205 = vld [vmem:[#allocation2 + $0x13c] sm:$0xf]
    %v5238 = vunpack.c.l.b16 %v5174
    %v5239 = vunpack.c.l.b16 %v5175
    %v5240 = vunpack.c.l.b16 %v5176
    %v5241 = vunpack.c.l.b16 %v5177
    %v5242 = vunpack.c.l.b16 %v5178
    %v5243 = vunpack.c.l.b16 %v5179
    %v5244 = vunpack.c.l.b16 %v5180
    %v5245 = vunpack.c.l.b16 %v5181
    %v5246 = vunpack.c.l.b16 %v5182
    %v5247 = vunpack.c.l.b16 %v5183
    %v5248 = vunpack.c.l.b16 %v5184
    %v5249 = vunpack.c.l.b16 %v5185
    %v5250 = vunpack.c.l.b16 %v5186
    %v5251 = vunpack.c.l.b16 %v5187
    %v5252 = vunpack.c.l.b16 %v5188
    %v5253 = vunpack.c.l.b16 %v5189
    %v5254 = vunpack.c.l.b16 %v5190
    %v5255 = vunpack.c.l.b16 %v5191
    %v5256 = vunpack.c.l.b16 %v5192
    %v5257 = vunpack.c.l.b16 %v5193
    %v5258 = vunpack.c.l.b16 %v5194
    %v5259 = vunpack.c.l.b16 %v5195
    %v5260 = vunpack.c.l.b16 %v5196
    %v5261 = vunpack.c.l.b16 %v5197
    %v5262 = vunpack.c.l.b16 %v5198
    %v5263 = vunpack.c.l.b16 %v5199
    %v5264 = vunpack.c.l.b16 %v5200
    %v5265 = vunpack.c.l.b16 %v5201
    %v5266 = vunpack.c.l.b16 %v5202
    %v5267 = vunpack.c.l.b16 %v5203
    %v5268 = vunpack.c.l.b16 %v5204
    %v5269 = vunpack.c.l.b16 %v5205
    %v5270 = vpack.c.b16 %v5239, %v5238
    %v5271 = vpack.c.b16 %v5241, %v5240
    %v5272 = vpack.c.b16 %v5243, %v5242
    %v5273 = vpack.c.b16 %v5245, %v5244
    %v5274 = vpack.c.b16 %v5247, %v5246
    %v5275 = vpack.c.b16 %v5249, %v5248
    %v5276 = vpack.c.b16 %v5251, %v5250
    %v5277 = vpack.c.b16 %v5253, %v5252
    %v5278 = vpack.c.b16 %v5255, %v5254
    %v5279 = vpack.c.b16 %v5257, %v5256
    %v5280 = vpack.c.b16 %v5259, %v5258
    %v5281 = vpack.c.b16 %v5261, %v5260
    %v5282 = vpack.c.b16 %v5263, %v5262
    %v5283 = vpack.c.b16 %v5265, %v5264
    %v5284 = vpack.c.b16 %v5267, %v5266
    %v5285 = vpack.c.b16 %v5269, %v5268
    %5302 = vmatpush.bf16.msra.mxu0 %v5277
    %5303 = vmatpush.bf16.msra.mxu0 %v5276
    %5304 = vmatpush.bf16.msra.mxu0 %v5275
    %5305 = vmatpush.bf16.msra.mxu0 %v5274
    %5306 = vmatpush.bf16.msra.mxu0 %v5273
    %5307 = vmatpush.bf16.msra.mxu0 %v5272
    %5308 = vmatpush.bf16.msra.mxu0 %v5271
    %5309 = vmatpush.bf16.msra.mxu0 %v5270
    %5310 = vmatmul.bf16.gmra.mxu0 %v5172
    %v5311 = vpop.f32.mrf.mxu0
    %v5312 = vadd.f32 %v5171, %v5311
    %v5313 = vpop.f32.mrf.mxu0
    %5314 = vdwg.mxu0
    %5315 = vmatpush.bf16.msra.mxu0 %v5285
    %5316 = vmatpush.bf16.msra.mxu0 %v5284
    %5317 = vmatpush.bf16.msra.mxu0 %v5283
    %5318 = vmatpush.bf16.msra.mxu0 %v5282
    %5319 = vmatpush.bf16.msra.mxu0 %v5281
    %5320 = vmatpush.bf16.msra.mxu0 %v5280
    %5321 = vmatpush.bf16.msra.mxu0 %v5279
    %5322 = vmatpush.bf16.msra.mxu0 %v5278
    %5323 = vmatmul.bf16.gmra.mxu0 %v5173
    %v5324 = vpop.f32.mrf.mxu0
    %v5325 = vadd.f32 %v5312, %v5324
    %v5326 = vpop.f32.mrf.mxu0
    %5327 = vdwg.mxu0
    %5328 = vst [vmem:[%s5] sm:$0xff] %v5325
    // Predicated region
    $region38: #{_lambda_.1} parent=1 // pred_check
      _
    $region39: #{_lambda_.1} parent=1 // pred_check_branch
      %5330 = sbr.rel (0) target = $region41
    $region40: #{_lambda_.1} parent=1 // pred_region
      _
    $region41: #{_lambda_.1} parent=1 // pred_fallthru
      _
    // Predicated region
    $region42: #{_lambda_.1} parent=1 // pred_check
      _
    $region43: #{_lambda_.1} parent=1 // pred_check_branch
      %5332 = sbr.rel (0) target = $region45
    $region44: #{_lambda_.1} parent=1 // pred_region
      _
    $region45: #{_lambda_.1} parent=1 // pred_fallthru
      _
    %5333 = vsyncpa [#allocation3], 1
    %5334 = vsyncpa [#allocation5], 1
    %5335 = vsyncpa [#allocation8], 1

</llo_original>
